<compile_context>
chip_gen: v7x
topology: tpu7x:2x2x1
jax: 0.10.0
libtpu: 0.0.40
codegen_flags: <defaults>
</compile_context>

<pallas_src>
import functools

import jax
import jax.numpy as jnp
from jax.experimental import pallas as pl
from jax.experimental.pallas import tpu as pltpu


def _layer_norm_f32(x, g, b, eps=1e-5):
    mu = jnp.mean(x, axis=-1, keepdims=True)
    var = jnp.mean((x - mu) ** 2, axis=-1, keepdims=True)
    return (x - mu) * jax.lax.rsqrt(var + eps) * g + b


def attention_block_kernel(x_ref, ln1_g, ln1_b, w_in, b_in, w_out, b_out,
                           ln2_g, ln2_b, w_fc, b_fc, w_pr, b_pr, o_ref,
                           *, num_heads):
    f32, bf16 = jnp.float32, jnp.bfloat16
    bt, S, E = x_ref.shape
    H = num_heads
    hd = E // H

    # Merge the batch tile into the matmul M dimension (leading-dim collapse, layout-free).
    x = x_ref[...].astype(f32).reshape(bt * S, E)          # residuals / stats in f32

    # ---- ln_1 + fused QKV projection: one (M,E)x(E,3E) bf16 matmul, f32 accumulate ----
    # 1/sqrt(head_dim) is pre-folded into the Q columns of w_in / b_in by the wrapper.
    h1 = _layer_norm_f32(x, ln1_g[...], ln1_b[...])
    qkv = jnp.dot(h1.astype(bf16), w_in[...], preferred_element_type=f32) + b_in[...]

    # ---- per-(batch, head) attention; scores (H, S, S) keep keys on lanes ----
    attn_rows = []
    for b in range(bt):                                     # static, bt is tiny
        qkv_b = qkv[b * S:(b + 1) * S].astype(bf16)         # (S, 3E)
        q3 = jnp.stack([qkv_b[:, h * hd:(h + 1) * hd] for h in range(H)], axis=0)
        k3 = jnp.stack([qkv_b[:, E + h * hd:E + (h + 1) * hd] for h in range(H)], axis=0)
        v3 = jnp.stack([qkv_b[:, 2 * E + h * hd:2 * E + (h + 1) * hd] for h in range(H)], axis=0)

        s = jnp.einsum('hqd,hkd->hqk', q3, k3, preferred_element_type=f32)
        s = s - jnp.max(s, axis=-1, keepdims=True)
        p = jnp.exp(s)                                      # f32 (correct on v5e too)
        p = p * pl.reciprocal(jnp.sum(p, axis=-1, keepdims=True), approx=True)
        o = jnp.einsum('hqk,hkd->hqd', p.astype(bf16), v3, preferred_element_type=f32)
        # Re-assemble heads along lanes -> (S, E); cheap vs. H small out-proj matmuls.
        attn_rows.append(jnp.concatenate([o[h] for h in range(H)], axis=-1))
    o_cat = attn_rows[0] if bt == 1 else jnp.concatenate(attn_rows, axis=0)   # (bt*S, E)

    # ---- out-projection: one (M,E)x(E,E) matmul (K=E); bias fused into the residual ----
    attn = jnp.dot(o_cat.astype(bf16), w_out[...], preferred_element_type=f32)
    x = x + attn + b_out[...]

    # ---- ln_2 + MLP (QuickGELU) + residual ----
    h2 = _layer_norm_f32(x, ln2_g[...], ln2_b[...])
    ff = jnp.dot(h2.astype(bf16), w_fc[...], preferred_element_type=f32) + b_fc[...]
    ff = ff * jax.nn.sigmoid(1.702 * ff)                    # QuickGELU in f32
    ff = jnp.dot(ff.astype(bf16), w_pr[...], preferred_element_type=f32) + b_pr[...]

    o_ref[...] = (x + ff).reshape(bt, S, E).astype(o_ref.dtype)


def prepare_attention_block_params(params, num_heads):
    """One-time weight prep (transposes, 1/sqrt(hd) fold, bf16 casts).

    Call once and reuse the returned tuple across forward passes so the preprocessing
    does not re-run (and re-stream weights from HBM) on every diffusion step.
    """
    f32, bf16 = jnp.float32, jnp.bfloat16
    E = params["ln1_w"].shape[0]
    hd = E // num_heads
    scale = 1.0 / float(hd) ** 0.5

    ipw = params["in_proj_weight"].astype(f32)              # (3E, E), rows = [q; k; v]
    ipb = params["in_proj_bias"].astype(f32)                # (3E,)
    col_scale = jnp.concatenate([jnp.full((E,), scale, f32), jnp.ones((2 * E,), f32)])
    w_in = (ipw.T * col_scale[None, :]).astype(bf16)        # (E, 3E), scale folded into Q cols
    b_in = (ipb * col_scale).reshape(1, 3 * E).astype(f32)

    return (
        params["ln1_w"].reshape(1, E).astype(f32),
        params["ln1_b"].reshape(1, E).astype(f32),
        w_in,
        b_in,
        params["out_proj_weight"].T.astype(bf16),            # (E, E)
        params["out_proj_bias"].reshape(1, E).astype(f32),
        params["ln2_w"].reshape(1, E).astype(f32),
        params["ln2_b"].reshape(1, E).astype(f32),
        params["c_fc_weight"].T.astype(bf16),                 # (E, 4E)
        params["c_fc_bias"].reshape(1, 4 * E).astype(f32),
        params["c_proj_weight"].T.astype(bf16),                # (4E, E)
        params["c_proj_bias"].reshape(1, E).astype(f32),
    )


def attention_block(x_sbe, prepared, num_heads, *, batch_tile=1):
    """x_sbe: (seq_len, batch, embed_dim); prepared = prepare_attention_block_params(...)."""
    S, B, E = x_sbe.shape
    H = num_heads
    assert E % H == 0 and B % batch_tile == 0
    bt = batch_tile                                          # raise when S is small to grow M

    x = jnp.transpose(x_sbe, (1, 0, 2))                      # (B, S, E)

    def _const_spec(arr):
        nd = arr.ndim
        # Grid-invariant weights: single-buffered (no DMA to hide across the batch grid,
        # halves their VMEM footprint — important on v7x's 64 MiB/TC).
        return pl.BlockSpec(arr.shape, lambda i: (0,) * nd,
                            pipeline_mode=pl.Buffered(1))

    in_specs = [pl.BlockSpec((bt, S, E), lambda i: (i, 0, 0))]
    in_specs += [_const_spec(w) for w in prepared]

    # VMEM budget from the actual footprint (weights single-buffered, activation in/out
    # double-buffered, live f32 intermediates), clamped to fit v7x's 64 MiB per TensorCore.
    weight_bytes = sum(int(w.size) * w.dtype.itemsize for w in prepared)
    act_bytes = bt * S * E * 4
    inter_bytes = (bt * S * 3 * E) * 4 + 2 * H * S * S * 4 + (bt * S * 4 * E) * 4 + 6 * act_bytes
    vmem_limit = int(min(64 << 20,
                         max(32 << 20, 2 * (weight_bytes + 4 * act_bytes + inter_bytes))))

    flops = 2 * B * S * E * E * (3 + 1 + 8) + 4 * B * H * S * S * (E // H)
    transcendentals = B * (H * S * S + 4 * S * E)
    bytes_accessed = 2 * B * S * E * 4 + weight_bytes

    kernel = functools.partial(attention_block_kernel, num_heads=num_heads)

    out = pl.pallas_call(
        kernel,
        out_shape=jax.ShapeDtypeStruct((B, S, E), x.dtype),
        grid=(B // bt,),
        in_specs=in_specs,
        out_specs=pl.BlockSpec((bt, S, E), lambda i: (i, 0, 0)),
        compiler_params=pltpu.CompilerParams(
            dimension_semantics=("parallel",),
            vmem_limit_bytes=vmem_limit),
        cost_estimate=pl.CostEstimate(
            flops=int(flops),
            transcendentals=int(transcendentals),
            bytes_accessed=int(bytes_accessed)),
    )(x, *prepared)
    return jnp.transpose(out, (1, 0, 2))                      # back to (S, B, E)


# ------------------------- pure-JAX reference (for checking) -------------------------
def ref_attention_block(x_sbe, p, num_heads):
    S, B, E = x_sbe.shape
    hd = E // num_heads

    def ln(x, g, b, eps=1e-5):
        mu = jnp.mean(x, axis=-1, keepdims=True)
        var = jnp.mean((x - mu) ** 2, axis=-1, keepdims=True)
        return (x - mu) / jnp.sqrt(var + eps) * g + b

    x = jnp.transpose(x_sbe, (1, 0, 2))                       # (B, S, E)
    h = ln(x, p["ln1_w"], p["ln1_b"])
    qkv = h @ p["in_proj_weight"].T + p["in_proj_bias"]
    q, k, v = jnp.split(qkv, 3, axis=-1)
    q = q.reshape(B, S, num_heads, hd).transpose(0, 2, 1, 3)
    k = k.reshape(B, S, num_heads, hd).transpose(0, 2, 1, 3)
    v = v.reshape(B, S, num_heads, hd).transpose(0, 2, 1, 3)
    scores = jnp.einsum("bhqd,bhkd->bhqk", q, k) / jnp.sqrt(hd)
    pr = jax.nn.softmax(scores, axis=-1)
    o = jnp.einsum("bhqk,bhkd->bhqd", pr, v).transpose(0, 2, 1, 3).reshape(B, S, E)
    o = o @ p["out_proj_weight"].T + p["out_proj_bias"]
    x = x + o
    h2 = ln(x, p["ln2_w"], p["ln2_b"])
    ff = h2 @ p["c_fc_weight"].T + p["c_fc_bias"]
    ff = ff * jax.nn.sigmoid(1.702 * ff)
    ff = ff @ p["c_proj_weight"].T + p["c_proj_bias"]
    return jnp.transpose(x + ff, (1, 0, 2))


if __name__ == "__main__":
    # E and S are multiples of 128 so output writes and the softmax key dim are lane-dense.
    SEQ, BATCH, EMBED, HEADS = 128, 2, 128, 4

    key = jax.random.PRNGKey(0)
    ks = jax.random.split(key, 12)

    def nrm(k, shape, scale=0.02):
        return (scale * jax.random.normal(k, shape)).astype(jnp.float32)

    params = {
        "ln1_w": jnp.ones((EMBED,), jnp.float32),
        "ln1_b": jnp.zeros((EMBED,), jnp.float32),
        "in_proj_weight": nrm(ks[0], (3 * EMBED, EMBED)),
        "in_proj_bias": nrm(ks[1], (3 * EMBED,)),
        "out_proj_weight": nrm(ks[2], (EMBED, EMBED)),
        "out_proj_bias": nrm(ks[3], (EMBED,)),
        "ln2_w": jnp.ones((EMBED,), jnp.float32),
        "ln2_b": jnp.zeros((EMBED,), jnp.float32),
        "c_fc_weight": nrm(ks[4], (4 * EMBED, EMBED)),
        "c_fc_bias": nrm(ks[5], (4 * EMBED,)),
        "c_proj_weight": nrm(ks[6], (EMBED, 4 * EMBED)),
        "c_proj_bias": nrm(ks[7], (EMBED,)),
    }

    x = jax.random.normal(ks[8], (SEQ, BATCH, EMBED), dtype=jnp.float32)

    prepared = prepare_attention_block_params(params, HEADS)   # one-time weight prep (cached)
    out = attention_block(x, prepared, HEADS, batch_tile=1)    # grid=(2,) -> both v7x cores busy
    out = jax.block_until_ready(out)

    ref = ref_attention_block(x, params, HEADS)
    assert out.shape == (SEQ, BATCH, EMBED)
    # bf16 matmul inputs + approx softmax reciprocal => compare vs f32 ref with loose tolerance.
    assert jnp.allclose(out, ref, atol=2e-2, rtol=2e-2), "kernel/reference mismatch"

    print("KERNEL_OK")
</pallas_src>

<mosaic_0001>
module attributes {stable_mosaic.version = 11 : i64} {
  func.func @attention_block_kernel(%arg0: i32, %arg1: memref<1x128x128xf32, #tpu.memory_space<vmem>>, %arg2: memref<1x128xf32, #tpu.memory_space<vmem>>, %arg3: memref<1x128xf32, #tpu.memory_space<vmem>>, %arg4: memref<128x384xbf16, #tpu.memory_space<vmem>>, %arg5: memref<1x384xf32, #tpu.memory_space<vmem>>, %arg6: memref<128x128xbf16, #tpu.memory_space<vmem>>, %arg7: memref<1x128xf32, #tpu.memory_space<vmem>>, %arg8: memref<1x128xf32, #tpu.memory_space<vmem>>, %arg9: memref<1x128xf32, #tpu.memory_space<vmem>>, %arg10: memref<128x512xbf16, #tpu.memory_space<vmem>>, %arg11: memref<1x512xf32, #tpu.memory_space<vmem>>, %arg12: memref<512x128xbf16, #tpu.memory_space<vmem>>, %arg13: memref<1x128xf32, #tpu.memory_space<vmem>>, %arg14: memref<1x128x128xf32, #tpu.memory_space<vmem>>) attributes {dimension_semantics = [#tpu.dimension_semantics<parallel>], iteration_bounds = array<i64: 2>, scalar_prefetch = 0 : i64, scratch_operands = 0 : i64, tpu.core_type = #tpu.core_type<tc>, window_params = [{transform_indices = @transform_0, window_bounds = array<i64: 1, 128, 128>}, {pipeline_mode = #tpu.pipeline_mode<synchronous>, transform_indices = @transform_1, window_bounds = array<i64: 1, 128>}, {pipeline_mode = #tpu.pipeline_mode<synchronous>, transform_indices = @transform_2, window_bounds = array<i64: 1, 128>}, {pipeline_mode = #tpu.pipeline_mode<synchronous>, transform_indices = @transform_3, window_bounds = array<i64: 128, 384>}, {pipeline_mode = #tpu.pipeline_mode<synchronous>, transform_indices = @transform_4, window_bounds = array<i64: 1, 384>}, {pipeline_mode = #tpu.pipeline_mode<synchronous>, transform_indices = @transform_5, window_bounds = array<i64: 128, 128>}, {pipeline_mode = #tpu.pipeline_mode<synchronous>, transform_indices = @transform_6, window_bounds = array<i64: 1, 128>}, {pipeline_mode = #tpu.pipeline_mode<synchronous>, transform_indices = @transform_7, window_bounds = array<i64: 1, 128>}, {pipeline_mode = #tpu.pipeline_mode<synchronous>, transform_indices = @transform_8, window_bounds = array<i64: 1, 128>}, {pipeline_mode = #tpu.pipeline_mode<synchronous>, transform_indices = @transform_9, window_bounds = array<i64: 128, 512>}, {pipeline_mode = #tpu.pipeline_mode<synchronous>, transform_indices = @transform_10, window_bounds = array<i64: 1, 512>}, {pipeline_mode = #tpu.pipeline_mode<synchronous>, transform_indices = @transform_11, window_bounds = array<i64: 512, 128>}, {pipeline_mode = #tpu.pipeline_mode<synchronous>, transform_indices = @transform_12, window_bounds = array<i64: 1, 128>}, {transform_indices = @transform_13, window_bounds = array<i64: 1, 128, 128>}]} {
    %c0 = arith.constant 0 : index
    %c0_0 = arith.constant 0 : index
    %c0_1 = arith.constant 0 : index
    %0 = vector.load %arg1[%c0, %c0_0, %c0_1] : memref<1x128x128xf32, #tpu.memory_space<vmem>>, vector<1x128x128xf32>
    %1 = vector.shape_cast %0 : vector<1x128x128xf32> to vector<128x128xf32>
    %c0_2 = arith.constant 0 : index
    %c0_3 = arith.constant 0 : index
    %2 = vector.load %arg2[%c0_2, %c0_3] : memref<1x128xf32, #tpu.memory_space<vmem>>, vector<1x128xf32>
    %c0_4 = arith.constant 0 : index
    %c0_5 = arith.constant 0 : index
    %3 = vector.load %arg3[%c0_4, %c0_5] : memref<1x128xf32, #tpu.memory_space<vmem>>, vector<1x128xf32>
    %cst = arith.constant dense<0.000000e+00> : vector<128xf32>
    %4 = vector.multi_reduction <add>, %1, %cst [1] : vector<128x128xf32> to vector<128xf32>
    %5 = vector.shape_cast %4 : vector<128xf32> to vector<128x1xf32>
    %cst_6 = arith.constant 1.280000e+02 : f32
    %6 = vector.broadcast %cst_6 : f32 to vector<128x1xf32>
    %7 = arith.divf %5, %6 : vector<128x1xf32>
    %8 = vector.broadcast %7 : vector<128x1xf32> to vector<128x128xf32>
    %9 = arith.subf %1, %8 : vector<128x128xf32>
    %10 = arith.mulf %9, %9 : vector<128x128xf32>
    %cst_7 = arith.constant dense<0.000000e+00> : vector<128xf32>
    %11 = vector.multi_reduction <add>, %10, %cst_7 [1] : vector<128x128xf32> to vector<128xf32>
    %12 = vector.shape_cast %11 : vector<128xf32> to vector<128x1xf32>
    %cst_8 = arith.constant 1.280000e+02 : f32
    %13 = vector.broadcast %cst_8 : f32 to vector<128x1xf32>
    %14 = arith.divf %12, %13 : vector<128x1xf32>
    %15 = vector.broadcast %7 : vector<128x1xf32> to vector<128x128xf32>
    %16 = arith.subf %1, %15 : vector<128x128xf32>
    %cst_9 = arith.constant 9.99999974E-6 : f32
    %17 = vector.broadcast %cst_9 : f32 to vector<128x1xf32>
    %18 = arith.addf %14, %17 : vector<128x1xf32>
    %19 = math.rsqrt %18 : vector<128x1xf32>
    %20 = vector.broadcast %19 : vector<128x1xf32> to vector<128x128xf32>
    %21 = arith.mulf %16, %20 : vector<128x128xf32>
    %22 = vector.broadcast %2 : vector<1x128xf32> to vector<128x128xf32>
    %23 = arith.mulf %21, %22 : vector<128x128xf32>
    %24 = vector.broadcast %3 : vector<1x128xf32> to vector<128x128xf32>
    %25 = arith.addf %23, %24 : vector<128x128xf32>
    %26 = arith.truncf %25 : vector<128x128xf32> to vector<128x128xbf16>
    %c0_10 = arith.constant 0 : index
    %c0_11 = arith.constant 0 : index
    %27 = vector.load %arg4[%c0_10, %c0_11] : memref<128x384xbf16, #tpu.memory_space<vmem>>, vector<128x384xbf16>
    %cst_12 = arith.constant dense<0.000000e+00> : vector<128x384xf32>
    %28 = tpu.matmul %26, %27, %cst_12 {dimension_numbers = #tpu.dot_dimension_numbers<[1], [0], [0], [1], [0, 0, 1, 1], [], []>} : vector<128x128xbf16>, vector<128x384xbf16>, vector<128x384xf32> -> vector<128x384xf32>
    %c0_13 = arith.constant 0 : index
    %c0_14 = arith.constant 0 : index
    %29 = vector.load %arg5[%c0_13, %c0_14] : memref<1x384xf32, #tpu.memory_space<vmem>>, vector<1x384xf32>
    %30 = vector.broadcast %29 : vector<1x384xf32> to vector<128x384xf32>
    %31 = arith.addf %28, %30 : vector<128x384xf32>
    %32 = arith.truncf %31 : vector<128x384xf32> to vector<128x384xbf16>
    %33 = vector.extract_strided_slice %32 {offsets = [0, 0], sizes = [128, 32], strides = [1, 1]} : vector<128x384xbf16> to vector<128x32xbf16>
    %34 = vector.extract_strided_slice %32 {offsets = [0, 32], sizes = [128, 32], strides = [1, 1]} : vector<128x384xbf16> to vector<128x32xbf16>
    %35 = vector.extract_strided_slice %32 {offsets = [0, 64], sizes = [128, 32], strides = [1, 1]} : vector<128x384xbf16> to vector<128x32xbf16>
    %36 = vector.extract_strided_slice %32 {offsets = [0, 96], sizes = [128, 32], strides = [1, 1]} : vector<128x384xbf16> to vector<128x32xbf16>
    %37 = vector.shape_cast %33 : vector<128x32xbf16> to vector<1x128x32xbf16>
    %38 = vector.shape_cast %34 : vector<128x32xbf16> to vector<1x128x32xbf16>
    %39 = vector.shape_cast %35 : vector<128x32xbf16> to vector<1x128x32xbf16>
    %40 = vector.shape_cast %36 : vector<128x32xbf16> to vector<1x128x32xbf16>
    %41 = tpu.concatenate %37, %38, %39, %40 in 0 : vector<1x128x32xbf16>, vector<1x128x32xbf16>, vector<1x128x32xbf16>, vector<1x128x32xbf16> -> vector<4x128x32xbf16>
    %42 = vector.extract_strided_slice %32 {offsets = [0, 128], sizes = [128, 32], strides = [1, 1]} : vector<128x384xbf16> to vector<128x32xbf16>
    %43 = vector.extract_strided_slice %32 {offsets = [0, 160], sizes = [128, 32], strides = [1, 1]} : vector<128x384xbf16> to vector<128x32xbf16>
    %44 = vector.extract_strided_slice %32 {offsets = [0, 192], sizes = [128, 32], strides = [1, 1]} : vector<128x384xbf16> to vector<128x32xbf16>
    %45 = vector.extract_strided_slice %32 {offsets = [0, 224], sizes = [128, 32], strides = [1, 1]} : vector<128x384xbf16> to vector<128x32xbf16>
    %46 = vector.shape_cast %42 : vector<128x32xbf16> to vector<1x128x32xbf16>
    %47 = vector.shape_cast %43 : vector<128x32xbf16> to vector<1x128x32xbf16>
    %48 = vector.shape_cast %44 : vector<128x32xbf16> to vector<1x128x32xbf16>
    %49 = vector.shape_cast %45 : vector<128x32xbf16> to vector<1x128x32xbf16>
    %50 = tpu.concatenate %46, %47, %48, %49 in 0 : vector<1x128x32xbf16>, vector<1x128x32xbf16>, vector<1x128x32xbf16>, vector<1x128x32xbf16> -> vector<4x128x32xbf16>
    %51 = vector.extract_strided_slice %32 {offsets = [0, 256], sizes = [128, 32], strides = [1, 1]} : vector<128x384xbf16> to vector<128x32xbf16>
    %52 = vector.extract_strided_slice %32 {offsets = [0, 288], sizes = [128, 32], strides = [1, 1]} : vector<128x384xbf16> to vector<128x32xbf16>
    %53 = vector.extract_strided_slice %32 {offsets = [0, 320], sizes = [128, 32], strides = [1, 1]} : vector<128x384xbf16> to vector<128x32xbf16>
    %54 = vector.extract_strided_slice %32 {offsets = [0, 352], sizes = [128, 32], strides = [1, 1]} : vector<128x384xbf16> to vector<128x32xbf16>
    %55 = vector.shape_cast %51 : vector<128x32xbf16> to vector<1x128x32xbf16>
    %56 = vector.shape_cast %52 : vector<128x32xbf16> to vector<1x128x32xbf16>
    %57 = vector.shape_cast %53 : vector<128x32xbf16> to vector<1x128x32xbf16>
    %58 = vector.shape_cast %54 : vector<128x32xbf16> to vector<1x128x32xbf16>
    %59 = tpu.concatenate %55, %56, %57, %58 in 0 : vector<1x128x32xbf16>, vector<1x128x32xbf16>, vector<1x128x32xbf16>, vector<1x128x32xbf16> -> vector<4x128x32xbf16>
    "tpu.trace_start"() <{level = 10 : i32, message = "hqd,hkd->hqk"}> : () -> ()
    %cst_15 = arith.constant dense<0.000000e+00> : vector<4x128x128xf32>
    %60 = tpu.matmul %41, %50, %cst_15 {dimension_numbers = #tpu.dot_dimension_numbers<[2], [2], [1], [1], [0, 0, 0, 1, 1, 1], [0], [0]>} : vector<4x128x32xbf16>, vector<4x128x32xbf16>, vector<4x128x128xf32> -> vector<4x128x128xf32>
    "tpu.trace_stop"() : () -> ()
    %cst_16 = arith.constant dense<0xFF800000> : vector<4x128xf32>
    %61 = vector.multi_reduction <maximumf>, %60, %cst_16 [2] : vector<4x128x128xf32> to vector<4x128xf32>
    %62 = vector.shape_cast %61 : vector<4x128xf32> to vector<4x128x1xf32>
    %63 = vector.broadcast %62 : vector<4x128x1xf32> to vector<4x128x128xf32>
    %64 = arith.subf %60, %63 : vector<4x128x128xf32>
    %65 = math.exp %64 : vector<4x128x128xf32>
    %cst_17 = arith.constant dense<0.000000e+00> : vector<4x128xf32>
    %66 = vector.multi_reduction <add>, %65, %cst_17 [2] : vector<4x128x128xf32> to vector<4x128xf32>
    %67 = vector.shape_cast %66 : vector<4x128xf32> to vector<4x128x1xf32>
    %68 = tpu.reciprocal %67 {approx = true} : vector<4x128x1xf32> -> vector<4x128x1xf32>
    %69 = vector.broadcast %68 : vector<4x128x1xf32> to vector<4x128x128xf32>
    %70 = arith.mulf %65, %69 : vector<4x128x128xf32>
    %71 = arith.truncf %70 : vector<4x128x128xf32> to vector<4x128x128xbf16>
    "tpu.trace_start"() <{level = 10 : i32, message = "hqk,hkd->hqd"}> : () -> ()
    %cst_18 = arith.constant dense<0.000000e+00> : vector<4x128x32xf32>
    %72 = tpu.matmul %71, %59, %cst_18 {dimension_numbers = #tpu.dot_dimension_numbers<[2], [1], [1], [2], [0, 0, 0, 1, 1, 2], [0], [0]>} : vector<4x128x128xbf16>, vector<4x128x32xbf16>, vector<4x128x32xf32> -> vector<4x128x32xf32>
    "tpu.trace_stop"() : () -> ()
    %73 = vector.extract_strided_slice %72 {offsets = [0, 0, 0], sizes = [1, 128, 32], strides = [1, 1, 1]} : vector<4x128x32xf32> to vector<1x128x32xf32>
    %74 = vector.shape_cast %73 : vector<1x128x32xf32> to vector<128x32xf32>
    %75 = vector.extract_strided_slice %72 {offsets = [1, 0, 0], sizes = [1, 128, 32], strides = [1, 1, 1]} : vector<4x128x32xf32> to vector<1x128x32xf32>
    %76 = vector.shape_cast %75 : vector<1x128x32xf32> to vector<128x32xf32>
    %77 = vector.extract_strided_slice %72 {offsets = [2, 0, 0], sizes = [1, 128, 32], strides = [1, 1, 1]} : vector<4x128x32xf32> to vector<1x128x32xf32>
    %78 = vector.shape_cast %77 : vector<1x128x32xf32> to vector<128x32xf32>
    %79 = vector.extract_strided_slice %72 {offsets = [3, 0, 0], sizes = [1, 128, 32], strides = [1, 1, 1]} : vector<4x128x32xf32> to vector<1x128x32xf32>
    %80 = vector.shape_cast %79 : vector<1x128x32xf32> to vector<128x32xf32>
    %81 = tpu.concatenate %74, %76, %78, %80 in 1 : vector<128x32xf32>, vector<128x32xf32>, vector<128x32xf32>, vector<128x32xf32> -> vector<128x128xf32>
    %82 = arith.truncf %81 : vector<128x128xf32> to vector<128x128xbf16>
    %c0_19 = arith.constant 0 : index
    %c0_20 = arith.constant 0 : index
    %83 = vector.load %arg6[%c0_19, %c0_20] : memref<128x128xbf16, #tpu.memory_space<vmem>>, vector<128x128xbf16>
    %cst_21 = arith.constant dense<0.000000e+00> : vector<128x128xf32>
    %84 = tpu.matmul %82, %83, %cst_21 {dimension_numbers = #tpu.dot_dimension_numbers<[1], [0], [0], [1], [0, 0, 1, 1], [], []>} : vector<128x128xbf16>, vector<128x128xbf16>, vector<128x128xf32> -> vector<128x128xf32>
    %85 = arith.addf %1, %84 : vector<128x128xf32>
    %c0_22 = arith.constant 0 : index
    %c0_23 = arith.constant 0 : index
    %86 = vector.load %arg7[%c0_22, %c0_23] : memref<1x128xf32, #tpu.memory_space<vmem>>, vector<1x128xf32>
    %87 = vector.broadcast %86 : vector<1x128xf32> to vector<128x128xf32>
    %88 = arith.addf %85, %87 : vector<128x128xf32>
    %c0_24 = arith.constant 0 : index
    %c0_25 = arith.constant 0 : index
    %89 = vector.load %arg8[%c0_24, %c0_25] : memref<1x128xf32, #tpu.memory_space<vmem>>, vector<1x128xf32>
    %c0_26 = arith.constant 0 : index
    %c0_27 = arith.constant 0 : index
    %90 = vector.load %arg9[%c0_26, %c0_27] : memref<1x128xf32, #tpu.memory_space<vmem>>, vector<1x128xf32>
    %cst_28 = arith.constant dense<0.000000e+00> : vector<128xf32>
    %91 = vector.multi_reduction <add>, %88, %cst_28 [1] : vector<128x128xf32> to vector<128xf32>
    %92 = vector.shape_cast %91 : vector<128xf32> to vector<128x1xf32>
    %cst_29 = arith.constant 1.280000e+02 : f32
    %93 = vector.broadcast %cst_29 : f32 to vector<128x1xf32>
    %94 = arith.divf %92, %93 : vector<128x1xf32>
    %95 = vector.broadcast %94 : vector<128x1xf32> to vector<128x128xf32>
    %96 = arith.subf %88, %95 : vector<128x128xf32>
    %97 = arith.mulf %96, %96 : vector<128x128xf32>
    %cst_30 = arith.constant dense<0.000000e+00> : vector<128xf32>
    %98 = vector.multi_reduction <add>, %97, %cst_30 [1] : vector<128x128xf32> to vector<128xf32>
    %99 = vector.shape_cast %98 : vector<128xf32> to vector<128x1xf32>
    %cst_31 = arith.constant 1.280000e+02 : f32
    %100 = vector.broadcast %cst_31 : f32 to vector<128x1xf32>
    %101 = arith.divf %99, %100 : vector<128x1xf32>
    %102 = vector.broadcast %94 : vector<128x1xf32> to vector<128x128xf32>
    %103 = arith.subf %88, %102 : vector<128x128xf32>
    %cst_32 = arith.constant 9.99999974E-6 : f32
    %104 = vector.broadcast %cst_32 : f32 to vector<128x1xf32>
    %105 = arith.addf %101, %104 : vector<128x1xf32>
    %106 = math.rsqrt %105 : vector<128x1xf32>
    %107 = vector.broadcast %106 : vector<128x1xf32> to vector<128x128xf32>
    %108 = arith.mulf %103, %107 : vector<128x128xf32>
    %109 = vector.broadcast %89 : vector<1x128xf32> to vector<128x128xf32>
    %110 = arith.mulf %108, %109 : vector<128x128xf32>
    %111 = vector.broadcast %90 : vector<1x128xf32> to vector<128x128xf32>
    %112 = arith.addf %110, %111 : vector<128x128xf32>
    %113 = arith.truncf %112 : vector<128x128xf32> to vector<128x128xbf16>
    %c0_33 = arith.constant 0 : index
    %c0_34 = arith.constant 0 : index
    %114 = vector.load %arg10[%c0_33, %c0_34] : memref<128x512xbf16, #tpu.memory_space<vmem>>, vector<128x512xbf16>
    %cst_35 = arith.constant dense<0.000000e+00> : vector<128x512xf32>
    %115 = tpu.matmul %113, %114, %cst_35 {dimension_numbers = #tpu.dot_dimension_numbers<[1], [0], [0], [1], [0, 0, 1, 1], [], []>} : vector<128x128xbf16>, vector<128x512xbf16>, vector<128x512xf32> -> vector<128x512xf32>
    %c0_36 = arith.constant 0 : index
    %c0_37 = arith.constant 0 : index
    %116 = vector.load %arg11[%c0_36, %c0_37] : memref<1x512xf32, #tpu.memory_space<vmem>>, vector<1x512xf32>
    %117 = vector.broadcast %116 : vector<1x512xf32> to vector<128x512xf32>
    %118 = arith.addf %115, %117 : vector<128x512xf32>
    %cst_38 = arith.constant 1.702000e+00 : f32
    %119 = vector.broadcast %cst_38 : f32 to vector<128x512xf32>
    %120 = arith.mulf %119, %118 : vector<128x512xf32>
    %121 = arith.negf %120 : vector<128x512xf32>
    %122 = math.exp %121 : vector<128x512xf32>
    %cst_39 = arith.constant 1.000000e+00 : f32
    %123 = vector.broadcast %cst_39 : f32 to vector<128x512xf32>
    %124 = arith.addf %123, %122 : vector<128x512xf32>
    %125 = arith.divf %123, %124 : vector<128x512xf32>
    %126 = arith.mulf %118, %125 : vector<128x512xf32>
    %127 = arith.truncf %126 : vector<128x512xf32> to vector<128x512xbf16>
    %c0_40 = arith.constant 0 : index
    %c0_41 = arith.constant 0 : index
    %128 = vector.load %arg12[%c0_40, %c0_41] : memref<512x128xbf16, #tpu.memory_space<vmem>>, vector<512x128xbf16>
    %cst_42 = arith.constant dense<0.000000e+00> : vector<128x128xf32>
    %129 = tpu.matmul %127, %128, %cst_42 {dimension_numbers = #tpu.dot_dimension_numbers<[1], [0], [0], [1], [0, 0, 1, 1], [], []>} : vector<128x512xbf16>, vector<512x128xbf16>, vector<128x128xf32> -> vector<128x128xf32>
    %c0_43 = arith.constant 0 : index
    %c0_44 = arith.constant 0 : index
    %130 = vector.load %arg13[%c0_43, %c0_44] : memref<1x128xf32, #tpu.memory_space<vmem>>, vector<1x128xf32>
    %131 = vector.broadcast %130 : vector<1x128xf32> to vector<128x128xf32>
    %132 = arith.addf %129, %131 : vector<128x128xf32>
    %133 = arith.addf %88, %132 : vector<128x128xf32>
    %134 = vector.shape_cast %133 : vector<128x128xf32> to vector<1x128x128xf32>
    %c0_45 = arith.constant 0 : index
    %c0_46 = arith.constant 0 : index
    %c0_47 = arith.constant 0 : index
    %135 = vector.load %arg14[%c0_45, %c0_46, %c0_47] : memref<1x128x128xf32, #tpu.memory_space<vmem>>, vector<1x128x128xf32>
    tpu.vector_store %arg14[%c0_45, %c0_46, %c0_47], %134 {strides = array<i32>} : memref<1x128x128xf32, #tpu.memory_space<vmem>>, vector<1x128x128xf32>,
    return
  }
  func.func @transform_0(%arg0: i32) -> (i32, i32, i32) {
    %c0_i32 = arith.constant 0 : i32
    %c0_i32_0 = arith.constant 0 : i32
    %c0_i32_1 = arith.constant 0 : i32
    return %arg0, %c0_i32, %c0_i32_0 : i32, i32, i32
  }
  func.func @transform_1(%arg0: i32) -> (i32, i32) {
    %c0_i32 = arith.constant 0 : i32
    %c0_i32_0 = arith.constant 0 : i32
    %c0_i32_1 = arith.constant 0 : i32
    return %c0_i32, %c0_i32_0 : i32, i32
  }
  func.func @transform_2(%arg0: i32) -> (i32, i32) {
    %c0_i32 = arith.constant 0 : i32
    %c0_i32_0 = arith.constant 0 : i32
    %c0_i32_1 = arith.constant 0 : i32
    return %c0_i32, %c0_i32_0 : i32, i32
  }
  func.func @transform_3(%arg0: i32) -> (i32, i32) {
    %c0_i32 = arith.constant 0 : i32
    %c0_i32_0 = arith.constant 0 : i32
    %c0_i32_1 = arith.constant 0 : i32
    return %c0_i32, %c0_i32_0 : i32, i32
  }
  func.func @transform_4(%arg0: i32) -> (i32, i32) {
    %c0_i32 = arith.constant 0 : i32
    %c0_i32_0 = arith.constant 0 : i32
    %c0_i32_1 = arith.constant 0 : i32
    return %c0_i32, %c0_i32_0 : i32, i32
  }
  func.func @transform_5(%arg0: i32) -> (i32, i32) {
    %c0_i32 = arith.constant 0 : i32
    %c0_i32_0 = arith.constant 0 : i32
    %c0_i32_1 = arith.constant 0 : i32
    return %c0_i32, %c0_i32_0 : i32, i32
  }
  func.func @transform_6(%arg0: i32) -> (i32, i32) {
    %c0_i32 = arith.constant 0 : i32
    %c0_i32_0 = arith.constant 0 : i32
    %c0_i32_1 = arith.constant 0 : i32
    return %c0_i32, %c0_i32_0 : i32, i32
  }
  func.func @transform_7(%arg0: i32) -> (i32, i32) {
    %c0_i32 = arith.constant 0 : i32
    %c0_i32_0 = arith.constant 0 : i32
    %c0_i32_1 = arith.constant 0 : i32
    return %c0_i32, %c0_i32_0 : i32, i32
  }
  func.func @transform_8(%arg0: i32) -> (i32, i32) {
    %c0_i32 = arith.constant 0 : i32
    %c0_i32_0 = arith.constant 0 : i32
    %c0_i32_1 = arith.constant 0 : i32
    return %c0_i32, %c0_i32_0 : i32, i32
  }
  func.func @transform_9(%arg0: i32) -> (i32, i32) {
    %c0_i32 = arith.constant 0 : i32
    %c0_i32_0 = arith.constant 0 : i32
    %c0_i32_1 = arith.constant 0 : i32
    return %c0_i32, %c0_i32_0 : i32, i32
  }
  func.func @transform_10(%arg0: i32) -> (i32, i32) {
    %c0_i32 = arith.constant 0 : i32
    %c0_i32_0 = arith.constant 0 : i32
    %c0_i32_1 = arith.constant 0 : i32
    return %c0_i32, %c0_i32_0 : i32, i32
  }
  func.func @transform_11(%arg0: i32) -> (i32, i32) {
    %c0_i32 = arith.constant 0 : i32
    %c0_i32_0 = arith.constant 0 : i32
    %c0_i32_1 = arith.constant 0 : i32
    return %c0_i32, %c0_i32_0 : i32, i32
  }
  func.func @transform_12(%arg0: i32) -> (i32, i32) {
    %c0_i32 = arith.constant 0 : i32
    %c0_i32_0 = arith.constant 0 : i32
    %c0_i32_1 = arith.constant 0 : i32
    return %c0_i32, %c0_i32_0 : i32, i32
  }
  func.func @transform_13(%arg0: i32) -> (i32, i32, i32) {
    %c0_i32 = arith.constant 0 : i32
    %c0_i32_0 = arith.constant 0 : i32
    %c0_i32_1 = arith.constant 0 : i32
    return %arg0, %c0_i32, %c0_i32_0 : i32, i32, i32
  }
}

</mosaic_0001>

<llo_original>
// kernel: tpu_custom_call.1
$region0: #{tpu_custom_call.1}
  #allocation0 [shape = 'u32[]', space=smem, size = 0x4, offset = 0x4, fixed_abs, tag = 'smem constant byte address 0x4 - core index']
  #allocation1 [shape = 'u32[144,128]{1,0:T(1,128)}', space=vmem, size = 0x12000, scoped, tag = 'internal scratch']
  %s0 = inlined_call_operand.hbm [shape: f32[2,128,128], index: 0, kind: input, shape index: {}]
  %s1 = inlined_call_operand.hbm [shape: f32[1,128], index: 1, kind: input, shape index: {}]
  %s2 = inlined_call_operand.hbm [shape: f32[1,128], index: 2, kind: input, shape index: {}]
  %s3 = inlined_call_operand.hbm [shape: bf16[128,384], index: 3, kind: input, shape index: {}]
  %s4 = inlined_call_operand.vmem [shape: f32[1,384], index: 4, kind: input, shape index: {}]
  %s5 = inlined_call_operand.hbm [shape: bf16[128,128], index: 5, kind: input, shape index: {}]
  %s6 = inlined_call_operand.vmem [shape: f32[1,128], index: 6, kind: input, shape index: {}]
  %s7 = inlined_call_operand.vmem [shape: f32[1,128], index: 7, kind: input, shape index: {}]
  %s8 = inlined_call_operand.vmem [shape: f32[1,128], index: 8, kind: input, shape index: {}]
  %s9 = inlined_call_operand.hbm [shape: bf16[128,512], index: 9, kind: input, shape index: {}]
  %s10 = inlined_call_operand.vmem [shape: f32[1,512], index: 10, kind: input, shape index: {}]
  %s11 = inlined_call_operand.hbm [shape: bf16[512,128], index: 11, kind: input, shape index: {}]
  %s12 = inlined_call_operand.vmem [shape: f32[1,128], index: 12, kind: input, shape index: {}]
  %s13 = inlined_call_operand.hbm [shape: f32[2,128,128], index: 13, kind: output, shape index: {}]
  %s14 = sld [smem:[#allocation0]]
  $region113: #{tpu_custom_call.1} parent=0
    _
  %s16 = ssub.s32 1, %s14
  %s17 = scalar_select 0, %s16, %s14
  $region1: #{tpu_custom_call.1} parent=0
    #allocation2 [shape = 'u8[131072]{0}', space=vmem, size = 0x20000, scoped, tag = 'input window, operand 0']
    #allocation3 [shape = 's32[2]{0}', space=sflag, size = 0x8, scoped, tag = 'scoped memory for tpu_custom_call.1']
    #allocation4 [shape = 's32[2]{0}', space=sflag, size = 0x8, scoped, tag = 'scoped memory for tpu_custom_call.1']
    #allocation5 [shape = 'u8[512]{0}', space=vmem, size = 0x400, scoped, tag = 'input window, operand 1, single buffered']
    #allocation6 [shape = 's32[1]{0}', space=sflag, size = 0x4, scoped, tag = 'scoped memory for tpu_custom_call.1']
    #allocation7 [shape = 'u8[512]{0}', space=vmem, size = 0x400, scoped, tag = 'input window, operand 2, single buffered']
    #allocation8 [shape = 'u8[98304]{0}', space=vmem, size = 0x18000, scoped, tag = 'input window, operand 3, single buffered']
    #allocation9 [shape = 's32[1]{0}', space=sflag, size = 0x4, scoped, tag = 'scoped memory for tpu_custom_call.1']
    #allocation10 [shape = 'u8[32768]{0}', space=vmem, size = 0x8000, scoped, tag = 'input window, operand 5, single buffered']
    #allocation11 [shape = 'u8[131072]{0}', space=vmem, size = 0x20000, scoped, tag = 'input window, operand 9, single buffered']
    #allocation12 [shape = 's32[1]{0}', space=sflag, size = 0x4, scoped, tag = 'scoped memory for tpu_custom_call.1']
    #allocation13 [shape = 'u8[131072]{0}', space=vmem, size = 0x20000, scoped, tag = 'input window, operand 11, single buffered']
    #allocation14 [shape = 'u8[131072]{0}', space=vmem, size = 0x20000, scoped, tag = 'output window, operand 0']
    %18 = vsyncpa [#allocation3], 0
    %s19 = scalar_lea.sflag [#allocation3], 1
    %20 = vsyncpa %s19, 0
    %21 = vsyncpa [#allocation6], 0
    %22 = vsyncpa [#allocation9], 0
    %23 = vsyncpa [#allocation12], 0
    %24 = vsyncpa [#allocation4], 0
    %s25 = scalar_lea.sflag [#allocation4], 1
    %26 = vsyncpa %s25, 0
    loop: start=0, step=1, limit=4
    $region2: #{tpu_custom_call.1} parent=1 // loop_pre_header
      _
    $region3: #{tpu_custom_call.1} parent=1 // loop_header
      %s28 = sphi 0, %s32
      %p29 = scmp.ge.s32.totalorder %s28, 4
      %s38 = sphi 0, %s40
      %s41 = sphi 0, %s38
      %s42 = sphi 0, %s41
      %s58 = sphi 0, %s42
      %s62 = sphi 0, %s62
      %s64 = sphi 0, %s62
      %s65 = sphi 0, %s64
      %s79 = sphi 0, %s65
      %s83 = sphi 0, %s83
      %s85 = sphi 0, %s83
      %s86 = sphi 0, %s85
      %s100 = sphi 0, %s86
      %s104 = sphi 0, %s104
      %s106 = sphi 0, %s104
      %s107 = sphi 0, %s106
      %s121 = sphi 0, %s107
      %s125 = sphi 0, %s125
      %s127 = sphi 0, %s125
      %s128 = sphi 0, %s127
      %s142 = sphi 0, %s128
      %s146 = sphi 0, %s146
      %s148 = sphi 0, %s146
      %s149 = sphi 0, %s148
      %s163 = sphi 0, %s149
      %s167 = sphi 0, %s167
      %s169 = sphi 0, %s167
      %s170 = sphi 0, %s169
      %s184 = sphi 0, %s170
      %s188 = sphi 0, %s188
      %s190 = sphi 0, %s188
      %s191 = sphi 0, %s190
      %s205 = sphi 0, %s191
      %s209 = sphi 0, %s209
      %s211 = sphi 0, %s209
      %s212 = sphi 0, %s211
      %s226 = sphi 0, %s212
      %s230 = sphi 0, %s230
      %s232 = sphi 0, %s230
      %s233 = sphi 0, %s232
      %s247 = sphi 0, %s233
      %s251 = sphi 0, %s251
      %s253 = sphi 0, %s251
      %s254 = sphi 0, %s253
      %s268 = sphi 0, %s254
      %s272 = sphi 0, %s272
      %s274 = sphi 0, %s272
      %s275 = sphi 0, %s274
      %s289 = sphi 0, %s275
      %s293 = sphi 0, %s293
      %s295 = sphi 0, %s293
      %s296 = sphi 0, %s295
      %s310 = sphi 0, %s296
      %s316 = sphi 0, %s318
      %s319 = sphi 0, %s316
      %s320 = sphi 0, %s319
      %s336 = sphi 0, %s320
    $region4: #{tpu_custom_call.1} parent=1 // loop_header_branch
      %31 = sbr.rel (%p29) target = $region8
    $region5: #{tpu_custom_call.1} parent=1 // loop_body
      %s33 = ssub.s32 %s28, 1
      %s34 = ssub.s32 %s28, 2
      %s35 = sadd.s32 %s28, 1
      %s36 = ssub.s32 %s28, %s35
      %p37 = scmp.eq.s32.totalorder %s36, 0
      %s39 = sadd.s32 %s38, 1
      %s40 = scalar_select %p37, %s38, %s39
      %p43 = pneg %p37
      %p44 = scmp.eq.s32.totalorder %s28, 1
      %p45 = por %p43, %p44
      %p46 = scmp.ne.s32.totalorder %s38, %s41
      %p47 = scmp.eq.s32.totalorder %s28, 0
      %p48 = por %p46, %p47
      %p49 = scmp.ne.s32.totalorder %s38, %s41
      %p50 = scmp.eq.s32.totalorder %s33, 1
      %p51 = por %p49, %p50
      %p52 = scmp.ne.s32.totalorder %s41, %s42
      %p53 = scmp.eq.s32.totalorder %s33, 0
      %p54 = por %p52, %p53
      %p55 = scmp.ne.s32.totalorder %s41, %s42
      %p56 = scmp.eq.s32.totalorder %s34, 1
      %p57 = por %p55, %p56
      %p59 = scmp.ne.s32.totalorder %s42, %s58
      %p60 = scmp.eq.s32.totalorder %s34, 0
      %p61 = por %p59, %p60
      %s63 = sadd.s32 %s62, 1
      %p66 = scmp.eq.s32.totalorder %s28, 1
      %p67 = scmp.ne.s32.totalorder %s62, %s64
      %p68 = scmp.eq.s32.totalorder %s28, 0
      %p69 = por %p67, %p68
      %p70 = scmp.ne.s32.totalorder %s62, %s64
      %p71 = scmp.eq.s32.totalorder %s33, 1
      %p72 = por %p70, %p71
      %p73 = scmp.ne.s32.totalorder %s64, %s65
      %p74 = scmp.eq.s32.totalorder %s33, 0
      %p75 = por %p73, %p74
      %p76 = scmp.ne.s32.totalorder %s64, %s65
      %p77 = scmp.eq.s32.totalorder %s34, 1
      %p78 = por %p76, %p77
      %p80 = scmp.ne.s32.totalorder %s65, %s79
      %p81 = scmp.eq.s32.totalorder %s34, 0
      %p82 = por %p80, %p81
      %s84 = sadd.s32 %s83, 1
      %p87 = scmp.eq.s32.totalorder %s28, 1
      %p88 = scmp.ne.s32.totalorder %s83, %s85
      %p89 = scmp.eq.s32.totalorder %s28, 0
      %p90 = por %p88, %p89
      %p91 = scmp.ne.s32.totalorder %s83, %s85
      %p92 = scmp.eq.s32.totalorder %s33, 1
      %p93 = por %p91, %p92
      %p94 = scmp.ne.s32.totalorder %s85, %s86
      %p95 = scmp.eq.s32.totalorder %s33, 0
      %p96 = por %p94, %p95
      %p97 = scmp.ne.s32.totalorder %s85, %s86
      %p98 = scmp.eq.s32.totalorder %s34, 1
      %p99 = por %p97, %p98
      %p101 = scmp.ne.s32.totalorder %s86, %s100
      %p102 = scmp.eq.s32.totalorder %s34, 0
      %p103 = por %p101, %p102
      %s105 = sadd.s32 %s104, 1
      %p108 = scmp.eq.s32.totalorder %s28, 1
      %p109 = scmp.ne.s32.totalorder %s104, %s106
      %p110 = scmp.eq.s32.totalorder %s28, 0
      %p111 = por %p109, %p110
      %p112 = scmp.ne.s32.totalorder %s104, %s106
      %p113 = scmp.eq.s32.totalorder %s33, 1
      %p114 = por %p112, %p113
      %p115 = scmp.ne.s32.totalorder %s106, %s107
      %p116 = scmp.eq.s32.totalorder %s33, 0
      %p117 = por %p115, %p116
      %p118 = scmp.ne.s32.totalorder %s106, %s107
      %p119 = scmp.eq.s32.totalorder %s34, 1
      %p120 = por %p118, %p119
      %p122 = scmp.ne.s32.totalorder %s107, %s121
      %p123 = scmp.eq.s32.totalorder %s34, 0
      %p124 = por %p122, %p123
      %s126 = sadd.s32 %s125, 1
      %p129 = scmp.eq.s32.totalorder %s28, 1
      %p130 = scmp.ne.s32.totalorder %s125, %s127
      %p131 = scmp.eq.s32.totalorder %s28, 0
      %p132 = por %p130, %p131
      %p133 = scmp.ne.s32.totalorder %s125, %s127
      %p134 = scmp.eq.s32.totalorder %s33, 1
      %p135 = por %p133, %p134
      %p136 = scmp.ne.s32.totalorder %s127, %s128
      %p137 = scmp.eq.s32.totalorder %s33, 0
      %p138 = por %p136, %p137
      %p139 = scmp.ne.s32.totalorder %s127, %s128
      %p140 = scmp.eq.s32.totalorder %s34, 1
      %p141 = por %p139, %p140
      %p143 = scmp.ne.s32.totalorder %s128, %s142
      %p144 = scmp.eq.s32.totalorder %s34, 0
      %p145 = por %p143, %p144
      %s147 = sadd.s32 %s146, 1
      %p150 = scmp.eq.s32.totalorder %s28, 1
      %p151 = scmp.ne.s32.totalorder %s146, %s148
      %p152 = scmp.eq.s32.totalorder %s28, 0
      %p153 = por %p151, %p152
      %p154 = scmp.ne.s32.totalorder %s146, %s148
      %p155 = scmp.eq.s32.totalorder %s33, 1
      %p156 = por %p154, %p155
      %p157 = scmp.ne.s32.totalorder %s148, %s149
      %p158 = scmp.eq.s32.totalorder %s33, 0
      %p159 = por %p157, %p158
      %p160 = scmp.ne.s32.totalorder %s148, %s149
      %p161 = scmp.eq.s32.totalorder %s34, 1
      %p162 = por %p160, %p161
      %p164 = scmp.ne.s32.totalorder %s149, %s163
      %p165 = scmp.eq.s32.totalorder %s34, 0
      %p166 = por %p164, %p165
      %s168 = sadd.s32 %s167, 1
      %p171 = scmp.eq.s32.totalorder %s28, 1
      %p172 = scmp.ne.s32.totalorder %s167, %s169
      %p173 = scmp.eq.s32.totalorder %s28, 0
      %p174 = por %p172, %p173
      %p175 = scmp.ne.s32.totalorder %s167, %s169
      %p176 = scmp.eq.s32.totalorder %s33, 1
      %p177 = por %p175, %p176
      %p178 = scmp.ne.s32.totalorder %s169, %s170
      %p179 = scmp.eq.s32.totalorder %s33, 0
      %p180 = por %p178, %p179
      %p181 = scmp.ne.s32.totalorder %s169, %s170
      %p182 = scmp.eq.s32.totalorder %s34, 1
      %p183 = por %p181, %p182
      %p185 = scmp.ne.s32.totalorder %s170, %s184
      %p186 = scmp.eq.s32.totalorder %s34, 0
      %p187 = por %p185, %p186
      %s189 = sadd.s32 %s188, 1
      %p192 = scmp.eq.s32.totalorder %s28, 1
      %p193 = scmp.ne.s32.totalorder %s188, %s190
      %p194 = scmp.eq.s32.totalorder %s28, 0
      %p195 = por %p193, %p194
      %p196 = scmp.ne.s32.totalorder %s188, %s190
      %p197 = scmp.eq.s32.totalorder %s33, 1
      %p198 = por %p196, %p197
      %p199 = scmp.ne.s32.totalorder %s190, %s191
      %p200 = scmp.eq.s32.totalorder %s33, 0
      %p201 = por %p199, %p200
      %p202 = scmp.ne.s32.totalorder %s190, %s191
      %p203 = scmp.eq.s32.totalorder %s34, 1
      %p204 = por %p202, %p203
      %p206 = scmp.ne.s32.totalorder %s191, %s205
      %p207 = scmp.eq.s32.totalorder %s34, 0
      %p208 = por %p206, %p207
      %s210 = sadd.s32 %s209, 1
      %p213 = scmp.eq.s32.totalorder %s28, 1
      %p214 = scmp.ne.s32.totalorder %s209, %s211
      %p215 = scmp.eq.s32.totalorder %s28, 0
      %p216 = por %p214, %p215
      %p217 = scmp.ne.s32.totalorder %s209, %s211
      %p218 = scmp.eq.s32.totalorder %s33, 1
      %p219 = por %p217, %p218
      %p220 = scmp.ne.s32.totalorder %s211, %s212
      %p221 = scmp.eq.s32.totalorder %s33, 0
      %p222 = por %p220, %p221
      %p223 = scmp.ne.s32.totalorder %s211, %s212
      %p224 = scmp.eq.s32.totalorder %s34, 1
      %p225 = por %p223, %p224
      %p227 = scmp.ne.s32.totalorder %s212, %s226
      %p228 = scmp.eq.s32.totalorder %s34, 0
      %p229 = por %p227, %p228
      %s231 = sadd.s32 %s230, 1
      %p234 = scmp.eq.s32.totalorder %s28, 1
      %p235 = scmp.ne.s32.totalorder %s230, %s232
      %p236 = scmp.eq.s32.totalorder %s28, 0
      %p237 = por %p235, %p236
      %p238 = scmp.ne.s32.totalorder %s230, %s232
      %p239 = scmp.eq.s32.totalorder %s33, 1
      %p240 = por %p238, %p239
      %p241 = scmp.ne.s32.totalorder %s232, %s233
      %p242 = scmp.eq.s32.totalorder %s33, 0
      %p243 = por %p241, %p242
      %p244 = scmp.ne.s32.totalorder %s232, %s233
      %p245 = scmp.eq.s32.totalorder %s34, 1
      %p246 = por %p244, %p245
      %p248 = scmp.ne.s32.totalorder %s233, %s247
      %p249 = scmp.eq.s32.totalorder %s34, 0
      %p250 = por %p248, %p249
      %s252 = sadd.s32 %s251, 1
      %p255 = scmp.eq.s32.totalorder %s28, 1
      %p256 = scmp.ne.s32.totalorder %s251, %s253
      %p257 = scmp.eq.s32.totalorder %s28, 0
      %p258 = por %p256, %p257
      %p259 = scmp.ne.s32.totalorder %s251, %s253
      %p260 = scmp.eq.s32.totalorder %s33, 1
      %p261 = por %p259, %p260
      %p262 = scmp.ne.s32.totalorder %s253, %s254
      %p263 = scmp.eq.s32.totalorder %s33, 0
      %p264 = por %p262, %p263
      %p265 = scmp.ne.s32.totalorder %s253, %s254
      %p266 = scmp.eq.s32.totalorder %s34, 1
      %p267 = por %p265, %p266
      %p269 = scmp.ne.s32.totalorder %s254, %s268
      %p270 = scmp.eq.s32.totalorder %s34, 0
      %p271 = por %p269, %p270
      %s273 = sadd.s32 %s272, 1
      %p276 = scmp.eq.s32.totalorder %s28, 1
      %p277 = scmp.ne.s32.totalorder %s272, %s274
      %p278 = scmp.eq.s32.totalorder %s28, 0
      %p279 = por %p277, %p278
      %p280 = scmp.ne.s32.totalorder %s272, %s274
      %p281 = scmp.eq.s32.totalorder %s33, 1
      %p282 = por %p280, %p281
      %p283 = scmp.ne.s32.totalorder %s274, %s275
      %p284 = scmp.eq.s32.totalorder %s33, 0
      %p285 = por %p283, %p284
      %p286 = scmp.ne.s32.totalorder %s274, %s275
      %p287 = scmp.eq.s32.totalorder %s34, 1
      %p288 = por %p286, %p287
      %p290 = scmp.ne.s32.totalorder %s275, %s289
      %p291 = scmp.eq.s32.totalorder %s34, 0
      %p292 = por %p290, %p291
      %s294 = sadd.s32 %s293, 1
      %p297 = scmp.eq.s32.totalorder %s28, 1
      %p298 = scmp.ne.s32.totalorder %s293, %s295
      %p299 = scmp.eq.s32.totalorder %s28, 0
      %p300 = por %p298, %p299
      %p301 = scmp.ne.s32.totalorder %s293, %s295
      %p302 = scmp.eq.s32.totalorder %s33, 1
      %p303 = por %p301, %p302
      %p304 = scmp.ne.s32.totalorder %s295, %s296
      %p305 = scmp.eq.s32.totalorder %s33, 0
      %p306 = por %p304, %p305
      %p307 = scmp.ne.s32.totalorder %s295, %s296
      %p308 = scmp.eq.s32.totalorder %s34, 1
      %p309 = por %p307, %p308
      %p311 = scmp.ne.s32.totalorder %s296, %s310
      %p312 = scmp.eq.s32.totalorder %s34, 0
      %p313 = por %p311, %p312
      %s314 = ssub.s32 %s28, %s35
      %p315 = scmp.eq.s32.totalorder %s314, 0
      %s317 = sadd.s32 %s316, 1
      %s318 = scalar_select %p315, %s316, %s317
      %p321 = pneg %p315
      %p322 = scmp.eq.s32.totalorder %s28, 1
      %p323 = por %p321, %p322
      %p324 = scmp.ne.s32.totalorder %s316, %s319
      %p325 = scmp.eq.s32.totalorder %s28, 0
      %p326 = por %p324, %p325
      %p327 = scmp.ne.s32.totalorder %s316, %s319
      %p328 = scmp.eq.s32.totalorder %s33, 1
      %p329 = por %p327, %p328
      %p330 = scmp.ne.s32.totalorder %s319, %s320
      %p331 = scmp.eq.s32.totalorder %s33, 0
      %p332 = por %p330, %p331
      %p333 = scmp.ne.s32.totalorder %s319, %s320
      %p334 = scmp.eq.s32.totalorder %s34, 1
      %p335 = por %p333, %p334
      %p337 = scmp.ne.s32.totalorder %s320, %s336
      %p338 = scmp.eq.s32.totalorder %s34, 0
      %p339 = por %p337, %p338
      %p340 = scmp.le.s32.totalorder 1, %s28
      %p341 = scmp.lt.s32.totalorder %s28, 3
      %p342 = pnand %p340, %p341
      %p343 = pneg %p342
      // Predicated region
      $region9: #{tpu_custom_call.1} parent=5 // pred_check
        _
      $region10: #{tpu_custom_call.1} parent=5 // pred_check_branch
        %345 = sbr.rel (%p342) target = $region12
      $region11: #{tpu_custom_call.1} parent=5 // pred_region
        %s346 = ssub.s32 %s28, 1
        // Predicated region
        $region13: #{tpu_custom_call.1} parent=11 // pred_check
          %p347 = pneg %p75
        $region14: #{tpu_custom_call.1} parent=11 // pred_check_branch
          %349 = sbr.rel (%p347) target = $region16
        $region15: #{tpu_custom_call.1} parent=11 // pred_region
          %s351 = ssub.s32 16, 16
          %352 = vsyncadd [#allocation6], %s351
          %s354 = sshll.u32 [#allocation5], 4
          %s355 = int_to_ptr.vmem [resolvable:$true] %s354
          %357 = dma.hbm_to_vmem [thread:$0]  %s1, 16, %s355, [#allocation6]
        $region16: #{tpu_custom_call.1} parent=11 // pred_fallthru
          _
        // Predicated region
        $region17: #{tpu_custom_call.1} parent=11 // pred_check
          %p358 = pneg %p96
        $region18: #{tpu_custom_call.1} parent=11 // pred_check_branch
          %360 = sbr.rel (%p358) target = $region20
        $region19: #{tpu_custom_call.1} parent=11 // pred_region
          %s362 = ssub.s32 16, 16
          %363 = vsyncadd [#allocation6], %s362
          %s365 = sshll.u32 [#allocation7], 4
          %s366 = int_to_ptr.vmem [resolvable:$true] %s365
          %368 = dma.hbm_to_vmem [thread:$0]  %s2, 16, %s366, [#allocation6]
        $region20: #{tpu_custom_call.1} parent=11 // pred_fallthru
          _
        // Predicated region
        $region21: #{tpu_custom_call.1} parent=11 // pred_check
          %p369 = pneg %p117
        $region22: #{tpu_custom_call.1} parent=11 // pred_check_branch
          %371 = sbr.rel (%p369) target = $region24
        $region23: #{tpu_custom_call.1} parent=11 // pred_region
          %s373 = ssub.s32 3072, 3072
          %374 = vsyncadd [#allocation9], %s373
          %s375 = sshll.u32 [#allocation8], 4
          %s376 = int_to_ptr.vmem [resolvable:$true] %s375
          %381 = dma.hbm_to_vmem [thread:$0]  %s3, 3072, %s376, [#allocation9], 192, 192, 12
        $region24: #{tpu_custom_call.1} parent=11 // pred_fallthru
          _
        // Predicated region
        $region25: #{tpu_custom_call.1} parent=11 // pred_check
          %p382 = pneg %p138
        $region26: #{tpu_custom_call.1} parent=11 // pred_check_branch
          %384 = sbr.rel (%p382) target = $region28
        $region27: #{tpu_custom_call.1} parent=11 // pred_region
          _
        $region28: #{tpu_custom_call.1} parent=11 // pred_fallthru
          _
        // Predicated region
        $region29: #{tpu_custom_call.1} parent=11 // pred_check
          %p385 = pneg %p159
        $region30: #{tpu_custom_call.1} parent=11 // pred_check_branch
          %387 = sbr.rel (%p385) target = $region32
        $region31: #{tpu_custom_call.1} parent=11 // pred_region
          %s389 = ssub.s32 1024, 1024
          %390 = vsyncadd [#allocation9], %s389
          %s391 = sshll.u32 [#allocation10], 4
          %s392 = int_to_ptr.vmem [resolvable:$true] %s391
          %397 = dma.hbm_to_vmem [thread:$0]  %s5, 1024, %s392, [#allocation9], 64, 64, 4
        $region32: #{tpu_custom_call.1} parent=11 // pred_fallthru
          _
        // Predicated region
        $region33: #{tpu_custom_call.1} parent=11 // pred_check
          %p398 = pneg %p180
        $region34: #{tpu_custom_call.1} parent=11 // pred_check_branch
          %400 = sbr.rel (%p398) target = $region36
        $region35: #{tpu_custom_call.1} parent=11 // pred_region
          _
        $region36: #{tpu_custom_call.1} parent=11 // pred_fallthru
          _
        // Predicated region
        $region37: #{tpu_custom_call.1} parent=11 // pred_check
          %p401 = pneg %p201
        $region38: #{tpu_custom_call.1} parent=11 // pred_check_branch
          %403 = sbr.rel (%p401) target = $region40
        $region39: #{tpu_custom_call.1} parent=11 // pred_region
          _
        $region40: #{tpu_custom_call.1} parent=11 // pred_fallthru
          _
        // Predicated region
        $region41: #{tpu_custom_call.1} parent=11 // pred_check
          %p404 = pneg %p222
        $region42: #{tpu_custom_call.1} parent=11 // pred_check_branch
          %406 = sbr.rel (%p404) target = $region44
        $region43: #{tpu_custom_call.1} parent=11 // pred_region
          _
        $region44: #{tpu_custom_call.1} parent=11 // pred_fallthru
          _
        // Predicated region
        $region45: #{tpu_custom_call.1} parent=11 // pred_check
          %p407 = pneg %p243
        $region46: #{tpu_custom_call.1} parent=11 // pred_check_branch
          %409 = sbr.rel (%p407) target = $region48
        $region47: #{tpu_custom_call.1} parent=11 // pred_region
          %s411 = ssub.s32 4096, 4096
          %412 = vsyncadd [#allocation12], %s411
          %s413 = sshll.u32 [#allocation11], 4
          %s414 = int_to_ptr.vmem [resolvable:$true] %s413
          %419 = dma.hbm_to_vmem [thread:$0]  %s9, 4096, %s414, [#allocation12], 256, 256, 16
        $region48: #{tpu_custom_call.1} parent=11 // pred_fallthru
          _
        // Predicated region
        $region49: #{tpu_custom_call.1} parent=11 // pred_check
          %p420 = pneg %p264
        $region50: #{tpu_custom_call.1} parent=11 // pred_check_branch
          %422 = sbr.rel (%p420) target = $region52
        $region51: #{tpu_custom_call.1} parent=11 // pred_region
          _
        $region52: #{tpu_custom_call.1} parent=11 // pred_fallthru
          _
        // Predicated region
        $region53: #{tpu_custom_call.1} parent=11 // pred_check
          %p423 = pneg %p285
        $region54: #{tpu_custom_call.1} parent=11 // pred_check_branch
          %425 = sbr.rel (%p423) target = $region56
        $region55: #{tpu_custom_call.1} parent=11 // pred_region
          %s427 = ssub.s32 4096, 4096
          %428 = vsyncadd [#allocation12], %s427
          %s429 = sshll.u32 [#allocation13], 4
          %s430 = int_to_ptr.vmem [resolvable:$true] %s429
          %435 = dma.hbm_to_vmem [thread:$0]  %s11, 4096, %s430, [#allocation12], 64, 64, 4
        $region56: #{tpu_custom_call.1} parent=11 // pred_fallthru
          _
        // Predicated region
        $region57: #{tpu_custom_call.1} parent=11 // pred_check
          %p436 = pneg %p306
        $region58: #{tpu_custom_call.1} parent=11 // pred_check_branch
          %438 = sbr.rel (%p436) target = $region60
        $region59: #{tpu_custom_call.1} parent=11 // pred_region
          _
        $region60: #{tpu_custom_call.1} parent=11 // pred_fallthru
          _
      $region12: #{tpu_custom_call.1} parent=5 // pred_fallthru
        _
      %p439 = scmp.lt.s32.totalorder %s28, 2
      // Predicated region
      $region61: #{tpu_custom_call.1} parent=5 // pred_check
        %p440 = pneg %p439
      $region62: #{tpu_custom_call.1} parent=5 // pred_check_branch
        %442 = sbr.rel (%p440) target = $region64
      $region63: #{tpu_custom_call.1} parent=5 // pred_region
        // Predicated region
        $region65: #{tpu_custom_call.1} parent=63 // pred_check
          %p443 = pneg %p48
        $region66: #{tpu_custom_call.1} parent=63 // pred_check_branch
          %445 = sbr.rel (%p443) target = $region68
        $region67: #{tpu_custom_call.1} parent=63 // pred_region
          %s446 = sand.u32 %s38, 1
          %s447 = scalar_lea.sflag [#allocation3], %s446
          %s448 = sand.u32 %s38, 1
          %s449 = smul.addr %s448, 128
          %s450 = scalar_lea.vmem [#allocation2], %s449
          %s452 = ssub.s32 2048, 2048
          %453 = vsyncadd %s447, %s452
          %s454 = smul.addr %s28, 16
          %s455 = smul.addr %s454, 128
          %s456 = scalar_lea.hbm %s0, %s455
          %s457 = sshll.u32 %s450, 4
          %s458 = int_to_ptr.vmem [resolvable:$true] %s457
          %463 = dma.hbm_to_vmem [thread:$0]  %s456, 2048, %s458, %s447, 128, 128, 8
        $region68: #{tpu_custom_call.1} parent=63 // pred_fallthru
          _
      $region64: #{tpu_custom_call.1} parent=5 // pred_fallthru
        _
      %p464 = scmp.le.s32.totalorder 1, %s28
      %p465 = scmp.lt.s32.totalorder %s28, 3
      %p466 = pnand %p464, %p465
      %p467 = pneg %p466
      // Predicated region
      $region69: #{tpu_custom_call.1} parent=5 // pred_check
        _
      $region70: #{tpu_custom_call.1} parent=5 // pred_check_branch
        %469 = sbr.rel (%p466) target = $region72
      $region71: #{tpu_custom_call.1} parent=5 // pred_region
        %s470 = ssub.s32 %s28, 1
        %s471 = sand.u32 %s41, 1
        %s472 = scalar_lea.sflag [#allocation3], %s471
        %s473 = sand.u32 %s41, 1
        %s474 = smul.addr %s473, 128
        %s475 = scalar_lea.vmem [#allocation2], %s474
        // Predicated region
        $region73: #{tpu_custom_call.1} parent=71 // pred_check
          %p476 = pneg %p54
        $region74: #{tpu_custom_call.1} parent=71 // pred_check_branch
          %478 = sbr.rel (%p476) target = $region76
        $region75: #{tpu_custom_call.1} parent=71 // pred_region
          %479 = dma.done %s472, 2048
        $region76: #{tpu_custom_call.1} parent=71 // pred_fallthru
          _
        // Predicated region
        $region77: #{tpu_custom_call.1} parent=71 // pred_check
          %p480 = pneg %p75
        $region78: #{tpu_custom_call.1} parent=71 // pred_check_branch
          %482 = sbr.rel (%p480) target = $region80
        $region79: #{tpu_custom_call.1} parent=71 // pred_region
          %483 = dma.done [#allocation6], 16
        $region80: #{tpu_custom_call.1} parent=71 // pred_fallthru
          _
        // Predicated region
        $region81: #{tpu_custom_call.1} parent=71 // pred_check
          %p484 = pneg %p96
        $region82: #{tpu_custom_call.1} parent=71 // pred_check_branch
          %486 = sbr.rel (%p484) target = $region84
        $region83: #{tpu_custom_call.1} parent=71 // pred_region
          %487 = dma.done [#allocation6], 16
        $region84: #{tpu_custom_call.1} parent=71 // pred_fallthru
          _
        // Predicated region
        $region85: #{tpu_custom_call.1} parent=71 // pred_check
          %p488 = pneg %p117
        $region86: #{tpu_custom_call.1} parent=71 // pred_check_branch
          %490 = sbr.rel (%p488) target = $region88
        $region87: #{tpu_custom_call.1} parent=71 // pred_region
          %491 = dma.done [#allocation9], 3072
        $region88: #{tpu_custom_call.1} parent=71 // pred_fallthru
          _
        // Predicated region
        $region89: #{tpu_custom_call.1} parent=71 // pred_check
          %p492 = pneg %p159
        $region90: #{tpu_custom_call.1} parent=71 // pred_check_branch
          %494 = sbr.rel (%p492) target = $region92
        $region91: #{tpu_custom_call.1} parent=71 // pred_region
          %495 = dma.done [#allocation9], 1024
        $region92: #{tpu_custom_call.1} parent=71 // pred_fallthru
          _
        // Predicated region
        $region93: #{tpu_custom_call.1} parent=71 // pred_check
          %p496 = pneg %p243
        $region94: #{tpu_custom_call.1} parent=71 // pred_check_branch
          %498 = sbr.rel (%p496) target = $region96
        $region95: #{tpu_custom_call.1} parent=71 // pred_region
          %499 = dma.done [#allocation12], 4096
        $region96: #{tpu_custom_call.1} parent=71 // pred_fallthru
          _
        // Predicated region
        $region97: #{tpu_custom_call.1} parent=71 // pred_check
          %p500 = pneg %p285
        $region98: #{tpu_custom_call.1} parent=71 // pred_check_branch
          %502 = sbr.rel (%p500) target = $region100
        $region99: #{tpu_custom_call.1} parent=71 // pred_region
          %503 = dma.done [#allocation12], 4096
        $region100: #{tpu_custom_call.1} parent=71 // pred_fallthru
          _
        %s504 = sand.u32 %s41, 1
        %s505 = scalar_lea.sflag [#allocation3], %s504
        %s506 = sand.u32 %s41, 1
        %s507 = smul.addr %s506, 128
        %s508 = scalar_lea.vmem [#allocation2], %s507
        %p509 = pneg %p54
        %p510 = pneg %p51
        %p511 = pneg %p75
        %p512 = pneg %p72
        %p513 = pneg %p96
        %p514 = pneg %p93
        %p515 = pneg %p117
        %p516 = pneg %p114
        %p517 = pneg %p138
        %p518 = pneg %p135
        %p519 = pneg %p159
        %p520 = pneg %p156
        %p521 = pneg %p180
        %p522 = pneg %p177
        %p523 = pneg %p201
        %p524 = pneg %p198
        %p525 = pneg %p222
        %p526 = pneg %p219
        %p527 = pneg %p243
        %p528 = pneg %p240
        %p529 = pneg %p264
        %p530 = pneg %p261
        %p531 = pneg %p285
        %p532 = pneg %p282
        %p533 = pneg %p306
        %p534 = pneg %p303
        %p535 = pneg %p332
        %p536 = pneg %p329
        %s537 = sand.u32 %s319, 1
        %s538 = scalar_lea.sflag [#allocation4], %s537
        %s539 = sand.u32 %s319, 1
        %s540 = smul.addr %s539, 128
        %s541 = scalar_lea.vmem [#allocation14], %s540
        %v543 = vld [vmem:[%s475] sm:$0xff]
        %v544 = vld [vmem:[%s475 + $0x8] sm:$0xff]
        %v545 = vld [vmem:[%s475 + $0x10] sm:$0xff]
        %v546 = vld [vmem:[%s475 + $0x18] sm:$0xff]
        %v547 = vld [vmem:[%s475 + $0x20] sm:$0xff]
        %v548 = vld [vmem:[%s475 + $0x28] sm:$0xff]
        %v549 = vld [vmem:[%s475 + $0x30] sm:$0xff]
        %v550 = vld [vmem:[%s475 + $0x38] sm:$0xff]
        %v551 = vld [vmem:[%s475 + $0x40] sm:$0xff]
        %v552 = vld [vmem:[%s475 + $0x48] sm:$0xff]
        %v553 = vld [vmem:[%s475 + $0x50] sm:$0xff]
        %v554 = vld [vmem:[%s475 + $0x58] sm:$0xff]
        %v555 = vld [vmem:[%s475 + $0x60] sm:$0xff]
        %v556 = vld [vmem:[%s475 + $0x68] sm:$0xff]
        %v557 = vld [vmem:[%s475 + $0x70] sm:$0xff]
        %v558 = vld [vmem:[%s475 + $0x78] sm:$0xff]
        %v559 = vld [vmem:[#allocation5] sm:$0x1]
        %v560 = vld [vmem:[#allocation7] sm:$0x1]
        %561 = vadd.xlane.f32.xlu0 %v543
        %v562 = vpop.xlane.xlu0 %561
        %563 = vadd.xlane.f32.xlu0 %v544
        %v564 = vpop.xlane.xlu0 %563
        %565 = vadd.xlane.f32.xlu0 %v545
        %v566 = vpop.xlane.xlu0 %565
        %567 = vadd.xlane.f32.xlu0 %v546
        %v568 = vpop.xlane.xlu0 %567
        %569 = vadd.xlane.f32.xlu0 %v547
        %v570 = vpop.xlane.xlu0 %569
        %571 = vadd.xlane.f32.xlu0 %v548
        %v572 = vpop.xlane.xlu0 %571
        %573 = vadd.xlane.f32.xlu0 %v549
        %v574 = vpop.xlane.xlu0 %573
        %575 = vadd.xlane.f32.xlu0 %v550
        %v576 = vpop.xlane.xlu0 %575
        %577 = vadd.xlane.f32.xlu0 %v551
        %v578 = vpop.xlane.xlu0 %577
        %579 = vadd.xlane.f32.xlu0 %v552
        %v580 = vpop.xlane.xlu0 %579
        %581 = vadd.xlane.f32.xlu0 %v553
        %v582 = vpop.xlane.xlu0 %581
        %583 = vadd.xlane.f32.xlu0 %v554
        %v584 = vpop.xlane.xlu0 %583
        %585 = vadd.xlane.f32.xlu0 %v555
        %v586 = vpop.xlane.xlu0 %585
        %587 = vadd.xlane.f32.xlu0 %v556
        %v588 = vpop.xlane.xlu0 %587
        %589 = vadd.xlane.f32.xlu0 %v557
        %v590 = vpop.xlane.xlu0 %589
        %591 = vadd.xlane.f32.xlu0 %v558
        %v592 = vpop.xlane.xlu0 %591
        %v593 = vrcp.pop 128.0
        %v594 = vmul.f32 %v562, %v593
        %v595 = vmul.f32 %v564, %v593
        %v596 = vmul.f32 %v566, %v593
        %v597 = vmul.f32 %v568, %v593
        %v598 = vmul.f32 %v570, %v593
        %v599 = vmul.f32 %v572, %v593
        %v600 = vmul.f32 %v574, %v593
        %v601 = vmul.f32 %v576, %v593
        %v602 = vmul.f32 %v578, %v593
        %v603 = vmul.f32 %v580, %v593
        %v604 = vmul.f32 %v582, %v593
        %v605 = vmul.f32 %v584, %v593
        %v606 = vmul.f32 %v586, %v593
        %v607 = vmul.f32 %v588, %v593
        %v608 = vmul.f32 %v590, %v593
        %v609 = vmul.f32 %v592, %v593
        %v610 = vsub.f32 %v543, %v594
        %v611 = vsub.f32 %v544, %v595
        %v612 = vsub.f32 %v545, %v596
        %v613 = vsub.f32 %v546, %v597
        %v614 = vsub.f32 %v547, %v598
        %v615 = vsub.f32 %v548, %v599
        %v616 = vsub.f32 %v549, %v600
        %v617 = vsub.f32 %v550, %v601
        %v618 = vsub.f32 %v551, %v602
        %v619 = vsub.f32 %v552, %v603
        %v620 = vsub.f32 %v553, %v604
        %v621 = vsub.f32 %v554, %v605
        %v622 = vsub.f32 %v555, %v606
        %v623 = vsub.f32 %v556, %v607
        %v624 = vsub.f32 %v557, %v608
        %v625 = vsub.f32 %v558, %v609
        %v626 = vmul.f32 %v610, %v610
        %v627 = vmul.f32 %v611, %v611
        %v628 = vmul.f32 %v612, %v612
        %v629 = vmul.f32 %v613, %v613
        %v630 = vmul.f32 %v614, %v614
        %v631 = vmul.f32 %v615, %v615
        %v632 = vmul.f32 %v616, %v616
        %v633 = vmul.f32 %v617, %v617
        %v634 = vmul.f32 %v618, %v618
        %v635 = vmul.f32 %v619, %v619
        %v636 = vmul.f32 %v620, %v620
        %v637 = vmul.f32 %v621, %v621
        %v638 = vmul.f32 %v622, %v622
        %v639 = vmul.f32 %v623, %v623
        %v640 = vmul.f32 %v624, %v624
        %v641 = vmul.f32 %v625, %v625
        %642 = vadd.xlane.f32.xlu0 %v626
        %v643 = vpop.xlane.xlu0 %642
        %644 = vadd.xlane.f32.xlu0 %v627
        %v645 = vpop.xlane.xlu0 %644
        %646 = vadd.xlane.f32.xlu0 %v628
        %v647 = vpop.xlane.xlu0 %646
        %648 = vadd.xlane.f32.xlu0 %v629
        %v649 = vpop.xlane.xlu0 %648
        %650 = vadd.xlane.f32.xlu0 %v630
        %v651 = vpop.xlane.xlu0 %650
        %652 = vadd.xlane.f32.xlu0 %v631
        %v653 = vpop.xlane.xlu0 %652
        %654 = vadd.xlane.f32.xlu0 %v632
        %v655 = vpop.xlane.xlu0 %654
        %656 = vadd.xlane.f32.xlu0 %v633
        %v657 = vpop.xlane.xlu0 %656
        %658 = vadd.xlane.f32.xlu0 %v634
        %v659 = vpop.xlane.xlu0 %658
        %660 = vadd.xlane.f32.xlu0 %v635
        %v661 = vpop.xlane.xlu0 %660
        %662 = vadd.xlane.f32.xlu0 %v636
        %v663 = vpop.xlane.xlu0 %662
        %664 = vadd.xlane.f32.xlu0 %v637
        %v665 = vpop.xlane.xlu0 %664
        %666 = vadd.xlane.f32.xlu0 %v638
        %v667 = vpop.xlane.xlu0 %666
        %668 = vadd.xlane.f32.xlu0 %v639
        %v669 = vpop.xlane.xlu0 %668
        %670 = vadd.xlane.f32.xlu0 %v640
        %v671 = vpop.xlane.xlu0 %670
        %672 = vadd.xlane.f32.xlu0 %v641
        %v673 = vpop.xlane.xlu0 %672
        %v674 = vmul.f32 %v643, %v593
        %v675 = vmul.f32 %v645, %v593
        %v676 = vmul.f32 %v647, %v593
        %v677 = vmul.f32 %v649, %v593
        %v678 = vmul.f32 %v651, %v593
        %v679 = vmul.f32 %v653, %v593
        %v680 = vmul.f32 %v655, %v593
        %v681 = vmul.f32 %v657, %v593
        %v682 = vmul.f32 %v659, %v593
        %v683 = vmul.f32 %v661, %v593
        %v684 = vmul.f32 %v663, %v593
        %v685 = vmul.f32 %v665, %v593
        %v686 = vmul.f32 %v667, %v593
        %v687 = vmul.f32 %v669, %v593
        %v688 = vmul.f32 %v671, %v593
        %v689 = vmul.f32 %v673, %v593
        %v690 = vadd.f32 %v674, 1e-05
        %v691 = vadd.f32 %v675, 1e-05
        %v692 = vadd.f32 %v676, 1e-05
        %v693 = vadd.f32 %v677, 1e-05
        %v694 = vadd.f32 %v678, 1e-05
        %v695 = vadd.f32 %v679, 1e-05
        %v696 = vadd.f32 %v680, 1e-05
        %v697 = vadd.f32 %v681, 1e-05
        %v698 = vadd.f32 %v682, 1e-05
        %v699 = vadd.f32 %v683, 1e-05
        %v700 = vadd.f32 %v684, 1e-05
        %v701 = vadd.f32 %v685, 1e-05
        %v702 = vadd.f32 %v686, 1e-05
        %v703 = vadd.f32 %v687, 1e-05
        %v704 = vadd.f32 %v688, 1e-05
        %v705 = vadd.f32 %v689, 1e-05
        %v706 = vrsqrt.pop %v690
        %v707 = vrsqrt.pop %v691
        %v708 = vrsqrt.pop %v692
        %v709 = vrsqrt.pop %v693
        %v710 = vrsqrt.pop %v694
        %v711 = vrsqrt.pop %v695
        %v712 = vrsqrt.pop %v696
        %v713 = vrsqrt.pop %v697
        %v714 = vrsqrt.pop %v698
        %v715 = vrsqrt.pop %v699
        %v716 = vrsqrt.pop %v700
        %v717 = vrsqrt.pop %v701
        %v718 = vrsqrt.pop %v702
        %v719 = vrsqrt.pop %v703
        %v720 = vrsqrt.pop %v704
        %v721 = vrsqrt.pop %v705
        %v722 = vmul.f32 %v610, %v706
        %v723 = vmul.f32 %v611, %v707
        %v724 = vmul.f32 %v612, %v708
        %v725 = vmul.f32 %v613, %v709
        %v726 = vmul.f32 %v614, %v710
        %v727 = vmul.f32 %v615, %v711
        %v728 = vmul.f32 %v616, %v712
        %v729 = vmul.f32 %v617, %v713
        %v730 = vmul.f32 %v618, %v714
        %v731 = vmul.f32 %v619, %v715
        %v732 = vmul.f32 %v620, %v716
        %v733 = vmul.f32 %v621, %v717
        %v734 = vmul.f32 %v622, %v718
        %v735 = vmul.f32 %v623, %v719
        %v736 = vmul.f32 %v624, %v720
        %v737 = vmul.f32 %v625, %v721
        %v739 = vlaneseq
        %v740 = vshrl.u32 %v739, 7
        %v741 = vsub.s32 0, %v740
        %v742 = vrot.slane %v559, %v741
        %v744 = vmul.f32 %v722, %v742
        %v745 = vmul.f32 %v723, %v742
        %v746 = vmul.f32 %v724, %v742
        %v747 = vmul.f32 %v725, %v742
        %v748 = vmul.f32 %v726, %v742
        %v749 = vmul.f32 %v727, %v742
        %v750 = vmul.f32 %v728, %v742
        %v751 = vmul.f32 %v729, %v742
        %v752 = vmul.f32 %v730, %v742
        %v753 = vmul.f32 %v731, %v742
        %v754 = vmul.f32 %v732, %v742
        %v755 = vmul.f32 %v733, %v742
        %v756 = vmul.f32 %v734, %v742
        %v757 = vmul.f32 %v735, %v742
        %v758 = vmul.f32 %v736, %v742
        %v759 = vmul.f32 %v737, %v742
        %v761 = vlaneseq
        %v762 = vshrl.u32 %v761, 7
        %v763 = vsub.s32 0, %v762
        %v764 = vrot.slane %v560, %v763
        %v766 = vadd.f32 %v744, %v764
        %v767 = vadd.f32 %v745, %v764
        %v768 = vadd.f32 %v746, %v764
        %v769 = vadd.f32 %v747, %v764
        %v770 = vadd.f32 %v748, %v764
        %v771 = vadd.f32 %v749, %v764
        %v772 = vadd.f32 %v750, %v764
        %v773 = vadd.f32 %v751, %v764
        %v774 = vadd.f32 %v752, %v764
        %v775 = vadd.f32 %v753, %v764
        %v776 = vadd.f32 %v754, %v764
        %v777 = vadd.f32 %v755, %v764
        %v778 = vadd.f32 %v756, %v764
        %v779 = vadd.f32 %v757, %v764
        %v780 = vadd.f32 %v758, %v764
        %v781 = vadd.f32 %v759, %v764
        %v782 = vpack.c.bf16 %v767, %v766
        %v783 = vpack.c.bf16 %v769, %v768
        %v784 = vpack.c.bf16 %v771, %v770
        %v785 = vpack.c.bf16 %v773, %v772
        %v786 = vpack.c.bf16 %v775, %v774
        %v787 = vpack.c.bf16 %v777, %v776
        %v788 = vpack.c.bf16 %v779, %v778
        %v789 = vpack.c.bf16 %v781, %v780
        %v790 = vld [vmem:[#allocation8] sm:$0xff]
        %v791 = vld [vmem:[#allocation8 + $0x8] sm:$0xf]
        %v792 = vld [vmem:[#allocation8 + $0xc] sm:$0xff]
        %v793 = vld [vmem:[#allocation8 + $0x14] sm:$0xf]
        %v794 = vld [vmem:[#allocation8 + $0x18] sm:$0xff]
        %v795 = vld [vmem:[#allocation8 + $0x20] sm:$0xf]
        %v796 = vld [vmem:[#allocation8 + $0x24] sm:$0xff]
        %v797 = vld [vmem:[#allocation8 + $0x2c] sm:$0xf]
        %v798 = vld [vmem:[#allocation8 + $0x30] sm:$0xff]
        %v799 = vld [vmem:[#allocation8 + $0x38] sm:$0xf]
        %v800 = vld [vmem:[#allocation8 + $0x3c] sm:$0xff]
        %v801 = vld [vmem:[#allocation8 + $0x44] sm:$0xf]
        %v802 = vld [vmem:[#allocation8 + $0x48] sm:$0xff]
        %v803 = vld [vmem:[#allocation8 + $0x50] sm:$0xf]
        %v804 = vld [vmem:[#allocation8 + $0x54] sm:$0xff]
        %v805 = vld [vmem:[#allocation8 + $0x5c] sm:$0xf]
        %v806 = vld [vmem:[#allocation8 + $0x60] sm:$0xff]
        %v807 = vld [vmem:[#allocation8 + $0x68] sm:$0xf]
        %v808 = vld [vmem:[#allocation8 + $0x6c] sm:$0xff]
        %v809 = vld [vmem:[#allocation8 + $0x74] sm:$0xf]
        %v810 = vld [vmem:[#allocation8 + $0x78] sm:$0xff]
        %v811 = vld [vmem:[#allocation8 + $0x80] sm:$0xf]
        %v812 = vld [vmem:[#allocation8 + $0x84] sm:$0xff]
        %v813 = vld [vmem:[#allocation8 + $0x8c] sm:$0xf]
        %v814 = vld [vmem:[#allocation8 + $0x90] sm:$0xff]
        %v815 = vld [vmem:[#allocation8 + $0x98] sm:$0xf]
        %v816 = vld [vmem:[#allocation8 + $0x9c] sm:$0xff]
        %v817 = vld [vmem:[#allocation8 + $0xa4] sm:$0xf]
        %v818 = vld [vmem:[#allocation8 + $0xa8] sm:$0xff]
        %v819 = vld [vmem:[#allocation8 + $0xb0] sm:$0xf]
        %v820 = vld [vmem:[#allocation8 + $0xb4] sm:$0xff]
        %v821 = vld [vmem:[#allocation8 + $0xbc] sm:$0xf]
        %v822 = vld [vmem:[%s4] sm:$0x7]
        %v824 = vlaneseq
        %v825 = vshrl.u32 %v824, 7
        %v826 = vsub.s32 0, %v825
        %v827 = vrot.slane %v822, %v826
        %v828 = vlaneseq
        %v829 = vshrl.u32 %v828, 7
        %v830 = vsub.s32 1, %v829
        %v831 = vrot.slane %v822, %v830
        %v832 = vlaneseq
        %v833 = vshrl.u32 %v832, 7
        %v834 = vsub.s32 2, %v833
        %v835 = vrot.slane %v822, %v834
        %v871 = vunpack.c.l.b16 %v790
        %v872 = vunpack.c.h.b16 %v790
        %v873 = vunpack.c.l.b16 %v791
        %v874 = vunpack.c.l.b16 %v792
        %v875 = vunpack.c.h.b16 %v792
        %v876 = vunpack.c.l.b16 %v793
        %v877 = vunpack.c.l.b16 %v794
        %v878 = vunpack.c.h.b16 %v794
        %v879 = vunpack.c.l.b16 %v795
        %v880 = vunpack.c.l.b16 %v796
        %v881 = vunpack.c.h.b16 %v796
        %v882 = vunpack.c.l.b16 %v797
        %v883 = vunpack.c.l.b16 %v798
        %v884 = vunpack.c.h.b16 %v798
        %v885 = vunpack.c.l.b16 %v799
        %v886 = vunpack.c.l.b16 %v800
        %v887 = vunpack.c.h.b16 %v800
        %v888 = vunpack.c.l.b16 %v801
        %v889 = vunpack.c.l.b16 %v802
        %v890 = vunpack.c.h.b16 %v802
        %v891 = vunpack.c.l.b16 %v803
        %v892 = vunpack.c.l.b16 %v804
        %v893 = vunpack.c.h.b16 %v804
        %v894 = vunpack.c.l.b16 %v805
        %v895 = vunpack.c.l.b16 %v806
        %v896 = vunpack.c.h.b16 %v806
        %v897 = vunpack.c.l.b16 %v807
        %v898 = vunpack.c.l.b16 %v808
        %v899 = vunpack.c.h.b16 %v808
        %v900 = vunpack.c.l.b16 %v809
        %v901 = vunpack.c.l.b16 %v810
        %v902 = vunpack.c.h.b16 %v810
        %v903 = vunpack.c.l.b16 %v811
        %v904 = vunpack.c.l.b16 %v812
        %v905 = vunpack.c.h.b16 %v812
        %v906 = vunpack.c.l.b16 %v813
        %v907 = vunpack.c.l.b16 %v814
        %v908 = vunpack.c.h.b16 %v814
        %v909 = vunpack.c.l.b16 %v815
        %v910 = vunpack.c.l.b16 %v816
        %v911 = vunpack.c.h.b16 %v816
        %v912 = vunpack.c.l.b16 %v817
        %v913 = vunpack.c.l.b16 %v818
        %v914 = vunpack.c.h.b16 %v818
        %v915 = vunpack.c.l.b16 %v819
        %v916 = vunpack.c.l.b16 %v820
        %v917 = vunpack.c.h.b16 %v820
        %v918 = vunpack.c.l.b16 %v821
        %v919 = vpack.c.b16 %v874, %v871
        %v920 = vpack.c.b16 %v875, %v872
        %v921 = vpack.c.b16 %v876, %v873
        %v922 = vpack.c.b16 %v880, %v877
        %v923 = vpack.c.b16 %v881, %v878
        %v924 = vpack.c.b16 %v882, %v879
        %v925 = vpack.c.b16 %v886, %v883
        %v926 = vpack.c.b16 %v887, %v884
        %v927 = vpack.c.b16 %v888, %v885
        %v928 = vpack.c.b16 %v892, %v889
        %v929 = vpack.c.b16 %v893, %v890
        %v930 = vpack.c.b16 %v894, %v891
        %v931 = vpack.c.b16 %v898, %v895
        %v932 = vpack.c.b16 %v899, %v896
        %v933 = vpack.c.b16 %v900, %v897
        %v934 = vpack.c.b16 %v904, %v901
        %v935 = vpack.c.b16 %v905, %v902
        %v936 = vpack.c.b16 %v906, %v903
        %v937 = vpack.c.b16 %v910, %v907
        %v938 = vpack.c.b16 %v911, %v908
        %v939 = vpack.c.b16 %v912, %v909
        %v940 = vpack.c.b16 %v916, %v913
        %v941 = vpack.c.b16 %v917, %v914
        %v942 = vpack.c.b16 %v918, %v915
        %967 = vmatprep.subr.bf16.mxu0 %v920
        %968 = vmatpush1.bf16.msra.mxu0 %v919
        %969 = vmatprep.subr.bf16.mxu0 %v923
        %970 = vmatpush1.bf16.msra.mxu0 %v922
        %971 = vmatprep.subr.bf16.mxu0 %v926
        %972 = vmatpush1.bf16.msra.mxu0 %v925
        %973 = vmatprep.subr.bf16.mxu0 %v929
        %974 = vmatpush1.bf16.msra.mxu0 %v928
        %975 = vmatprep.subr.bf16.mxu0 %v932
        %976 = vmatpush1.bf16.msra.mxu0 %v931
        %977 = vmatprep.subr.bf16.mxu0 %v935
        %978 = vmatpush1.bf16.msra.mxu0 %v934
        %979 = vmatprep.subr.bf16.mxu0 %v938
        %980 = vmatpush1.bf16.msra.mxu0 %v937
        %981 = vmatprep.subr.bf16.mxu0 %v941
        %982 = vmatpush1.bf16.msra.mxu0 %v940
        %983 = vmatprep.subr.bf16.mxu0 0
        %984 = vmatpush1.bf16.msra.mxu0 0
        %985 = vmatprep.subr.bf16.mxu0 0
        %986 = vmatpush1.bf16.msra.mxu0 0
        %987 = vmatprep.subr.bf16.mxu0 0
        %988 = vmatpush1.bf16.msra.mxu0 0
        %989 = vmatprep.subr.bf16.mxu0 0
        %990 = vmatpush1.bf16.msra.mxu0 0
        %991 = vmatprep.subr.bf16.mxu0 0
        %992 = vmatpush1.bf16.msra.mxu0 0
        %993 = vmatprep.subr.bf16.mxu0 0
        %994 = vmatpush1.bf16.msra.mxu0 0
        %995 = vmatprep.subr.bf16.mxu0 0
        %996 = vmatpush1.bf16.msra.mxu0 0
        %997 = vmatprep.subr.bf16.mxu0 0
        %998 = vmatpush1.bf16.msra.mxu0 0
        %999 = vmatprep.mubr.bf16.mxu0 0
        %1000 = vmatmul.mubr.bf16.gmra.mrb[0].mxu0 %v782
        %v1001 = vpop.f32.mrb[0].mxu0
        %v1002 = vadd.f32 %v827, %v1001
        %v1003 = vpop.f32.mrb[0].mxu0
        %v1004 = vadd.f32 %v831, %v1003
        %v1005 = vpop.f32.mrb[0].mxu0
        %v1006 = vadd.f32 %v827, %v1005
        %v1007 = vpop.f32.mrb[0].mxu0
        %v1008 = vadd.f32 %v831, %v1007
        %1009 = vmatprep.mubr.bf16.mxu0 0
        %1010 = vmatmul.mubr.bf16.gmra.mrb[0].mxu0 %v783
        %v1011 = vpop.f32.mrb[0].mxu0
        %v1012 = vadd.f32 %v827, %v1011
        %v1013 = vpop.f32.mrb[0].mxu0
        %v1014 = vadd.f32 %v831, %v1013
        %v1015 = vpop.f32.mrb[0].mxu0
        %v1016 = vadd.f32 %v827, %v1015
        %v1017 = vpop.f32.mrb[0].mxu0
        %v1018 = vadd.f32 %v831, %v1017
        %1019 = vmatprep.mubr.bf16.mxu0 0
        %1020 = vmatmul.mubr.bf16.gmra.mrb[0].mxu0 %v784
        %v1021 = vpop.f32.mrb[0].mxu0
        %v1022 = vadd.f32 %v827, %v1021
        %v1023 = vpop.f32.mrb[0].mxu0
        %v1024 = vadd.f32 %v831, %v1023
        %v1025 = vpop.f32.mrb[0].mxu0
        %v1026 = vadd.f32 %v827, %v1025
        %v1027 = vpop.f32.mrb[0].mxu0
        %v1028 = vadd.f32 %v831, %v1027
        %1029 = vmatprep.mubr.bf16.mxu0 0
        %1030 = vmatmul.mubr.bf16.gmra.mrb[0].mxu0 %v785
        %v1031 = vpop.f32.mrb[0].mxu0
        %v1032 = vadd.f32 %v827, %v1031
        %v1033 = vpop.f32.mrb[0].mxu0
        %v1034 = vadd.f32 %v831, %v1033
        %v1035 = vpop.f32.mrb[0].mxu0
        %v1036 = vadd.f32 %v827, %v1035
        %v1037 = vpop.f32.mrb[0].mxu0
        %v1038 = vadd.f32 %v831, %v1037
        %1039 = vmatprep.mubr.bf16.mxu0 0
        %1040 = vmatmul.mubr.bf16.gmra.mrb[0].mxu0 %v786
        %v1041 = vpop.f32.mrb[0].mxu0
        %v1042 = vadd.f32 %v827, %v1041
        %v1043 = vpop.f32.mrb[0].mxu0
        %v1044 = vadd.f32 %v831, %v1043
        %v1045 = vpop.f32.mrb[0].mxu0
        %v1046 = vadd.f32 %v827, %v1045
        %v1047 = vpop.f32.mrb[0].mxu0
        %v1048 = vadd.f32 %v831, %v1047
        %1049 = vmatprep.mubr.bf16.mxu0 0
        %1050 = vmatmul.mubr.bf16.gmra.mrb[0].mxu0 %v787
        %v1051 = vpop.f32.mrb[0].mxu0
        %v1052 = vadd.f32 %v827, %v1051
        %v1053 = vpop.f32.mrb[0].mxu0
        %v1054 = vadd.f32 %v831, %v1053
        %v1055 = vpop.f32.mrb[0].mxu0
        %v1056 = vadd.f32 %v827, %v1055
        %v1057 = vpop.f32.mrb[0].mxu0
        %v1058 = vadd.f32 %v831, %v1057
        %1059 = vmatprep.mubr.bf16.mxu0 0
        %1060 = vmatmul.mubr.bf16.gmra.mrb[0].mxu0 %v788
        %v1061 = vpop.f32.mrb[0].mxu0
        %v1062 = vadd.f32 %v827, %v1061
        %v1063 = vpop.f32.mrb[0].mxu0
        %v1064 = vadd.f32 %v831, %v1063
        %v1065 = vpop.f32.mrb[0].mxu0
        %v1066 = vadd.f32 %v827, %v1065
        %v1067 = vpop.f32.mrb[0].mxu0
        %v1068 = vadd.f32 %v831, %v1067
        %1069 = vmatprep.mubr.bf16.mxu0 0
        %1070 = vmatmul.mubr.bf16.gmra.mrb[0].mxu0 %v789
        %v1071 = vpop.f32.mrb[0].mxu0
        %v1072 = vadd.f32 %v827, %v1071
        %v1073 = vpop.f32.mrb[0].mxu0
        %v1074 = vadd.f32 %v831, %v1073
        %v1075 = vpop.f32.mrb[0].mxu0
        %v1076 = vadd.f32 %v827, %v1075
        %v1077 = vpop.f32.mrb[0].mxu0
        %v1078 = vadd.f32 %v831, %v1077
        %1079 = vdwg.mxu0
        %1080 = vmatprep.subr.bf16.mxu0 0
        %1081 = vmatpush1.bf16.msra.mxu0 %v921
        %1082 = vmatprep.subr.bf16.mxu0 0
        %1083 = vmatpush1.bf16.msra.mxu0 %v924
        %1084 = vmatprep.subr.bf16.mxu0 0
        %1085 = vmatpush1.bf16.msra.mxu0 %v927
        %1086 = vmatprep.subr.bf16.mxu0 0
        %1087 = vmatpush1.bf16.msra.mxu0 %v930
        %1088 = vmatprep.subr.bf16.mxu0 0
        %1089 = vmatpush1.bf16.msra.mxu0 %v933
        %1090 = vmatprep.subr.bf16.mxu0 0
        %1091 = vmatpush1.bf16.msra.mxu0 %v936
        %1092 = vmatprep.subr.bf16.mxu0 0
        %1093 = vmatpush1.bf16.msra.mxu0 %v939
        %1094 = vmatprep.subr.bf16.mxu0 0
        %1095 = vmatpush1.bf16.msra.mxu0 %v942
        %1096 = vmatprep.subr.bf16.mxu0 0
        %1097 = vmatpush1.bf16.msra.mxu0 0
        %1098 = vmatprep.subr.bf16.mxu0 0
        %1099 = vmatpush1.bf16.msra.mxu0 0
        %1100 = vmatprep.subr.bf16.mxu0 0
        %1101 = vmatpush1.bf16.msra.mxu0 0
        %1102 = vmatprep.subr.bf16.mxu0 0
        %1103 = vmatpush1.bf16.msra.mxu0 0
        %1104 = vmatprep.subr.bf16.mxu0 0
        %1105 = vmatpush1.bf16.msra.mxu0 0
        %1106 = vmatprep.subr.bf16.mxu0 0
        %1107 = vmatpush1.bf16.msra.mxu0 0
        %1108 = vmatprep.subr.bf16.mxu0 0
        %1109 = vmatpush1.bf16.msra.mxu0 0
        %1110 = vmatprep.subr.bf16.mxu0 0
        %1111 = vmatpush1.bf16.msra.mxu0 0
        %1112 = vmatprep.mubr.bf16.mxu0 0
        %1113 = vmatmul.mubr.bf16.gmra.mrb[0].mxu0 %v782
        %v1114 = vpop.f32.mrb[0].mxu0
        %v1115 = vadd.f32 %v835, %v1114
        %v1116 = vpop.f32.mrb[0].mxu0
        %v1117 = vpop.f32.mrb[0].mxu0
        %v1118 = vadd.f32 %v835, %v1117
        %v1119 = vpop.f32.mrb[0].mxu0
        %1120 = vmatprep.mubr.bf16.mxu0 0
        %1121 = vmatmul.mubr.bf16.gmra.mrb[0].mxu0 %v783
        %v1122 = vpop.f32.mrb[0].mxu0
        %v1123 = vadd.f32 %v835, %v1122
        %v1124 = vpop.f32.mrb[0].mxu0
        %v1125 = vpop.f32.mrb[0].mxu0
        %v1126 = vadd.f32 %v835, %v1125
        %v1127 = vpop.f32.mrb[0].mxu0
        %1128 = vmatprep.mubr.bf16.mxu0 0
        %1129 = vmatmul.mubr.bf16.gmra.mrb[0].mxu0 %v784
        %v1130 = vpop.f32.mrb[0].mxu0
        %v1131 = vadd.f32 %v835, %v1130
        %v1132 = vpop.f32.mrb[0].mxu0
        %v1133 = vpop.f32.mrb[0].mxu0
        %v1134 = vadd.f32 %v835, %v1133
        %v1135 = vpop.f32.mrb[0].mxu0
        %1136 = vmatprep.mubr.bf16.mxu0 0
        %1137 = vmatmul.mubr.bf16.gmra.mrb[0].mxu0 %v785
        %v1138 = vpop.f32.mrb[0].mxu0
        %v1139 = vadd.f32 %v835, %v1138
        %v1140 = vpop.f32.mrb[0].mxu0
        %v1141 = vpop.f32.mrb[0].mxu0
        %v1142 = vadd.f32 %v835, %v1141
        %v1143 = vpop.f32.mrb[0].mxu0
        %1144 = vmatprep.mubr.bf16.mxu0 0
        %1145 = vmatmul.mubr.bf16.gmra.mrb[0].mxu0 %v786
        %v1146 = vpop.f32.mrb[0].mxu0
        %v1147 = vadd.f32 %v835, %v1146
        %v1148 = vpop.f32.mrb[0].mxu0
        %v1149 = vpop.f32.mrb[0].mxu0
        %v1150 = vadd.f32 %v835, %v1149
        %v1151 = vpop.f32.mrb[0].mxu0
        %1152 = vmatprep.mubr.bf16.mxu0 0
        %1153 = vmatmul.mubr.bf16.gmra.mrb[0].mxu0 %v787
        %v1154 = vpop.f32.mrb[0].mxu0
        %v1155 = vadd.f32 %v835, %v1154
        %v1156 = vpop.f32.mrb[0].mxu0
        %v1157 = vpop.f32.mrb[0].mxu0
        %v1158 = vadd.f32 %v835, %v1157
        %v1159 = vpop.f32.mrb[0].mxu0
        %1160 = vmatprep.mubr.bf16.mxu0 0
        %1161 = vmatmul.mubr.bf16.gmra.mrb[0].mxu0 %v788
        %v1162 = vpop.f32.mrb[0].mxu0
        %v1163 = vadd.f32 %v835, %v1162
        %v1164 = vpop.f32.mrb[0].mxu0
        %v1165 = vpop.f32.mrb[0].mxu0
        %v1166 = vadd.f32 %v835, %v1165
        %v1167 = vpop.f32.mrb[0].mxu0
        %1168 = vmatprep.mubr.bf16.mxu0 0
        %1169 = vmatmul.mubr.bf16.gmra.mrb[0].mxu0 %v789
        %v1170 = vpop.f32.mrb[0].mxu0
        %v1171 = vadd.f32 %v835, %v1170
        %v1172 = vpop.f32.mrb[0].mxu0
        %v1173 = vpop.f32.mrb[0].mxu0
        %v1174 = vadd.f32 %v835, %v1173
        %v1175 = vpop.f32.mrb[0].mxu0
        %1176 = vdwg.mxu0
        %v1177 = vpack.c.bf16 %v1006, %v1002
        %v1178 = vpack.c.bf16 %v1008, %v1004
        %v1179 = vpack.c.bf16 %v1118, %v1115
        %v1180 = vpack.c.bf16 %v1016, %v1012
        %v1181 = vpack.c.bf16 %v1018, %v1014
        %v1182 = vpack.c.bf16 %v1126, %v1123
        %v1183 = vpack.c.bf16 %v1026, %v1022
        %v1184 = vpack.c.bf16 %v1028, %v1024
        %v1185 = vpack.c.bf16 %v1134, %v1131
        %v1186 = vpack.c.bf16 %v1036, %v1032
        %v1187 = vpack.c.bf16 %v1038, %v1034
        %v1188 = vpack.c.bf16 %v1142, %v1139
        %v1189 = vpack.c.bf16 %v1046, %v1042
        %v1190 = vpack.c.bf16 %v1048, %v1044
        %v1191 = vpack.c.bf16 %v1150, %v1147
        %v1192 = vpack.c.bf16 %v1056, %v1052
        %v1193 = vpack.c.bf16 %v1058, %v1054
        %v1194 = vpack.c.bf16 %v1158, %v1155
        %v1195 = vpack.c.bf16 %v1066, %v1062
        %v1196 = vpack.c.bf16 %v1068, %v1064
        %v1197 = vpack.c.bf16 %v1166, %v1163
        %v1198 = vpack.c.bf16 %v1076, %v1072
        %v1199 = vpack.c.bf16 %v1078, %v1074
        %v1200 = vpack.c.bf16 %v1174, %v1171
        %1209 = vrot.lane.b32.xlu0 %v1177, 96
        %v1210 = vpop.permute.xlu0 %1209
        %1211 = vrot.lane.b32.xlu0 %v1180, 96
        %v1212 = vpop.permute.xlu0 %1211
        %1213 = vrot.lane.b32.xlu0 %v1183, 96
        %v1214 = vpop.permute.xlu0 %1213
        %1215 = vrot.lane.b32.xlu0 %v1186, 96
        %v1216 = vpop.permute.xlu0 %1215
        %1217 = vrot.lane.b32.xlu0 %v1189, 96
        %v1218 = vpop.permute.xlu0 %1217
        %1219 = vrot.lane.b32.xlu0 %v1192, 96
        %v1220 = vpop.permute.xlu0 %1219
        %1221 = vrot.lane.b32.xlu0 %v1195, 96
        %v1222 = vpop.permute.xlu0 %1221
        %1223 = vrot.lane.b32.xlu0 %v1198, 96
        %v1224 = vpop.permute.xlu0 %1223
        %1225 = vrot.lane.b32.xlu0 %v1177, 64
        %v1226 = vpop.permute.xlu0 %1225
        %1227 = vrot.lane.b32.xlu0 %v1180, 64
        %v1228 = vpop.permute.xlu0 %1227
        %1229 = vrot.lane.b32.xlu0 %v1183, 64
        %v1230 = vpop.permute.xlu0 %1229
        %1231 = vrot.lane.b32.xlu0 %v1186, 64
        %v1232 = vpop.permute.xlu0 %1231
        %1233 = vrot.lane.b32.xlu0 %v1189, 64
        %v1234 = vpop.permute.xlu0 %1233
        %1235 = vrot.lane.b32.xlu0 %v1192, 64
        %v1236 = vpop.permute.xlu0 %1235
        %1237 = vrot.lane.b32.xlu0 %v1195, 64
        %v1238 = vpop.permute.xlu0 %1237
        %1239 = vrot.lane.b32.xlu0 %v1198, 64
        %v1240 = vpop.permute.xlu0 %1239
        %1241 = vrot.lane.b32.xlu0 %v1177, 32
        %v1242 = vpop.permute.xlu0 %1241
        %1243 = vrot.lane.b32.xlu0 %v1180, 32
        %v1244 = vpop.permute.xlu0 %1243
        %1245 = vrot.lane.b32.xlu0 %v1183, 32
        %v1246 = vpop.permute.xlu0 %1245
        %1247 = vrot.lane.b32.xlu0 %v1186, 32
        %v1248 = vpop.permute.xlu0 %1247
        %1249 = vrot.lane.b32.xlu0 %v1189, 32
        %v1250 = vpop.permute.xlu0 %1249
        %1251 = vrot.lane.b32.xlu0 %v1192, 32
        %v1252 = vpop.permute.xlu0 %1251
        %1253 = vrot.lane.b32.xlu0 %v1195, 32
        %v1254 = vpop.permute.xlu0 %1253
        %1255 = vrot.lane.b32.xlu0 %v1198, 32
        %v1256 = vpop.permute.xlu0 %1255
        %1265 = vrot.lane.b32.xlu0 %v1178, 96
        %v1266 = vpop.permute.xlu0 %1265
        %1267 = vrot.lane.b32.xlu0 %v1181, 96
        %v1268 = vpop.permute.xlu0 %1267
        %1269 = vrot.lane.b32.xlu0 %v1184, 96
        %v1270 = vpop.permute.xlu0 %1269
        %1271 = vrot.lane.b32.xlu0 %v1187, 96
        %v1272 = vpop.permute.xlu0 %1271
        %1273 = vrot.lane.b32.xlu0 %v1190, 96
        %v1274 = vpop.permute.xlu0 %1273
        %1275 = vrot.lane.b32.xlu0 %v1193, 96
        %v1276 = vpop.permute.xlu0 %1275
        %1277 = vrot.lane.b32.xlu0 %v1196, 96
        %v1278 = vpop.permute.xlu0 %1277
        %1279 = vrot.lane.b32.xlu0 %v1199, 96
        %v1280 = vpop.permute.xlu0 %1279
        %1281 = vrot.lane.b32.xlu0 %v1178, 64
        %v1282 = vpop.permute.xlu0 %1281
        %1283 = vrot.lane.b32.xlu0 %v1181, 64
        %v1284 = vpop.permute.xlu0 %1283
        %1285 = vrot.lane.b32.xlu0 %v1184, 64
        %v1286 = vpop.permute.xlu0 %1285
        %1287 = vrot.lane.b32.xlu0 %v1187, 64
        %v1288 = vpop.permute.xlu0 %1287
        %1289 = vrot.lane.b32.xlu0 %v1190, 64
        %v1290 = vpop.permute.xlu0 %1289
        %1291 = vrot.lane.b32.xlu0 %v1193, 64
        %v1292 = vpop.permute.xlu0 %1291
        %1293 = vrot.lane.b32.xlu0 %v1196, 64
        %v1294 = vpop.permute.xlu0 %1293
        %1295 = vrot.lane.b32.xlu0 %v1199, 64
        %v1296 = vpop.permute.xlu0 %1295
        %1297 = vrot.lane.b32.xlu0 %v1178, 32
        %v1298 = vpop.permute.xlu0 %1297
        %1299 = vrot.lane.b32.xlu0 %v1181, 32
        %v1300 = vpop.permute.xlu0 %1299
        %1301 = vrot.lane.b32.xlu0 %v1184, 32
        %v1302 = vpop.permute.xlu0 %1301
        %1303 = vrot.lane.b32.xlu0 %v1187, 32
        %v1304 = vpop.permute.xlu0 %1303
        %1305 = vrot.lane.b32.xlu0 %v1190, 32
        %v1306 = vpop.permute.xlu0 %1305
        %1307 = vrot.lane.b32.xlu0 %v1193, 32
        %v1308 = vpop.permute.xlu0 %1307
        %1309 = vrot.lane.b32.xlu0 %v1196, 32
        %v1310 = vpop.permute.xlu0 %1309
        %1311 = vrot.lane.b32.xlu0 %v1199, 32
        %v1312 = vpop.permute.xlu0 %1311
        %1321 = vrot.lane.b32.xlu0 %v1179, 96
        %v1322 = vpop.permute.xlu0 %1321
        %1323 = vrot.lane.b32.xlu0 %v1182, 96
        %v1324 = vpop.permute.xlu0 %1323
        %1325 = vrot.lane.b32.xlu0 %v1185, 96
        %v1326 = vpop.permute.xlu0 %1325
        %1327 = vrot.lane.b32.xlu0 %v1188, 96
        %v1328 = vpop.permute.xlu0 %1327
        %1329 = vrot.lane.b32.xlu0 %v1191, 96
        %v1330 = vpop.permute.xlu0 %1329
        %1331 = vrot.lane.b32.xlu0 %v1194, 96
        %v1332 = vpop.permute.xlu0 %1331
        %1333 = vrot.lane.b32.xlu0 %v1197, 96
        %v1334 = vpop.permute.xlu0 %1333
        %1335 = vrot.lane.b32.xlu0 %v1200, 96
        %v1336 = vpop.permute.xlu0 %1335
        %1345 = vrot.lane.b32.xlu0 %v1179, 64
        %v1346 = vpop.permute.xlu0 %1345
        %1347 = vrot.lane.b32.xlu0 %v1182, 64
        %v1348 = vpop.permute.xlu0 %1347
        %1349 = vrot.lane.b32.xlu0 %v1185, 64
        %v1350 = vpop.permute.xlu0 %1349
        %1351 = vrot.lane.b32.xlu0 %v1188, 64
        %v1352 = vpop.permute.xlu0 %1351
        %1353 = vrot.lane.b32.xlu0 %v1191, 64
        %v1354 = vpop.permute.xlu0 %1353
        %1355 = vrot.lane.b32.xlu0 %v1194, 64
        %v1356 = vpop.permute.xlu0 %1355
        %1357 = vrot.lane.b32.xlu0 %v1197, 64
        %v1358 = vpop.permute.xlu0 %1357
        %1359 = vrot.lane.b32.xlu0 %v1200, 64
        %v1360 = vpop.permute.xlu0 %1359
        %1369 = vrot.lane.b32.xlu0 %v1179, 32
        %v1370 = vpop.permute.xlu0 %1369
        %1371 = vrot.lane.b32.xlu0 %v1182, 32
        %v1372 = vpop.permute.xlu0 %1371
        %1373 = vrot.lane.b32.xlu0 %v1185, 32
        %v1374 = vpop.permute.xlu0 %1373
        %1375 = vrot.lane.b32.xlu0 %v1188, 32
        %v1376 = vpop.permute.xlu0 %1375
        %1377 = vrot.lane.b32.xlu0 %v1191, 32
        %v1378 = vpop.permute.xlu0 %1377
        %1379 = vrot.lane.b32.xlu0 %v1194, 32
        %v1380 = vpop.permute.xlu0 %1379
        %1381 = vrot.lane.b32.xlu0 %v1197, 32
        %v1382 = vpop.permute.xlu0 %1381
        %1383 = vrot.lane.b32.xlu0 %v1200, 32
        %v1384 = vpop.permute.xlu0 %1383
        %vm1393 = vcmask 261120
        %v1395 = vsel %vm1393, %v1177, 0
        %v1398 = vsel %vm1393, %v1180, 0
        %v1401 = vsel %vm1393, %v1183, 0
        %v1404 = vsel %vm1393, %v1186, 0
        %v1407 = vsel %vm1393, %v1189, 0
        %v1410 = vsel %vm1393, %v1192, 0
        %v1413 = vsel %vm1393, %v1195, 0
        %v1416 = vsel %vm1393, %v1198, 0
        %v1419 = vsel %vm1393, %v1178, 0
        %v1422 = vsel %vm1393, %v1181, 0
        %v1425 = vsel %vm1393, %v1184, 0
        %v1428 = vsel %vm1393, %v1187, 0
        %v1431 = vsel %vm1393, %v1190, 0
        %v1434 = vsel %vm1393, %v1193, 0
        %v1437 = vsel %vm1393, %v1196, 0
        %v1440 = vsel %vm1393, %v1199, 0
        %1442 = vmatprep.subr.bf16.mxu0 0
        %1443 = vmatpush1.bf16.xpose.msra.mxu0 %v1419
        %1444 = vmatprep.subr.bf16.mxu0 0
        %1445 = vmatpush1.bf16.xpose.msra.mxu0 %v1422
        %1446 = vmatprep.subr.bf16.mxu0 0
        %1447 = vmatpush1.bf16.xpose.msra.mxu0 %v1425
        %1448 = vmatprep.subr.bf16.mxu0 0
        %1449 = vmatpush1.bf16.xpose.msra.mxu0 %v1428
        %1450 = vmatprep.subr.bf16.mxu0 0
        %1451 = vmatpush1.bf16.xpose.msra.mxu0 %v1431
        %1452 = vmatprep.subr.bf16.mxu0 0
        %1453 = vmatpush1.bf16.xpose.msra.mxu0 %v1434
        %1454 = vmatprep.subr.bf16.mxu0 0
        %1455 = vmatpush1.bf16.xpose.msra.mxu0 %v1437
        %1456 = vmatprep.subr.bf16.mxu0 0
        %1457 = vmatpush1.bf16.xpose.msra.mxu0 %v1440
        %1458 = vmatprep.subr.bf16.mxu0 0
        %1459 = vmatpush1.bf16.xpose.msra.mxu0 0
        %1460 = vmatprep.subr.bf16.mxu0 0
        %1461 = vmatpush1.bf16.xpose.msra.mxu0 0
        %1462 = vmatprep.subr.bf16.mxu0 0
        %1463 = vmatpush1.bf16.xpose.msra.mxu0 0
        %1464 = vmatprep.subr.bf16.mxu0 0
        %1465 = vmatpush1.bf16.xpose.msra.mxu0 0
        %1466 = vmatprep.subr.bf16.mxu0 0
        %1467 = vmatpush1.bf16.xpose.msra.mxu0 0
        %1468 = vmatprep.subr.bf16.mxu0 0
        %1469 = vmatpush1.bf16.xpose.msra.mxu0 0
        %1470 = vmatprep.subr.bf16.mxu0 0
        %1471 = vmatpush1.bf16.xpose.msra.mxu0 0
        %1472 = vmatprep.subr.bf16.mxu0 0
        %1473 = vmatpush1.bf16.xpose.msra.mxu0 0
        %1474 = vmatprep.mubr.bf16.mxu0 0
        %1475 = vmatmul.mubr.bf16.gmra.mrb[0].mxu0 %v1395
        %v1476 = vpop.f32.mrb[0].mxu0
        %v1477 = vadd.f32 0.0, %v1476
        %v1478 = vpop.f32.mrb[0].mxu0
        %v1479 = vpop.f32.mrb[0].mxu0
        %v1480 = vadd.f32 0.0, %v1479
        %v1481 = vpop.f32.mrb[0].mxu0
        %1482 = vmatprep.mubr.bf16.mxu0 0
        %1483 = vmatmul.mubr.bf16.gmra.mrb[0].mxu0 %v1398
        %v1484 = vpop.f32.mrb[0].mxu0
        %v1485 = vadd.f32 0.0, %v1484
        %v1486 = vpop.f32.mrb[0].mxu0
        %v1487 = vpop.f32.mrb[0].mxu0
        %v1488 = vadd.f32 0.0, %v1487
        %v1489 = vpop.f32.mrb[0].mxu0
        %1490 = vmatprep.mubr.bf16.mxu0 0
        %1491 = vmatmul.mubr.bf16.gmra.mrb[0].mxu0 %v1401
        %v1492 = vpop.f32.mrb[0].mxu0
        %v1493 = vadd.f32 0.0, %v1492
        %v1494 = vpop.f32.mrb[0].mxu0
        %v1495 = vpop.f32.mrb[0].mxu0
        %v1496 = vadd.f32 0.0, %v1495
        %v1497 = vpop.f32.mrb[0].mxu0
        %1498 = vmatprep.mubr.bf16.mxu0 0
        %1499 = vmatmul.mubr.bf16.gmra.mrb[0].mxu0 %v1404
        %v1500 = vpop.f32.mrb[0].mxu0
        %v1501 = vadd.f32 0.0, %v1500
        %v1502 = vpop.f32.mrb[0].mxu0
        %v1503 = vpop.f32.mrb[0].mxu0
        %v1504 = vadd.f32 0.0, %v1503
        %v1505 = vpop.f32.mrb[0].mxu0
        %1506 = vmatprep.mubr.bf16.mxu0 0
        %1507 = vmatmul.mubr.bf16.gmra.mrb[0].mxu0 %v1407
        %v1508 = vpop.f32.mrb[0].mxu0
        %v1509 = vadd.f32 0.0, %v1508
        %v1510 = vpop.f32.mrb[0].mxu0
        %v1511 = vpop.f32.mrb[0].mxu0
        %v1512 = vadd.f32 0.0, %v1511
        %v1513 = vpop.f32.mrb[0].mxu0
        %1514 = vmatprep.mubr.bf16.mxu0 0
        %1515 = vmatmul.mubr.bf16.gmra.mrb[0].mxu0 %v1410
        %v1516 = vpop.f32.mrb[0].mxu0
        %v1517 = vadd.f32 0.0, %v1516
        %v1518 = vpop.f32.mrb[0].mxu0
        %v1519 = vpop.f32.mrb[0].mxu0
        %v1520 = vadd.f32 0.0, %v1519
        %v1521 = vpop.f32.mrb[0].mxu0
        %1522 = vmatprep.mubr.bf16.mxu0 0
        %1523 = vmatmul.mubr.bf16.gmra.mrb[0].mxu0 %v1413
        %v1524 = vpop.f32.mrb[0].mxu0
        %v1525 = vadd.f32 0.0, %v1524
        %v1526 = vpop.f32.mrb[0].mxu0
        %v1527 = vpop.f32.mrb[0].mxu0
        %v1528 = vadd.f32 0.0, %v1527
        %v1529 = vpop.f32.mrb[0].mxu0
        %1530 = vmatprep.mubr.bf16.mxu0 0
        %1531 = vmatmul.mubr.bf16.gmra.mrb[0].mxu0 %v1416
        %v1532 = vpop.f32.mrb[0].mxu0
        %v1533 = vadd.f32 0.0, %v1532
        %v1534 = vpop.f32.mrb[0].mxu0
        %v1535 = vpop.f32.mrb[0].mxu0
        %v1536 = vadd.f32 0.0, %v1535
        %v1537 = vpop.f32.mrb[0].mxu0
        %1538 = vdwg.mxu0
        %v1540 = vsel %vm1393, %v1210, 0
        %v1543 = vsel %vm1393, %v1212, 0
        %v1546 = vsel %vm1393, %v1214, 0
        %v1549 = vsel %vm1393, %v1216, 0
        %v1552 = vsel %vm1393, %v1218, 0
        %v1555 = vsel %vm1393, %v1220, 0
        %v1558 = vsel %vm1393, %v1222, 0
        %v1561 = vsel %vm1393, %v1224, 0
        %v1564 = vsel %vm1393, %v1266, 0
        %v1567 = vsel %vm1393, %v1268, 0
        %v1570 = vsel %vm1393, %v1270, 0
        %v1573 = vsel %vm1393, %v1272, 0
        %v1576 = vsel %vm1393, %v1274, 0
        %v1579 = vsel %vm1393, %v1276, 0
        %v1582 = vsel %vm1393, %v1278, 0
        %v1585 = vsel %vm1393, %v1280, 0
        %1587 = vmatprep.subr.bf16.mxu0 0
        %1588 = vmatpush1.bf16.xpose.msra.mxu0 %v1564
        %1589 = vmatprep.subr.bf16.mxu0 0
        %1590 = vmatpush1.bf16.xpose.msra.mxu0 %v1567
        %1591 = vmatprep.subr.bf16.mxu0 0
        %1592 = vmatpush1.bf16.xpose.msra.mxu0 %v1570
        %1593 = vmatprep.subr.bf16.mxu0 0
        %1594 = vmatpush1.bf16.xpose.msra.mxu0 %v1573
        %1595 = vmatprep.subr.bf16.mxu0 0
        %1596 = vmatpush1.bf16.xpose.msra.mxu0 %v1576
        %1597 = vmatprep.subr.bf16.mxu0 0
        %1598 = vmatpush1.bf16.xpose.msra.mxu0 %v1579
        %1599 = vmatprep.subr.bf16.mxu0 0
        %1600 = vmatpush1.bf16.xpose.msra.mxu0 %v1582
        %1601 = vmatprep.subr.bf16.mxu0 0
        %1602 = vmatpush1.bf16.xpose.msra.mxu0 %v1585
        %1603 = vmatprep.subr.bf16.mxu0 0
        %1604 = vmatpush1.bf16.xpose.msra.mxu0 0
        %1605 = vmatprep.subr.bf16.mxu0 0
        %1606 = vmatpush1.bf16.xpose.msra.mxu0 0
        %1607 = vmatprep.subr.bf16.mxu0 0
        %1608 = vmatpush1.bf16.xpose.msra.mxu0 0
        %1609 = vmatprep.subr.bf16.mxu0 0
        %1610 = vmatpush1.bf16.xpose.msra.mxu0 0
        %1611 = vmatprep.subr.bf16.mxu0 0
        %1612 = vmatpush1.bf16.xpose.msra.mxu0 0
        %1613 = vmatprep.subr.bf16.mxu0 0
        %1614 = vmatpush1.bf16.xpose.msra.mxu0 0
        %1615 = vmatprep.subr.bf16.mxu0 0
        %1616 = vmatpush1.bf16.xpose.msra.mxu0 0
        %1617 = vmatprep.subr.bf16.mxu0 0
        %1618 = vmatpush1.bf16.xpose.msra.mxu0 0
        %1619 = vmatprep.mubr.bf16.mxu0 0
        %1620 = vmatmul.mubr.bf16.gmra.mrb[0].mxu0 %v1540
        %v1621 = vpop.f32.mrb[0].mxu0
        %v1622 = vadd.f32 0.0, %v1621
        %v1623 = vpop.f32.mrb[0].mxu0
        %v1624 = vpop.f32.mrb[0].mxu0
        %v1625 = vadd.f32 0.0, %v1624
        %v1626 = vpop.f32.mrb[0].mxu0
        %1627 = vmatprep.mubr.bf16.mxu0 0
        %1628 = vmatmul.mubr.bf16.gmra.mrb[0].mxu0 %v1543
        %v1629 = vpop.f32.mrb[0].mxu0
        %v1630 = vadd.f32 0.0, %v1629
        %v1631 = vpop.f32.mrb[0].mxu0
        %v1632 = vpop.f32.mrb[0].mxu0
        %v1633 = vadd.f32 0.0, %v1632
        %v1634 = vpop.f32.mrb[0].mxu0
        %1635 = vmatprep.mubr.bf16.mxu0 0
        %1636 = vmatmul.mubr.bf16.gmra.mrb[0].mxu0 %v1546
        %v1637 = vpop.f32.mrb[0].mxu0
        %v1638 = vadd.f32 0.0, %v1637
        %v1639 = vpop.f32.mrb[0].mxu0
        %v1640 = vpop.f32.mrb[0].mxu0
        %v1641 = vadd.f32 0.0, %v1640
        %v1642 = vpop.f32.mrb[0].mxu0
        %1643 = vmatprep.mubr.bf16.mxu0 0
        %1644 = vmatmul.mubr.bf16.gmra.mrb[0].mxu0 %v1549
        %v1645 = vpop.f32.mrb[0].mxu0
        %v1646 = vadd.f32 0.0, %v1645
        %v1647 = vpop.f32.mrb[0].mxu0
        %v1648 = vpop.f32.mrb[0].mxu0
        %v1649 = vadd.f32 0.0, %v1648
        %v1650 = vpop.f32.mrb[0].mxu0
        %1651 = vmatprep.mubr.bf16.mxu0 0
        %1652 = vmatmul.mubr.bf16.gmra.mrb[0].mxu0 %v1552
        %v1653 = vpop.f32.mrb[0].mxu0
        %v1654 = vadd.f32 0.0, %v1653
        %v1655 = vpop.f32.mrb[0].mxu0
        %v1656 = vpop.f32.mrb[0].mxu0
        %v1657 = vadd.f32 0.0, %v1656
        %v1658 = vpop.f32.mrb[0].mxu0
        %1659 = vmatprep.mubr.bf16.mxu0 0
        %1660 = vmatmul.mubr.bf16.gmra.mrb[0].mxu0 %v1555
        %v1661 = vpop.f32.mrb[0].mxu0
        %v1662 = vadd.f32 0.0, %v1661
        %v1663 = vpop.f32.mrb[0].mxu0
        %v1664 = vpop.f32.mrb[0].mxu0
        %v1665 = vadd.f32 0.0, %v1664
        %v1666 = vpop.f32.mrb[0].mxu0
        %1667 = vmatprep.mubr.bf16.mxu0 0
        %1668 = vmatmul.mubr.bf16.gmra.mrb[0].mxu0 %v1558
        %v1669 = vpop.f32.mrb[0].mxu0
        %v1670 = vadd.f32 0.0, %v1669
        %v1671 = vpop.f32.mrb[0].mxu0
        %v1672 = vpop.f32.mrb[0].mxu0
        %v1673 = vadd.f32 0.0, %v1672
        %v1674 = vpop.f32.mrb[0].mxu0
        %1675 = vmatprep.mubr.bf16.mxu0 0
        %1676 = vmatmul.mubr.bf16.gmra.mrb[0].mxu0 %v1561
        %v1677 = vpop.f32.mrb[0].mxu0
        %v1678 = vadd.f32 0.0, %v1677
        %v1679 = vpop.f32.mrb[0].mxu0
        %v1680 = vpop.f32.mrb[0].mxu0
        %v1681 = vadd.f32 0.0, %v1680
        %v1682 = vpop.f32.mrb[0].mxu0
        %1683 = vdwg.mxu0
        %v1685 = vsel %vm1393, %v1226, 0
        %v1688 = vsel %vm1393, %v1228, 0
        %v1691 = vsel %vm1393, %v1230, 0
        %v1694 = vsel %vm1393, %v1232, 0
        %v1697 = vsel %vm1393, %v1234, 0
        %v1700 = vsel %vm1393, %v1236, 0
        %v1703 = vsel %vm1393, %v1238, 0
        %v1706 = vsel %vm1393, %v1240, 0
        %v1709 = vsel %vm1393, %v1282, 0
        %v1712 = vsel %vm1393, %v1284, 0
        %v1715 = vsel %vm1393, %v1286, 0
        %v1718 = vsel %vm1393, %v1288, 0
        %v1721 = vsel %vm1393, %v1290, 0
        %v1724 = vsel %vm1393, %v1292, 0
        %v1727 = vsel %vm1393, %v1294, 0
        %v1730 = vsel %vm1393, %v1296, 0
        %1732 = vmatprep.subr.bf16.mxu0 0
        %1733 = vmatpush1.bf16.xpose.msra.mxu0 %v1709
        %1734 = vmatprep.subr.bf16.mxu0 0
        %1735 = vmatpush1.bf16.xpose.msra.mxu0 %v1712
        %1736 = vmatprep.subr.bf16.mxu0 0
        %1737 = vmatpush1.bf16.xpose.msra.mxu0 %v1715
        %1738 = vmatprep.subr.bf16.mxu0 0
        %1739 = vmatpush1.bf16.xpose.msra.mxu0 %v1718
        %1740 = vmatprep.subr.bf16.mxu0 0
        %1741 = vmatpush1.bf16.xpose.msra.mxu0 %v1721
        %1742 = vmatprep.subr.bf16.mxu0 0
        %1743 = vmatpush1.bf16.xpose.msra.mxu0 %v1724
        %1744 = vmatprep.subr.bf16.mxu0 0
        %1745 = vmatpush1.bf16.xpose.msra.mxu0 %v1727
        %1746 = vmatprep.subr.bf16.mxu0 0
        %1747 = vmatpush1.bf16.xpose.msra.mxu0 %v1730
        %1748 = vmatprep.subr.bf16.mxu0 0
        %1749 = vmatpush1.bf16.xpose.msra.mxu0 0
        %1750 = vmatprep.subr.bf16.mxu0 0
        %1751 = vmatpush1.bf16.xpose.msra.mxu0 0
        %1752 = vmatprep.subr.bf16.mxu0 0
        %1753 = vmatpush1.bf16.xpose.msra.mxu0 0
        %1754 = vmatprep.subr.bf16.mxu0 0
        %1755 = vmatpush1.bf16.xpose.msra.mxu0 0
        %1756 = vmatprep.subr.bf16.mxu0 0
        %1757 = vmatpush1.bf16.xpose.msra.mxu0 0
        %1758 = vmatprep.subr.bf16.mxu0 0
        %1759 = vmatpush1.bf16.xpose.msra.mxu0 0
        %1760 = vmatprep.subr.bf16.mxu0 0
        %1761 = vmatpush1.bf16.xpose.msra.mxu0 0
        %1762 = vmatprep.subr.bf16.mxu0 0
        %1763 = vmatpush1.bf16.xpose.msra.mxu0 0
        %1764 = vmatprep.mubr.bf16.mxu0 0
        %1765 = vmatmul.mubr.bf16.gmra.mrb[0].mxu0 %v1685
        %v1766 = vpop.f32.mrb[0].mxu0
        %v1767 = vadd.f32 0.0, %v1766
        %v1768 = vpop.f32.mrb[0].mxu0
        %v1769 = vpop.f32.mrb[0].mxu0
        %v1770 = vadd.f32 0.0, %v1769
        %v1771 = vpop.f32.mrb[0].mxu0
        %1772 = vmatprep.mubr.bf16.mxu0 0
        %1773 = vmatmul.mubr.bf16.gmra.mrb[0].mxu0 %v1688
        %v1774 = vpop.f32.mrb[0].mxu0
        %v1775 = vadd.f32 0.0, %v1774
        %v1776 = vpop.f32.mrb[0].mxu0
        %v1777 = vpop.f32.mrb[0].mxu0
        %v1778 = vadd.f32 0.0, %v1777
        %v1779 = vpop.f32.mrb[0].mxu0
        %1780 = vmatprep.mubr.bf16.mxu0 0
        %1781 = vmatmul.mubr.bf16.gmra.mrb[0].mxu0 %v1691
        %v1782 = vpop.f32.mrb[0].mxu0
        %v1783 = vadd.f32 0.0, %v1782
        %v1784 = vpop.f32.mrb[0].mxu0
        %v1785 = vpop.f32.mrb[0].mxu0
        %v1786 = vadd.f32 0.0, %v1785
        %v1787 = vpop.f32.mrb[0].mxu0
        %1788 = vmatprep.mubr.bf16.mxu0 0
        %1789 = vmatmul.mubr.bf16.gmra.mrb[0].mxu0 %v1694
        %v1790 = vpop.f32.mrb[0].mxu0
        %v1791 = vadd.f32 0.0, %v1790
        %v1792 = vpop.f32.mrb[0].mxu0
        %v1793 = vpop.f32.mrb[0].mxu0
        %v1794 = vadd.f32 0.0, %v1793
        %v1795 = vpop.f32.mrb[0].mxu0
        %1796 = vmatprep.mubr.bf16.mxu0 0
        %1797 = vmatmul.mubr.bf16.gmra.mrb[0].mxu0 %v1697
        %v1798 = vpop.f32.mrb[0].mxu0
        %v1799 = vadd.f32 0.0, %v1798
        %v1800 = vpop.f32.mrb[0].mxu0
        %v1801 = vpop.f32.mrb[0].mxu0
        %v1802 = vadd.f32 0.0, %v1801
        %v1803 = vpop.f32.mrb[0].mxu0
        %1804 = vmatprep.mubr.bf16.mxu0 0
        %1805 = vmatmul.mubr.bf16.gmra.mrb[0].mxu0 %v1700
        %v1806 = vpop.f32.mrb[0].mxu0
        %v1807 = vadd.f32 0.0, %v1806
        %v1808 = vpop.f32.mrb[0].mxu0
        %v1809 = vpop.f32.mrb[0].mxu0
        %v1810 = vadd.f32 0.0, %v1809
        %v1811 = vpop.f32.mrb[0].mxu0
        %1812 = vmatprep.mubr.bf16.mxu0 0
        %1813 = vmatmul.mubr.bf16.gmra.mrb[0].mxu0 %v1703
        %v1814 = vpop.f32.mrb[0].mxu0
        %v1815 = vadd.f32 0.0, %v1814
        %v1816 = vpop.f32.mrb[0].mxu0
        %v1817 = vpop.f32.mrb[0].mxu0
        %v1818 = vadd.f32 0.0, %v1817
        %v1819 = vpop.f32.mrb[0].mxu0
        %1820 = vmatprep.mubr.bf16.mxu0 0
        %1821 = vmatmul.mubr.bf16.gmra.mrb[0].mxu0 %v1706
        %v1822 = vpop.f32.mrb[0].mxu0
        %v1823 = vadd.f32 0.0, %v1822
        %v1824 = vpop.f32.mrb[0].mxu0
        %v1825 = vpop.f32.mrb[0].mxu0
        %v1826 = vadd.f32 0.0, %v1825
        %v1827 = vpop.f32.mrb[0].mxu0
        %1828 = vdwg.mxu0
        %v1830 = vsel %vm1393, %v1242, 0
        %v1833 = vsel %vm1393, %v1244, 0
        %v1836 = vsel %vm1393, %v1246, 0
        %v1839 = vsel %vm1393, %v1248, 0
        %v1842 = vsel %vm1393, %v1250, 0
        %v1845 = vsel %vm1393, %v1252, 0
        %v1848 = vsel %vm1393, %v1254, 0
        %v1851 = vsel %vm1393, %v1256, 0
        %v1854 = vsel %vm1393, %v1298, 0
        %v1857 = vsel %vm1393, %v1300, 0
        %v1860 = vsel %vm1393, %v1302, 0
        %v1863 = vsel %vm1393, %v1304, 0
        %v1866 = vsel %vm1393, %v1306, 0
        %v1869 = vsel %vm1393, %v1308, 0
        %v1872 = vsel %vm1393, %v1310, 0
        %v1875 = vsel %vm1393, %v1312, 0
        %1877 = vmatprep.subr.bf16.mxu0 0
        %1878 = vmatpush1.bf16.xpose.msra.mxu0 %v1854
        %1879 = vmatprep.subr.bf16.mxu0 0
        %1880 = vmatpush1.bf16.xpose.msra.mxu0 %v1857
        %1881 = vmatprep.subr.bf16.mxu0 0
        %1882 = vmatpush1.bf16.xpose.msra.mxu0 %v1860
        %1883 = vmatprep.subr.bf16.mxu0 0
        %1884 = vmatpush1.bf16.xpose.msra.mxu0 %v1863
        %1885 = vmatprep.subr.bf16.mxu0 0
        %1886 = vmatpush1.bf16.xpose.msra.mxu0 %v1866
        %1887 = vmatprep.subr.bf16.mxu0 0
        %1888 = vmatpush1.bf16.xpose.msra.mxu0 %v1869
        %1889 = vmatprep.subr.bf16.mxu0 0
        %1890 = vmatpush1.bf16.xpose.msra.mxu0 %v1872
        %1891 = vmatprep.subr.bf16.mxu0 0
        %1892 = vmatpush1.bf16.xpose.msra.mxu0 %v1875
        %1893 = vmatprep.subr.bf16.mxu0 0
        %1894 = vmatpush1.bf16.xpose.msra.mxu0 0
        %1895 = vmatprep.subr.bf16.mxu0 0
        %1896 = vmatpush1.bf16.xpose.msra.mxu0 0
        %1897 = vmatprep.subr.bf16.mxu0 0
        %1898 = vmatpush1.bf16.xpose.msra.mxu0 0
        %1899 = vmatprep.subr.bf16.mxu0 0
        %1900 = vmatpush1.bf16.xpose.msra.mxu0 0
        %1901 = vmatprep.subr.bf16.mxu0 0
        %1902 = vmatpush1.bf16.xpose.msra.mxu0 0
        %1903 = vmatprep.subr.bf16.mxu0 0
        %1904 = vmatpush1.bf16.xpose.msra.mxu0 0
        %1905 = vmatprep.subr.bf16.mxu0 0
        %1906 = vmatpush1.bf16.xpose.msra.mxu0 0
        %1907 = vmatprep.subr.bf16.mxu0 0
        %1908 = vmatpush1.bf16.xpose.msra.mxu0 0
        %1909 = vmatprep.mubr.bf16.mxu0 0
        %1910 = vmatmul.mubr.bf16.gmra.mrb[0].mxu0 %v1830
        %v1911 = vpop.f32.mrb[0].mxu0
        %v1912 = vadd.f32 0.0, %v1911
        %v1913 = vpop.f32.mrb[0].mxu0
        %v1914 = vpop.f32.mrb[0].mxu0
        %v1915 = vadd.f32 0.0, %v1914
        %v1916 = vpop.f32.mrb[0].mxu0
        %1917 = vmatprep.mubr.bf16.mxu0 0
        %1918 = vmatmul.mubr.bf16.gmra.mrb[0].mxu0 %v1833
        %v1919 = vpop.f32.mrb[0].mxu0
        %v1920 = vadd.f32 0.0, %v1919
        %v1921 = vpop.f32.mrb[0].mxu0
        %v1922 = vpop.f32.mrb[0].mxu0
        %v1923 = vadd.f32 0.0, %v1922
        %v1924 = vpop.f32.mrb[0].mxu0
        %1925 = vmatprep.mubr.bf16.mxu0 0
        %1926 = vmatmul.mubr.bf16.gmra.mrb[0].mxu0 %v1836
        %v1927 = vpop.f32.mrb[0].mxu0
        %v1928 = vadd.f32 0.0, %v1927
        %v1929 = vpop.f32.mrb[0].mxu0
        %v1930 = vpop.f32.mrb[0].mxu0
        %v1931 = vadd.f32 0.0, %v1930
        %v1932 = vpop.f32.mrb[0].mxu0
        %1933 = vmatprep.mubr.bf16.mxu0 0
        %1934 = vmatmul.mubr.bf16.gmra.mrb[0].mxu0 %v1839
        %v1935 = vpop.f32.mrb[0].mxu0
        %v1936 = vadd.f32 0.0, %v1935
        %v1937 = vpop.f32.mrb[0].mxu0
        %v1938 = vpop.f32.mrb[0].mxu0
        %v1939 = vadd.f32 0.0, %v1938
        %v1940 = vpop.f32.mrb[0].mxu0
        %1941 = vmatprep.mubr.bf16.mxu0 0
        %1942 = vmatmul.mubr.bf16.gmra.mrb[0].mxu0 %v1842
        %v1943 = vpop.f32.mrb[0].mxu0
        %v1944 = vadd.f32 0.0, %v1943
        %v1945 = vpop.f32.mrb[0].mxu0
        %v1946 = vpop.f32.mrb[0].mxu0
        %v1947 = vadd.f32 0.0, %v1946
        %v1948 = vpop.f32.mrb[0].mxu0
        %1949 = vmatprep.mubr.bf16.mxu0 0
        %1950 = vmatmul.mubr.bf16.gmra.mrb[0].mxu0 %v1845
        %v1951 = vpop.f32.mrb[0].mxu0
        %v1952 = vadd.f32 0.0, %v1951
        %v1953 = vpop.f32.mrb[0].mxu0
        %v1954 = vpop.f32.mrb[0].mxu0
        %v1955 = vadd.f32 0.0, %v1954
        %v1956 = vpop.f32.mrb[0].mxu0
        %1957 = vmatprep.mubr.bf16.mxu0 0
        %1958 = vmatmul.mubr.bf16.gmra.mrb[0].mxu0 %v1848
        %v1959 = vpop.f32.mrb[0].mxu0
        %v1960 = vadd.f32 0.0, %v1959
        %v1961 = vpop.f32.mrb[0].mxu0
        %v1962 = vpop.f32.mrb[0].mxu0
        %v1963 = vadd.f32 0.0, %v1962
        %v1964 = vpop.f32.mrb[0].mxu0
        %1965 = vmatprep.mubr.bf16.mxu0 0
        %1966 = vmatmul.mubr.bf16.gmra.mrb[0].mxu0 %v1851
        %v1967 = vpop.f32.mrb[0].mxu0
        %v1968 = vadd.f32 0.0, %v1967
        %v1969 = vpop.f32.mrb[0].mxu0
        %v1970 = vpop.f32.mrb[0].mxu0
        %v1971 = vadd.f32 0.0, %v1970
        %v1972 = vpop.f32.mrb[0].mxu0
        %1973 = vdwg.mxu0
        %1974 = vmax.xlane.f32.xlu0 %v1477
        %v1975 = vpop.xlane.xlu0 %1974
        %1976 = vmax.xlane.f32.xlu0 %v1480
        %v1977 = vpop.xlane.xlu0 %1976
        %1978 = vmax.xlane.f32.xlu0 %v1485
        %v1979 = vpop.xlane.xlu0 %1978
        %1980 = vmax.xlane.f32.xlu0 %v1488
        %v1981 = vpop.xlane.xlu0 %1980
        %1982 = vmax.xlane.f32.xlu0 %v1493
        %v1983 = vpop.xlane.xlu0 %1982
        %1984 = vmax.xlane.f32.xlu0 %v1496
        %v1985 = vpop.xlane.xlu0 %1984
        %1986 = vmax.xlane.f32.xlu0 %v1501
        %v1987 = vpop.xlane.xlu0 %1986
        %1988 = vmax.xlane.f32.xlu0 %v1504
        %v1989 = vpop.xlane.xlu0 %1988
        %1990 = vmax.xlane.f32.xlu0 %v1509
        %v1991 = vpop.xlane.xlu0 %1990
        %1992 = vmax.xlane.f32.xlu0 %v1512
        %v1993 = vpop.xlane.xlu0 %1992
        %1994 = vmax.xlane.f32.xlu0 %v1517
        %v1995 = vpop.xlane.xlu0 %1994
        %1996 = vmax.xlane.f32.xlu0 %v1520
        %v1997 = vpop.xlane.xlu0 %1996
        %1998 = vmax.xlane.f32.xlu0 %v1525
        %v1999 = vpop.xlane.xlu0 %1998
        %2000 = vmax.xlane.f32.xlu0 %v1528
        %v2001 = vpop.xlane.xlu0 %2000
        %2002 = vmax.xlane.f32.xlu0 %v1533
        %v2003 = vpop.xlane.xlu0 %2002
        %2004 = vmax.xlane.f32.xlu0 %v1536
        %v2005 = vpop.xlane.xlu0 %2004
        %2006 = vmax.xlane.f32.xlu0 %v1622
        %v2007 = vpop.xlane.xlu0 %2006
        %2008 = vmax.xlane.f32.xlu0 %v1625
        %v2009 = vpop.xlane.xlu0 %2008
        %2010 = vmax.xlane.f32.xlu0 %v1630
        %v2011 = vpop.xlane.xlu0 %2010
        %2012 = vmax.xlane.f32.xlu0 %v1633
        %v2013 = vpop.xlane.xlu0 %2012
        %2014 = vmax.xlane.f32.xlu0 %v1638
        %v2015 = vpop.xlane.xlu0 %2014
        %2016 = vmax.xlane.f32.xlu0 %v1641
        %v2017 = vpop.xlane.xlu0 %2016
        %2018 = vmax.xlane.f32.xlu0 %v1646
        %v2019 = vpop.xlane.xlu0 %2018
        %2020 = vmax.xlane.f32.xlu0 %v1649
        %v2021 = vpop.xlane.xlu0 %2020
        %2022 = vmax.xlane.f32.xlu0 %v1654
        %v2023 = vpop.xlane.xlu0 %2022
        %2024 = vmax.xlane.f32.xlu0 %v1657
        %v2025 = vpop.xlane.xlu0 %2024
        %2026 = vmax.xlane.f32.xlu0 %v1662
        %v2027 = vpop.xlane.xlu0 %2026
        %2028 = vmax.xlane.f32.xlu0 %v1665
        %v2029 = vpop.xlane.xlu0 %2028
        %2030 = vmax.xlane.f32.xlu0 %v1670
        %v2031 = vpop.xlane.xlu0 %2030
        %2032 = vmax.xlane.f32.xlu0 %v1673
        %v2033 = vpop.xlane.xlu0 %2032
        %2034 = vmax.xlane.f32.xlu0 %v1678
        %v2035 = vpop.xlane.xlu0 %2034
        %2036 = vmax.xlane.f32.xlu0 %v1681
        %v2037 = vpop.xlane.xlu0 %2036
        %2038 = vmax.xlane.f32.xlu0 %v1767
        %v2039 = vpop.xlane.xlu0 %2038
        %2040 = vmax.xlane.f32.xlu0 %v1770
        %v2041 = vpop.xlane.xlu0 %2040
        %2042 = vmax.xlane.f32.xlu0 %v1775
        %v2043 = vpop.xlane.xlu0 %2042
        %2044 = vmax.xlane.f32.xlu0 %v1778
        %v2045 = vpop.xlane.xlu0 %2044
        %2046 = vmax.xlane.f32.xlu0 %v1783
        %v2047 = vpop.xlane.xlu0 %2046
        %2048 = vmax.xlane.f32.xlu0 %v1786
        %v2049 = vpop.xlane.xlu0 %2048
        %2050 = vmax.xlane.f32.xlu0 %v1791
        %v2051 = vpop.xlane.xlu0 %2050
        %2052 = vmax.xlane.f32.xlu0 %v1794
        %v2053 = vpop.xlane.xlu0 %2052
        %2054 = vmax.xlane.f32.xlu0 %v1799
        %v2055 = vpop.xlane.xlu0 %2054
        %2056 = vmax.xlane.f32.xlu0 %v1802
        %v2057 = vpop.xlane.xlu0 %2056
        %2058 = vmax.xlane.f32.xlu0 %v1807
        %v2059 = vpop.xlane.xlu0 %2058
        %2060 = vmax.xlane.f32.xlu0 %v1810
        %v2061 = vpop.xlane.xlu0 %2060
        %2062 = vmax.xlane.f32.xlu0 %v1815
        %v2063 = vpop.xlane.xlu0 %2062
        %2064 = vmax.xlane.f32.xlu0 %v1818
        %v2065 = vpop.xlane.xlu0 %2064
        %2066 = vmax.xlane.f32.xlu0 %v1823
        %v2067 = vpop.xlane.xlu0 %2066
        %2068 = vmax.xlane.f32.xlu0 %v1826
        %v2069 = vpop.xlane.xlu0 %2068
        %2070 = vmax.xlane.f32.xlu0 %v1912
        %v2071 = vpop.xlane.xlu0 %2070
        %2072 = vmax.xlane.f32.xlu0 %v1915
        %v2073 = vpop.xlane.xlu0 %2072
        %2074 = vmax.xlane.f32.xlu0 %v1920
        %v2075 = vpop.xlane.xlu0 %2074
        %2076 = vmax.xlane.f32.xlu0 %v1923
        %v2077 = vpop.xlane.xlu0 %2076
        %2078 = vmax.xlane.f32.xlu0 %v1928
        %v2079 = vpop.xlane.xlu0 %2078
        %2080 = vmax.xlane.f32.xlu0 %v1931
        %v2081 = vpop.xlane.xlu0 %2080
        %2082 = vmax.xlane.f32.xlu0 %v1936
        %v2083 = vpop.xlane.xlu0 %2082
        %2084 = vmax.xlane.f32.xlu0 %v1939
        %v2085 = vpop.xlane.xlu0 %2084
        %2086 = vmax.xlane.f32.xlu0 %v1944
        %v2087 = vpop.xlane.xlu0 %2086
        %2088 = vmax.xlane.f32.xlu0 %v1947
        %v2089 = vpop.xlane.xlu0 %2088
        %2090 = vmax.xlane.f32.xlu0 %v1952
        %v2091 = vpop.xlane.xlu0 %2090
        %2092 = vmax.xlane.f32.xlu0 %v1955
        %v2093 = vpop.xlane.xlu0 %2092
        %2094 = vmax.xlane.f32.xlu0 %v1960
        %v2095 = vpop.xlane.xlu0 %2094
        %2096 = vmax.xlane.f32.xlu0 %v1963
        %v2097 = vpop.xlane.xlu0 %2096
        %2098 = vmax.xlane.f32.xlu0 %v1968
        %v2099 = vpop.xlane.xlu0 %2098
        %2100 = vmax.xlane.f32.xlu0 %v1971
        %v2101 = vpop.xlane.xlu0 %2100
        %v2102 = vsub.f32 %v1477, %v1975
        %v2103 = vsub.f32 %v1480, %v1977
        %v2104 = vsub.f32 %v1485, %v1979
        %v2105 = vsub.f32 %v1488, %v1981
        %v2106 = vsub.f32 %v1493, %v1983
        %v2107 = vsub.f32 %v1496, %v1985
        %v2108 = vsub.f32 %v1501, %v1987
        %v2109 = vsub.f32 %v1504, %v1989
        %v2110 = vsub.f32 %v1509, %v1991
        %v2111 = vsub.f32 %v1512, %v1993
        %v2112 = vsub.f32 %v1517, %v1995
        %v2113 = vsub.f32 %v1520, %v1997
        %v2114 = vsub.f32 %v1525, %v1999
        %v2115 = vsub.f32 %v1528, %v2001
        %v2116 = vsub.f32 %v1533, %v2003
        %v2117 = vsub.f32 %v1536, %v2005
        %v2118 = vsub.f32 %v1622, %v2007
        %v2119 = vsub.f32 %v1625, %v2009
        %v2120 = vsub.f32 %v1630, %v2011
        %v2121 = vsub.f32 %v1633, %v2013
        %v2122 = vsub.f32 %v1638, %v2015
        %v2123 = vsub.f32 %v1641, %v2017
        %v2124 = vsub.f32 %v1646, %v2019
        %v2125 = vsub.f32 %v1649, %v2021
        %v2126 = vsub.f32 %v1654, %v2023
        %v2127 = vsub.f32 %v1657, %v2025
        %v2128 = vsub.f32 %v1662, %v2027
        %v2129 = vsub.f32 %v1665, %v2029
        %v2130 = vsub.f32 %v1670, %v2031
        %v2131 = vsub.f32 %v1673, %v2033
        %v2132 = vsub.f32 %v1678, %v2035
        %v2133 = vsub.f32 %v1681, %v2037
        %v2134 = vsub.f32 %v1767, %v2039
        %v2135 = vsub.f32 %v1770, %v2041
        %v2136 = vsub.f32 %v1775, %v2043
        %v2137 = vsub.f32 %v1778, %v2045
        %v2138 = vsub.f32 %v1783, %v2047
        %v2139 = vsub.f32 %v1786, %v2049
        %v2140 = vsub.f32 %v1791, %v2051
        %v2141 = vsub.f32 %v1794, %v2053
        %v2142 = vsub.f32 %v1799, %v2055
        %v2143 = vsub.f32 %v1802, %v2057
        %v2144 = vsub.f32 %v1807, %v2059
        %v2145 = vsub.f32 %v1810, %v2061
        %v2146 = vsub.f32 %v1815, %v2063
        %v2147 = vsub.f32 %v1818, %v2065
        %v2148 = vsub.f32 %v1823, %v2067
        %v2149 = vsub.f32 %v1826, %v2069
        %v2150 = vsub.f32 %v1912, %v2071
        %v2151 = vsub.f32 %v1915, %v2073
        %v2152 = vsub.f32 %v1920, %v2075
        %v2153 = vsub.f32 %v1923, %v2077
        %v2154 = vsub.f32 %v1928, %v2079
        %v2155 = vsub.f32 %v1931, %v2081
        %v2156 = vsub.f32 %v1936, %v2083
        %v2157 = vsub.f32 %v1939, %v2085
        %v2158 = vsub.f32 %v1944, %v2087
        %v2159 = vsub.f32 %v1947, %v2089
        %v2160 = vsub.f32 %v1952, %v2091
        %v2161 = vsub.f32 %v1955, %v2093
        %v2162 = vsub.f32 %v1960, %v2095
        %v2163 = vsub.f32 %v1963, %v2097
        %v2164 = vsub.f32 %v1968, %v2099
        %v2165 = vsub.f32 %v1971, %v2101
        %v2166 = vmul.f32 %v2102, 1.442695
        %v2167 = vpow.pop %v2166
        %v2168 = vmul.f32 %v2103, 1.442695
        %v2169 = vpow.pop %v2168
        %v2170 = vmul.f32 %v2104, 1.442695
        %v2171 = vpow.pop %v2170
        %v2172 = vmul.f32 %v2105, 1.442695
        %v2173 = vpow.pop %v2172
        %v2174 = vmul.f32 %v2106, 1.442695
        %v2175 = vpow.pop %v2174
        %v2176 = vmul.f32 %v2107, 1.442695
        %v2177 = vpow.pop %v2176
        %v2178 = vmul.f32 %v2108, 1.442695
        %v2179 = vpow.pop %v2178
        %v2180 = vmul.f32 %v2109, 1.442695
        %v2181 = vpow.pop %v2180
        %v2182 = vmul.f32 %v2110, 1.442695
        %v2183 = vpow.pop %v2182
        %v2184 = vmul.f32 %v2111, 1.442695
        %v2185 = vpow.pop %v2184
        %v2186 = vmul.f32 %v2112, 1.442695
        %v2187 = vpow.pop %v2186
        %v2188 = vmul.f32 %v2113, 1.442695
        %v2189 = vpow.pop %v2188
        %v2190 = vmul.f32 %v2114, 1.442695
        %v2191 = vpow.pop %v2190
        %v2192 = vmul.f32 %v2115, 1.442695
        %v2193 = vpow.pop %v2192
        %v2194 = vmul.f32 %v2116, 1.442695
        %v2195 = vpow.pop %v2194
        %v2196 = vmul.f32 %v2117, 1.442695
        %v2197 = vpow.pop %v2196
        %v2198 = vmul.f32 %v2118, 1.442695
        %v2199 = vpow.pop %v2198
        %v2200 = vmul.f32 %v2119, 1.442695
        %v2201 = vpow.pop %v2200
        %v2202 = vmul.f32 %v2120, 1.442695
        %v2203 = vpow.pop %v2202
        %v2204 = vmul.f32 %v2121, 1.442695
        %v2205 = vpow.pop %v2204
        %v2206 = vmul.f32 %v2122, 1.442695
        %v2207 = vpow.pop %v2206
        %v2208 = vmul.f32 %v2123, 1.442695
        %v2209 = vpow.pop %v2208
        %v2210 = vmul.f32 %v2124, 1.442695
        %v2211 = vpow.pop %v2210
        %v2212 = vmul.f32 %v2125, 1.442695
        %v2213 = vpow.pop %v2212
        %v2214 = vmul.f32 %v2126, 1.442695
        %v2215 = vpow.pop %v2214
        %v2216 = vmul.f32 %v2127, 1.442695
        %v2217 = vpow.pop %v2216
        %v2218 = vmul.f32 %v2128, 1.442695
        %v2219 = vpow.pop %v2218
        %v2220 = vmul.f32 %v2129, 1.442695
        %v2221 = vpow.pop %v2220
        %v2222 = vmul.f32 %v2130, 1.442695
        %v2223 = vpow.pop %v2222
        %v2224 = vmul.f32 %v2131, 1.442695
        %v2225 = vpow.pop %v2224
        %v2226 = vmul.f32 %v2132, 1.442695
        %v2227 = vpow.pop %v2226
        %v2228 = vmul.f32 %v2133, 1.442695
        %v2229 = vpow.pop %v2228
        %v2230 = vmul.f32 %v2134, 1.442695
        %v2231 = vpow.pop %v2230
        %v2232 = vmul.f32 %v2135, 1.442695
        %v2233 = vpow.pop %v2232
        %v2234 = vmul.f32 %v2136, 1.442695
        %v2235 = vpow.pop %v2234
        %v2236 = vmul.f32 %v2137, 1.442695
        %v2237 = vpow.pop %v2236
        %v2238 = vmul.f32 %v2138, 1.442695
        %v2239 = vpow.pop %v2238
        %v2240 = vmul.f32 %v2139, 1.442695
        %v2241 = vpow.pop %v2240
        %v2242 = vmul.f32 %v2140, 1.442695
        %v2243 = vpow.pop %v2242
        %v2244 = vmul.f32 %v2141, 1.442695
        %v2245 = vpow.pop %v2244
        %v2246 = vmul.f32 %v2142, 1.442695
        %v2247 = vpow.pop %v2246
        %v2248 = vmul.f32 %v2143, 1.442695
        %v2249 = vpow.pop %v2248
        %v2250 = vmul.f32 %v2144, 1.442695
        %v2251 = vpow.pop %v2250
        %v2252 = vmul.f32 %v2145, 1.442695
        %v2253 = vpow.pop %v2252
        %v2254 = vmul.f32 %v2146, 1.442695
        %v2255 = vpow.pop %v2254
        %v2256 = vmul.f32 %v2147, 1.442695
        %v2257 = vpow.pop %v2256
        %v2258 = vmul.f32 %v2148, 1.442695
        %v2259 = vpow.pop %v2258
        %v2260 = vmul.f32 %v2149, 1.442695
        %v2261 = vpow.pop %v2260
        %v2262 = vmul.f32 %v2150, 1.442695
        %v2263 = vpow.pop %v2262
        %v2264 = vmul.f32 %v2151, 1.442695
        %v2265 = vpow.pop %v2264
        %v2266 = vmul.f32 %v2152, 1.442695
        %v2267 = vpow.pop %v2266
        %v2268 = vmul.f32 %v2153, 1.442695
        %v2269 = vpow.pop %v2268
        %v2270 = vmul.f32 %v2154, 1.442695
        %v2271 = vpow.pop %v2270
        %v2272 = vmul.f32 %v2155, 1.442695
        %v2273 = vpow.pop %v2272
        %v2274 = vmul.f32 %v2156, 1.442695
        %v2275 = vpow.pop %v2274
        %v2276 = vmul.f32 %v2157, 1.442695
        %v2277 = vpow.pop %v2276
        %v2278 = vmul.f32 %v2158, 1.442695
        %v2279 = vpow.pop %v2278
        %v2280 = vmul.f32 %v2159, 1.442695
        %v2281 = vpow.pop %v2280
        %v2282 = vmul.f32 %v2160, 1.442695
        %v2283 = vpow.pop %v2282
        %v2284 = vmul.f32 %v2161, 1.442695
        %v2285 = vpow.pop %v2284
        %v2286 = vmul.f32 %v2162, 1.442695
        %v2287 = vpow.pop %v2286
        %v2288 = vmul.f32 %v2163, 1.442695
        %v2289 = vpow.pop %v2288
        %v2290 = vmul.f32 %v2164, 1.442695
        %v2291 = vpow.pop %v2290
        %v2292 = vmul.f32 %v2165, 1.442695
        %v2293 = vpow.pop %v2292
        %2294 = vadd.xlane.f32.xlu0 %v2167
        %v2295 = vpop.xlane.xlu0 %2294
        %2296 = vadd.xlane.f32.xlu0 %v2169
        %v2297 = vpop.xlane.xlu0 %2296
        %2298 = vadd.xlane.f32.xlu0 %v2171
        %v2299 = vpop.xlane.xlu0 %2298
        %2300 = vadd.xlane.f32.xlu0 %v2173
        %v2301 = vpop.xlane.xlu0 %2300
        %2302 = vadd.xlane.f32.xlu0 %v2175
        %v2303 = vpop.xlane.xlu0 %2302
        %2304 = vadd.xlane.f32.xlu0 %v2177
        %v2305 = vpop.xlane.xlu0 %2304
        %2306 = vadd.xlane.f32.xlu0 %v2179
        %v2307 = vpop.xlane.xlu0 %2306
        %2308 = vadd.xlane.f32.xlu0 %v2181
        %v2309 = vpop.xlane.xlu0 %2308
        %2310 = vadd.xlane.f32.xlu0 %v2183
        %v2311 = vpop.xlane.xlu0 %2310
        %2312 = vadd.xlane.f32.xlu0 %v2185
        %v2313 = vpop.xlane.xlu0 %2312
        %2314 = vadd.xlane.f32.xlu0 %v2187
        %v2315 = vpop.xlane.xlu0 %2314
        %2316 = vadd.xlane.f32.xlu0 %v2189
        %v2317 = vpop.xlane.xlu0 %2316
        %2318 = vadd.xlane.f32.xlu0 %v2191
        %v2319 = vpop.xlane.xlu0 %2318
        %2320 = vadd.xlane.f32.xlu0 %v2193
        %v2321 = vpop.xlane.xlu0 %2320
        %2322 = vadd.xlane.f32.xlu0 %v2195
        %v2323 = vpop.xlane.xlu0 %2322
        %2324 = vadd.xlane.f32.xlu0 %v2197
        %v2325 = vpop.xlane.xlu0 %2324
        %2326 = vadd.xlane.f32.xlu0 %v2199
        %v2327 = vpop.xlane.xlu0 %2326
        %2328 = vadd.xlane.f32.xlu0 %v2201
        %v2329 = vpop.xlane.xlu0 %2328
        %2330 = vadd.xlane.f32.xlu0 %v2203
        %v2331 = vpop.xlane.xlu0 %2330
        %2332 = vadd.xlane.f32.xlu0 %v2205
        %v2333 = vpop.xlane.xlu0 %2332
        %2334 = vadd.xlane.f32.xlu0 %v2207
        %v2335 = vpop.xlane.xlu0 %2334
        %2336 = vadd.xlane.f32.xlu0 %v2209
        %v2337 = vpop.xlane.xlu0 %2336
        %2338 = vadd.xlane.f32.xlu0 %v2211
        %v2339 = vpop.xlane.xlu0 %2338
        %2340 = vadd.xlane.f32.xlu0 %v2213
        %v2341 = vpop.xlane.xlu0 %2340
        %2342 = vadd.xlane.f32.xlu0 %v2215
        %v2343 = vpop.xlane.xlu0 %2342
        %2344 = vadd.xlane.f32.xlu0 %v2217
        %v2345 = vpop.xlane.xlu0 %2344
        %2346 = vadd.xlane.f32.xlu0 %v2219
        %v2347 = vpop.xlane.xlu0 %2346
        %2348 = vadd.xlane.f32.xlu0 %v2221
        %v2349 = vpop.xlane.xlu0 %2348
        %2350 = vadd.xlane.f32.xlu0 %v2223
        %v2351 = vpop.xlane.xlu0 %2350
        %2352 = vadd.xlane.f32.xlu0 %v2225
        %v2353 = vpop.xlane.xlu0 %2352
        %2354 = vadd.xlane.f32.xlu0 %v2227
        %v2355 = vpop.xlane.xlu0 %2354
        %2356 = vadd.xlane.f32.xlu0 %v2229
        %v2357 = vpop.xlane.xlu0 %2356
        %2358 = vadd.xlane.f32.xlu0 %v2231
        %v2359 = vpop.xlane.xlu0 %2358
        %2360 = vadd.xlane.f32.xlu0 %v2233
        %v2361 = vpop.xlane.xlu0 %2360
        %2362 = vadd.xlane.f32.xlu0 %v2235
        %v2363 = vpop.xlane.xlu0 %2362
        %2364 = vadd.xlane.f32.xlu0 %v2237
        %v2365 = vpop.xlane.xlu0 %2364
        %2366 = vadd.xlane.f32.xlu0 %v2239
        %v2367 = vpop.xlane.xlu0 %2366
        %2368 = vadd.xlane.f32.xlu0 %v2241
        %v2369 = vpop.xlane.xlu0 %2368
        %2370 = vadd.xlane.f32.xlu0 %v2243
        %v2371 = vpop.xlane.xlu0 %2370
        %2372 = vadd.xlane.f32.xlu0 %v2245
        %v2373 = vpop.xlane.xlu0 %2372
        %2374 = vadd.xlane.f32.xlu0 %v2247
        %v2375 = vpop.xlane.xlu0 %2374
        %2376 = vadd.xlane.f32.xlu0 %v2249
        %v2377 = vpop.xlane.xlu0 %2376
        %2378 = vadd.xlane.f32.xlu0 %v2251
        %v2379 = vpop.xlane.xlu0 %2378
        %2380 = vadd.xlane.f32.xlu0 %v2253
        %v2381 = vpop.xlane.xlu0 %2380
        %2382 = vadd.xlane.f32.xlu0 %v2255
        %v2383 = vpop.xlane.xlu0 %2382
        %2384 = vadd.xlane.f32.xlu0 %v2257
        %v2385 = vpop.xlane.xlu0 %2384
        %2386 = vadd.xlane.f32.xlu0 %v2259
        %v2387 = vpop.xlane.xlu0 %2386
        %2388 = vadd.xlane.f32.xlu0 %v2261
        %v2389 = vpop.xlane.xlu0 %2388
        %2390 = vadd.xlane.f32.xlu0 %v2263
        %v2391 = vpop.xlane.xlu0 %2390
        %2392 = vadd.xlane.f32.xlu0 %v2265
        %v2393 = vpop.xlane.xlu0 %2392
        %2394 = vadd.xlane.f32.xlu0 %v2267
        %v2395 = vpop.xlane.xlu0 %2394
        %2396 = vadd.xlane.f32.xlu0 %v2269
        %v2397 = vpop.xlane.xlu0 %2396
        %2398 = vadd.xlane.f32.xlu0 %v2271
        %v2399 = vpop.xlane.xlu0 %2398
        %2400 = vadd.xlane.f32.xlu0 %v2273
        %v2401 = vpop.xlane.xlu0 %2400
        %2402 = vadd.xlane.f32.xlu0 %v2275
        %v2403 = vpop.xlane.xlu0 %2402
        %2404 = vadd.xlane.f32.xlu0 %v2277
        %v2405 = vpop.xlane.xlu0 %2404
        %2406 = vadd.xlane.f32.xlu0 %v2279
        %v2407 = vpop.xlane.xlu0 %2406
        %2408 = vadd.xlane.f32.xlu0 %v2281
        %v2409 = vpop.xlane.xlu0 %2408
        %2410 = vadd.xlane.f32.xlu0 %v2283
        %v2411 = vpop.xlane.xlu0 %2410
        %2412 = vadd.xlane.f32.xlu0 %v2285
        %v2413 = vpop.xlane.xlu0 %2412
        %2414 = vadd.xlane.f32.xlu0 %v2287
        %v2415 = vpop.xlane.xlu0 %2414
        %2416 = vadd.xlane.f32.xlu0 %v2289
        %v2417 = vpop.xlane.xlu0 %2416
        %2418 = vadd.xlane.f32.xlu0 %v2291
        %v2419 = vpop.xlane.xlu0 %2418
        %2420 = vadd.xlane.f32.xlu0 %v2293
        %v2421 = vpop.xlane.xlu0 %2420
        %v2422 = vrcp.pop %v2295
        %v2423 = vrcp.pop %v2297
        %v2424 = vrcp.pop %v2299
        %v2425 = vrcp.pop %v2301
        %v2426 = vrcp.pop %v2303
        %v2427 = vrcp.pop %v2305
        %v2428 = vrcp.pop %v2307
        %v2429 = vrcp.pop %v2309
        %v2430 = vrcp.pop %v2311
        %v2431 = vrcp.pop %v2313
        %v2432 = vrcp.pop %v2315
        %v2433 = vrcp.pop %v2317
        %v2434 = vrcp.pop %v2319
        %v2435 = vrcp.pop %v2321
        %v2436 = vrcp.pop %v2323
        %v2437 = vrcp.pop %v2325
        %v2438 = vrcp.pop %v2327
        %v2439 = vrcp.pop %v2329
        %v2440 = vrcp.pop %v2331
        %v2441 = vrcp.pop %v2333
        %v2442 = vrcp.pop %v2335
        %v2443 = vrcp.pop %v2337
        %v2444 = vrcp.pop %v2339
        %v2445 = vrcp.pop %v2341
        %v2446 = vrcp.pop %v2343
        %v2447 = vrcp.pop %v2345
        %v2448 = vrcp.pop %v2347
        %v2449 = vrcp.pop %v2349
        %v2450 = vrcp.pop %v2351
        %v2451 = vrcp.pop %v2353
        %v2452 = vrcp.pop %v2355
        %v2453 = vrcp.pop %v2357
        %v2454 = vrcp.pop %v2359
        %v2455 = vrcp.pop %v2361
        %v2456 = vrcp.pop %v2363
        %v2457 = vrcp.pop %v2365
        %v2458 = vrcp.pop %v2367
        %v2459 = vrcp.pop %v2369
        %v2460 = vrcp.pop %v2371
        %v2461 = vrcp.pop %v2373
        %v2462 = vrcp.pop %v2375
        %v2463 = vrcp.pop %v2377
        %v2464 = vrcp.pop %v2379
        %v2465 = vrcp.pop %v2381
        %v2466 = vrcp.pop %v2383
        %v2467 = vrcp.pop %v2385
        %v2468 = vrcp.pop %v2387
        %v2469 = vrcp.pop %v2389
        %v2470 = vrcp.pop %v2391
        %v2471 = vrcp.pop %v2393
        %v2472 = vrcp.pop %v2395
        %v2473 = vrcp.pop %v2397
        %v2474 = vrcp.pop %v2399
        %v2475 = vrcp.pop %v2401
        %v2476 = vrcp.pop %v2403
        %v2477 = vrcp.pop %v2405
        %v2478 = vrcp.pop %v2407
        %v2479 = vrcp.pop %v2409
        %v2480 = vrcp.pop %v2411
        %v2481 = vrcp.pop %v2413
        %v2482 = vrcp.pop %v2415
        %v2483 = vrcp.pop %v2417
        %v2484 = vrcp.pop %v2419
        %v2485 = vrcp.pop %v2421
        %v2486 = vmul.f32 %v2167, %v2422
        %v2487 = vmul.f32 %v2169, %v2423
        %v2488 = vmul.f32 %v2171, %v2424
        %v2489 = vmul.f32 %v2173, %v2425
        %v2490 = vmul.f32 %v2175, %v2426
        %v2491 = vmul.f32 %v2177, %v2427
        %v2492 = vmul.f32 %v2179, %v2428
        %v2493 = vmul.f32 %v2181, %v2429
        %v2494 = vmul.f32 %v2183, %v2430
        %v2495 = vmul.f32 %v2185, %v2431
        %v2496 = vmul.f32 %v2187, %v2432
        %v2497 = vmul.f32 %v2189, %v2433
        %v2498 = vmul.f32 %v2191, %v2434
        %v2499 = vmul.f32 %v2193, %v2435
        %v2500 = vmul.f32 %v2195, %v2436
        %v2501 = vmul.f32 %v2197, %v2437
        %v2502 = vmul.f32 %v2199, %v2438
        %v2503 = vmul.f32 %v2201, %v2439
        %v2504 = vmul.f32 %v2203, %v2440
        %v2505 = vmul.f32 %v2205, %v2441
        %v2506 = vmul.f32 %v2207, %v2442
        %v2507 = vmul.f32 %v2209, %v2443
        %v2508 = vmul.f32 %v2211, %v2444
        %v2509 = vmul.f32 %v2213, %v2445
        %v2510 = vmul.f32 %v2215, %v2446
        %v2511 = vmul.f32 %v2217, %v2447
        %v2512 = vmul.f32 %v2219, %v2448
        %v2513 = vmul.f32 %v2221, %v2449
        %v2514 = vmul.f32 %v2223, %v2450
        %v2515 = vmul.f32 %v2225, %v2451
        %v2516 = vmul.f32 %v2227, %v2452
        %v2517 = vmul.f32 %v2229, %v2453
        %v2518 = vmul.f32 %v2231, %v2454
        %v2519 = vmul.f32 %v2233, %v2455
        %v2520 = vmul.f32 %v2235, %v2456
        %v2521 = vmul.f32 %v2237, %v2457
        %v2522 = vmul.f32 %v2239, %v2458
        %v2523 = vmul.f32 %v2241, %v2459
        %v2524 = vmul.f32 %v2243, %v2460
        %v2525 = vmul.f32 %v2245, %v2461
        %v2526 = vmul.f32 %v2247, %v2462
        %v2527 = vmul.f32 %v2249, %v2463
        %v2528 = vmul.f32 %v2251, %v2464
        %v2529 = vmul.f32 %v2253, %v2465
        %v2530 = vmul.f32 %v2255, %v2466
        %v2531 = vmul.f32 %v2257, %v2467
        %v2532 = vmul.f32 %v2259, %v2468
        %v2533 = vmul.f32 %v2261, %v2469
        %v2534 = vmul.f32 %v2263, %v2470
        %v2535 = vmul.f32 %v2265, %v2471
        %v2536 = vmul.f32 %v2267, %v2472
        %v2537 = vmul.f32 %v2269, %v2473
        %v2538 = vmul.f32 %v2271, %v2474
        %v2539 = vmul.f32 %v2273, %v2475
        %v2540 = vmul.f32 %v2275, %v2476
        %v2541 = vmul.f32 %v2277, %v2477
        %v2542 = vmul.f32 %v2279, %v2478
        %v2543 = vmul.f32 %v2281, %v2479
        %v2544 = vmul.f32 %v2283, %v2480
        %v2545 = vmul.f32 %v2285, %v2481
        %v2546 = vmul.f32 %v2287, %v2482
        %v2547 = vmul.f32 %v2289, %v2483
        %v2548 = vmul.f32 %v2291, %v2484
        %v2549 = vmul.f32 %v2293, %v2485
        %v2550 = vpack.c.bf16 %v2487, %v2486
        %v2551 = vpack.c.bf16 %v2489, %v2488
        %v2552 = vpack.c.bf16 %v2491, %v2490
        %v2553 = vpack.c.bf16 %v2493, %v2492
        %v2554 = vpack.c.bf16 %v2495, %v2494
        %v2555 = vpack.c.bf16 %v2497, %v2496
        %v2556 = vpack.c.bf16 %v2499, %v2498
        %v2557 = vpack.c.bf16 %v2501, %v2500
        %v2558 = vpack.c.bf16 %v2503, %v2502
        %v2559 = vpack.c.bf16 %v2505, %v2504
        %v2560 = vpack.c.bf16 %v2507, %v2506
        %v2561 = vpack.c.bf16 %v2509, %v2508
        %v2562 = vpack.c.bf16 %v2511, %v2510
        %v2563 = vpack.c.bf16 %v2513, %v2512
        %v2564 = vpack.c.bf16 %v2515, %v2514
        %v2565 = vpack.c.bf16 %v2517, %v2516
        %v2566 = vpack.c.bf16 %v2519, %v2518
        %v2567 = vpack.c.bf16 %v2521, %v2520
        %v2568 = vpack.c.bf16 %v2523, %v2522
        %v2569 = vpack.c.bf16 %v2525, %v2524
        %v2570 = vpack.c.bf16 %v2527, %v2526
        %v2571 = vpack.c.bf16 %v2529, %v2528
        %v2572 = vpack.c.bf16 %v2531, %v2530
        %v2573 = vpack.c.bf16 %v2533, %v2532
        %v2574 = vpack.c.bf16 %v2535, %v2534
        %v2575 = vpack.c.bf16 %v2537, %v2536
        %v2576 = vpack.c.bf16 %v2539, %v2538
        %v2577 = vpack.c.bf16 %v2541, %v2540
        %v2578 = vpack.c.bf16 %v2543, %v2542
        %v2579 = vpack.c.bf16 %v2545, %v2544
        %v2580 = vpack.c.bf16 %v2547, %v2546
        %v2581 = vpack.c.bf16 %v2549, %v2548
        %2582 = vmatprep.subr.bf16.mxu0 0
        %2583 = vmatpush1.bf16.msra.mxu0 %v1179
        %2584 = vmatprep.subr.bf16.mxu0 0
        %2585 = vmatpush1.bf16.msra.mxu0 %v1182
        %2586 = vmatprep.subr.bf16.mxu0 0
        %2587 = vmatpush1.bf16.msra.mxu0 %v1185
        %2588 = vmatprep.subr.bf16.mxu0 0
        %2589 = vmatpush1.bf16.msra.mxu0 %v1188
        %2590 = vmatprep.subr.bf16.mxu0 0
        %2591 = vmatpush1.bf16.msra.mxu0 %v1191
        %2592 = vmatprep.subr.bf16.mxu0 0
        %2593 = vmatpush1.bf16.msra.mxu0 %v1194
        %2594 = vmatprep.subr.bf16.mxu0 0
        %2595 = vmatpush1.bf16.msra.mxu0 %v1197
        %2596 = vmatprep.subr.bf16.mxu0 0
        %2597 = vmatpush1.bf16.msra.mxu0 %v1200
        %2598 = vmatprep.subr.bf16.mxu0 0
        %2599 = vmatpush1.bf16.msra.mxu0 0
        %2600 = vmatprep.subr.bf16.mxu0 0
        %2601 = vmatpush1.bf16.msra.mxu0 0
        %2602 = vmatprep.subr.bf16.mxu0 0
        %2603 = vmatpush1.bf16.msra.mxu0 0
        %2604 = vmatprep.subr.bf16.mxu0 0
        %2605 = vmatpush1.bf16.msra.mxu0 0
        %2606 = vmatprep.subr.bf16.mxu0 0
        %2607 = vmatpush1.bf16.msra.mxu0 0
        %2608 = vmatprep.subr.bf16.mxu0 0
        %2609 = vmatpush1.bf16.msra.mxu0 0
        %2610 = vmatprep.subr.bf16.mxu0 0
        %2611 = vmatpush1.bf16.msra.mxu0 0
        %2612 = vmatprep.subr.bf16.mxu0 0
        %2613 = vmatpush1.bf16.msra.mxu0 0
        %2614 = vmatprep.mubr.bf16.mxu0 0
        %2615 = vmatmul.mubr.bf16.gmra.mrb[0].mxu0 %v2550
        %v2616 = vpop.f32.mrb[0].mxu0
        %v2617 = vadd.f32 0.0, %v2616
        %v2618 = vpop.f32.mrb[0].mxu0
        %v2619 = vpop.f32.mrb[0].mxu0
        %v2620 = vadd.f32 0.0, %v2619
        %v2621 = vpop.f32.mrb[0].mxu0
        %2622 = vmatprep.mubr.bf16.mxu0 0
        %2623 = vmatmul.mubr.bf16.gmra.mrb[0].mxu0 %v2551
        %v2624 = vpop.f32.mrb[0].mxu0
        %v2625 = vadd.f32 0.0, %v2624
        %v2626 = vpop.f32.mrb[0].mxu0
        %v2627 = vpop.f32.mrb[0].mxu0
        %v2628 = vadd.f32 0.0, %v2627
        %v2629 = vpop.f32.mrb[0].mxu0
        %2630 = vmatprep.mubr.bf16.mxu0 0
        %2631 = vmatmul.mubr.bf16.gmra.mrb[0].mxu0 %v2552
        %v2632 = vpop.f32.mrb[0].mxu0
        %v2633 = vadd.f32 0.0, %v2632
        %v2634 = vpop.f32.mrb[0].mxu0
        %v2635 = vpop.f32.mrb[0].mxu0
        %v2636 = vadd.f32 0.0, %v2635
        %v2637 = vpop.f32.mrb[0].mxu0
        %2638 = vmatprep.mubr.bf16.mxu0 0
        %2639 = vmatmul.mubr.bf16.gmra.mrb[0].mxu0 %v2553
        %v2640 = vpop.f32.mrb[0].mxu0
        %v2641 = vadd.f32 0.0, %v2640
        %v2642 = vpop.f32.mrb[0].mxu0
        %v2643 = vpop.f32.mrb[0].mxu0
        %v2644 = vadd.f32 0.0, %v2643
        %v2645 = vpop.f32.mrb[0].mxu0
        %2646 = vmatprep.mubr.bf16.mxu0 0
        %2647 = vmatmul.mubr.bf16.gmra.mrb[0].mxu0 %v2554
        %v2648 = vpop.f32.mrb[0].mxu0
        %v2649 = vadd.f32 0.0, %v2648
        %v2650 = vpop.f32.mrb[0].mxu0
        %v2651 = vpop.f32.mrb[0].mxu0
        %v2652 = vadd.f32 0.0, %v2651
        %v2653 = vpop.f32.mrb[0].mxu0
        %2654 = vmatprep.mubr.bf16.mxu0 0
        %2655 = vmatmul.mubr.bf16.gmra.mrb[0].mxu0 %v2555
        %v2656 = vpop.f32.mrb[0].mxu0
        %v2657 = vadd.f32 0.0, %v2656
        %v2658 = vpop.f32.mrb[0].mxu0
        %v2659 = vpop.f32.mrb[0].mxu0
        %v2660 = vadd.f32 0.0, %v2659
        %v2661 = vpop.f32.mrb[0].mxu0
        %2662 = vmatprep.mubr.bf16.mxu0 0
        %2663 = vmatmul.mubr.bf16.gmra.mrb[0].mxu0 %v2556
        %v2664 = vpop.f32.mrb[0].mxu0
        %v2665 = vadd.f32 0.0, %v2664
        %v2666 = vpop.f32.mrb[0].mxu0
        %v2667 = vpop.f32.mrb[0].mxu0
        %v2668 = vadd.f32 0.0, %v2667
        %v2669 = vpop.f32.mrb[0].mxu0
        %2670 = vmatprep.mubr.bf16.mxu0 0
        %2671 = vmatmul.mubr.bf16.gmra.mrb[0].mxu0 %v2557
        %v2672 = vpop.f32.mrb[0].mxu0
        %v2673 = vadd.f32 0.0, %v2672
        %v2674 = vpop.f32.mrb[0].mxu0
        %v2675 = vpop.f32.mrb[0].mxu0
        %v2676 = vadd.f32 0.0, %v2675
        %v2677 = vpop.f32.mrb[0].mxu0
        %2678 = vdwg.mxu0
        %2679 = vmatprep.subr.bf16.mxu0 0
        %2680 = vmatpush1.bf16.msra.mxu0 %v1322
        %2681 = vmatprep.subr.bf16.mxu0 0
        %2682 = vmatpush1.bf16.msra.mxu0 %v1324
        %2683 = vmatprep.subr.bf16.mxu0 0
        %2684 = vmatpush1.bf16.msra.mxu0 %v1326
        %2685 = vmatprep.subr.bf16.mxu0 0
        %2686 = vmatpush1.bf16.msra.mxu0 %v1328
        %2687 = vmatprep.subr.bf16.mxu0 0
        %2688 = vmatpush1.bf16.msra.mxu0 %v1330
        %2689 = vmatprep.subr.bf16.mxu0 0
        %2690 = vmatpush1.bf16.msra.mxu0 %v1332
        %2691 = vmatprep.subr.bf16.mxu0 0
        %2692 = vmatpush1.bf16.msra.mxu0 %v1334
        %2693 = vmatprep.subr.bf16.mxu0 0
        %2694 = vmatpush1.bf16.msra.mxu0 %v1336
        %2695 = vmatprep.subr.bf16.mxu0 0
        %2696 = vmatpush1.bf16.msra.mxu0 0
        %2697 = vmatprep.subr.bf16.mxu0 0
        %2698 = vmatpush1.bf16.msra.mxu0 0
        %2699 = vmatprep.subr.bf16.mxu0 0
        %2700 = vmatpush1.bf16.msra.mxu0 0
        %2701 = vmatprep.subr.bf16.mxu0 0
        %2702 = vmatpush1.bf16.msra.mxu0 0
        %2703 = vmatprep.subr.bf16.mxu0 0
        %2704 = vmatpush1.bf16.msra.mxu0 0
        %2705 = vmatprep.subr.bf16.mxu0 0
        %2706 = vmatpush1.bf16.msra.mxu0 0
        %2707 = vmatprep.subr.bf16.mxu0 0
        %2708 = vmatpush1.bf16.msra.mxu0 0
        %2709 = vmatprep.subr.bf16.mxu0 0
        %2710 = vmatpush1.bf16.msra.mxu0 0
        %2711 = vmatprep.mubr.bf16.mxu0 0
        %2712 = vmatmul.mubr.bf16.gmra.mrb[0].mxu0 %v2558
        %v2713 = vpop.f32.mrb[0].mxu0
        %v2714 = vadd.f32 0.0, %v2713
        %v2715 = vpop.f32.mrb[0].mxu0
        %v2716 = vpop.f32.mrb[0].mxu0
        %v2717 = vadd.f32 0.0, %v2716
        %v2718 = vpop.f32.mrb[0].mxu0
        %2719 = vmatprep.mubr.bf16.mxu0 0
        %2720 = vmatmul.mubr.bf16.gmra.mrb[0].mxu0 %v2559
        %v2721 = vpop.f32.mrb[0].mxu0
        %v2722 = vadd.f32 0.0, %v2721
        %v2723 = vpop.f32.mrb[0].mxu0
        %v2724 = vpop.f32.mrb[0].mxu0
        %v2725 = vadd.f32 0.0, %v2724
        %v2726 = vpop.f32.mrb[0].mxu0
        %2727 = vmatprep.mubr.bf16.mxu0 0
        %2728 = vmatmul.mubr.bf16.gmra.mrb[0].mxu0 %v2560
        %v2729 = vpop.f32.mrb[0].mxu0
        %v2730 = vadd.f32 0.0, %v2729
        %v2731 = vpop.f32.mrb[0].mxu0
        %v2732 = vpop.f32.mrb[0].mxu0
        %v2733 = vadd.f32 0.0, %v2732
        %v2734 = vpop.f32.mrb[0].mxu0
        %2735 = vmatprep.mubr.bf16.mxu0 0
        %2736 = vmatmul.mubr.bf16.gmra.mrb[0].mxu0 %v2561
        %v2737 = vpop.f32.mrb[0].mxu0
        %v2738 = vadd.f32 0.0, %v2737
        %v2739 = vpop.f32.mrb[0].mxu0
        %v2740 = vpop.f32.mrb[0].mxu0
        %v2741 = vadd.f32 0.0, %v2740
        %v2742 = vpop.f32.mrb[0].mxu0
        %2743 = vmatprep.mubr.bf16.mxu0 0
        %2744 = vmatmul.mubr.bf16.gmra.mrb[0].mxu0 %v2562
        %v2745 = vpop.f32.mrb[0].mxu0
        %v2746 = vadd.f32 0.0, %v2745
        %v2747 = vpop.f32.mrb[0].mxu0
        %v2748 = vpop.f32.mrb[0].mxu0
        %v2749 = vadd.f32 0.0, %v2748
        %v2750 = vpop.f32.mrb[0].mxu0
        %2751 = vmatprep.mubr.bf16.mxu0 0
        %2752 = vmatmul.mubr.bf16.gmra.mrb[0].mxu0 %v2563
        %v2753 = vpop.f32.mrb[0].mxu0
        %v2754 = vadd.f32 0.0, %v2753
        %v2755 = vpop.f32.mrb[0].mxu0
        %v2756 = vpop.f32.mrb[0].mxu0
        %v2757 = vadd.f32 0.0, %v2756
        %v2758 = vpop.f32.mrb[0].mxu0
        %2759 = vmatprep.mubr.bf16.mxu0 0
        %2760 = vmatmul.mubr.bf16.gmra.mrb[0].mxu0 %v2564
        %v2761 = vpop.f32.mrb[0].mxu0
        %v2762 = vadd.f32 0.0, %v2761
        %v2763 = vpop.f32.mrb[0].mxu0
        %v2764 = vpop.f32.mrb[0].mxu0
        %v2765 = vadd.f32 0.0, %v2764
        %v2766 = vpop.f32.mrb[0].mxu0
        %2767 = vmatprep.mubr.bf16.mxu0 0
        %2768 = vmatmul.mubr.bf16.gmra.mrb[0].mxu0 %v2565
        %v2769 = vpop.f32.mrb[0].mxu0
        %v2770 = vadd.f32 0.0, %v2769
        %v2771 = vpop.f32.mrb[0].mxu0
        %v2772 = vpop.f32.mrb[0].mxu0
        %v2773 = vadd.f32 0.0, %v2772
        %v2774 = vpop.f32.mrb[0].mxu0
        %2775 = vdwg.mxu0
        %2776 = vmatprep.subr.bf16.mxu0 0
        %2777 = vmatpush1.bf16.msra.mxu0 %v1346
        %2778 = vmatprep.subr.bf16.mxu0 0
        %2779 = vmatpush1.bf16.msra.mxu0 %v1348
        %2780 = vmatprep.subr.bf16.mxu0 0
        %2781 = vmatpush1.bf16.msra.mxu0 %v1350
        %2782 = vmatprep.subr.bf16.mxu0 0
        %2783 = vmatpush1.bf16.msra.mxu0 %v1352
        %2784 = vmatprep.subr.bf16.mxu0 0
        %2785 = vmatpush1.bf16.msra.mxu0 %v1354
        %2786 = vmatprep.subr.bf16.mxu0 0
        %2787 = vmatpush1.bf16.msra.mxu0 %v1356
        %2788 = vmatprep.subr.bf16.mxu0 0
        %2789 = vmatpush1.bf16.msra.mxu0 %v1358
        %2790 = vmatprep.subr.bf16.mxu0 0
        %2791 = vmatpush1.bf16.msra.mxu0 %v1360
        %2792 = vmatprep.subr.bf16.mxu0 0
        %2793 = vmatpush1.bf16.msra.mxu0 0
        %2794 = vmatprep.subr.bf16.mxu0 0
        %2795 = vmatpush1.bf16.msra.mxu0 0
        %2796 = vmatprep.subr.bf16.mxu0 0
        %2797 = vmatpush1.bf16.msra.mxu0 0
        %2798 = vmatprep.subr.bf16.mxu0 0
        %2799 = vmatpush1.bf16.msra.mxu0 0
        %2800 = vmatprep.subr.bf16.mxu0 0
        %2801 = vmatpush1.bf16.msra.mxu0 0
        %2802 = vmatprep.subr.bf16.mxu0 0
        %2803 = vmatpush1.bf16.msra.mxu0 0
        %2804 = vmatprep.subr.bf16.mxu0 0
        %2805 = vmatpush1.bf16.msra.mxu0 0
        %2806 = vmatprep.subr.bf16.mxu0 0
        %2807 = vmatpush1.bf16.msra.mxu0 0
        %2808 = vmatprep.mubr.bf16.mxu0 0
        %2809 = vmatmul.mubr.bf16.gmra.mrb[0].mxu0 %v2566
        %v2810 = vpop.f32.mrb[0].mxu0
        %v2811 = vadd.f32 0.0, %v2810
        %v2812 = vpop.f32.mrb[0].mxu0
        %v2813 = vpop.f32.mrb[0].mxu0
        %v2814 = vadd.f32 0.0, %v2813
        %v2815 = vpop.f32.mrb[0].mxu0
        %2816 = vmatprep.mubr.bf16.mxu0 0
        %2817 = vmatmul.mubr.bf16.gmra.mrb[0].mxu0 %v2567
        %v2818 = vpop.f32.mrb[0].mxu0
        %v2819 = vadd.f32 0.0, %v2818
        %v2820 = vpop.f32.mrb[0].mxu0
        %v2821 = vpop.f32.mrb[0].mxu0
        %v2822 = vadd.f32 0.0, %v2821
        %v2823 = vpop.f32.mrb[0].mxu0
        %2824 = vmatprep.mubr.bf16.mxu0 0
        %2825 = vmatmul.mubr.bf16.gmra.mrb[0].mxu0 %v2568
        %v2826 = vpop.f32.mrb[0].mxu0
        %v2827 = vadd.f32 0.0, %v2826
        %v2828 = vpop.f32.mrb[0].mxu0
        %v2829 = vpop.f32.mrb[0].mxu0
        %v2830 = vadd.f32 0.0, %v2829
        %v2831 = vpop.f32.mrb[0].mxu0
        %2832 = vmatprep.mubr.bf16.mxu0 0
        %2833 = vmatmul.mubr.bf16.gmra.mrb[0].mxu0 %v2569
        %v2834 = vpop.f32.mrb[0].mxu0
        %v2835 = vadd.f32 0.0, %v2834
        %v2836 = vpop.f32.mrb[0].mxu0
        %v2837 = vpop.f32.mrb[0].mxu0
        %v2838 = vadd.f32 0.0, %v2837
        %v2839 = vpop.f32.mrb[0].mxu0
        %2840 = vmatprep.mubr.bf16.mxu0 0
        %2841 = vmatmul.mubr.bf16.gmra.mrb[0].mxu0 %v2570
        %v2842 = vpop.f32.mrb[0].mxu0
        %v2843 = vadd.f32 0.0, %v2842
        %v2844 = vpop.f32.mrb[0].mxu0
        %v2845 = vpop.f32.mrb[0].mxu0
        %v2846 = vadd.f32 0.0, %v2845
        %v2847 = vpop.f32.mrb[0].mxu0
        %2848 = vmatprep.mubr.bf16.mxu0 0
        %2849 = vmatmul.mubr.bf16.gmra.mrb[0].mxu0 %v2571
        %v2850 = vpop.f32.mrb[0].mxu0
        %v2851 = vadd.f32 0.0, %v2850
        %v2852 = vpop.f32.mrb[0].mxu0
        %v2853 = vpop.f32.mrb[0].mxu0
        %v2854 = vadd.f32 0.0, %v2853
        %v2855 = vpop.f32.mrb[0].mxu0
        %2856 = vmatprep.mubr.bf16.mxu0 0
        %2857 = vmatmul.mubr.bf16.gmra.mrb[0].mxu0 %v2572
        %v2858 = vpop.f32.mrb[0].mxu0
        %v2859 = vadd.f32 0.0, %v2858
        %v2860 = vpop.f32.mrb[0].mxu0
        %v2861 = vpop.f32.mrb[0].mxu0
        %v2862 = vadd.f32 0.0, %v2861
        %v2863 = vpop.f32.mrb[0].mxu0
        %2864 = vmatprep.mubr.bf16.mxu0 0
        %2865 = vmatmul.mubr.bf16.gmra.mrb[0].mxu0 %v2573
        %v2866 = vpop.f32.mrb[0].mxu0
        %v2867 = vadd.f32 0.0, %v2866
        %v2868 = vpop.f32.mrb[0].mxu0
        %v2869 = vpop.f32.mrb[0].mxu0
        %v2870 = vadd.f32 0.0, %v2869
        %v2871 = vpop.f32.mrb[0].mxu0
        %2872 = vdwg.mxu0
        %2873 = vmatprep.subr.bf16.mxu0 0
        %2874 = vmatpush1.bf16.msra.mxu0 %v1370
        %2875 = vmatprep.subr.bf16.mxu0 0
        %2876 = vmatpush1.bf16.msra.mxu0 %v1372
        %2877 = vmatprep.subr.bf16.mxu0 0
        %2878 = vmatpush1.bf16.msra.mxu0 %v1374
        %2879 = vmatprep.subr.bf16.mxu0 0
        %2880 = vmatpush1.bf16.msra.mxu0 %v1376
        %2881 = vmatprep.subr.bf16.mxu0 0
        %2882 = vmatpush1.bf16.msra.mxu0 %v1378
        %2883 = vmatprep.subr.bf16.mxu0 0
        %2884 = vmatpush1.bf16.msra.mxu0 %v1380
        %2885 = vmatprep.subr.bf16.mxu0 0
        %2886 = vmatpush1.bf16.msra.mxu0 %v1382
        %2887 = vmatprep.subr.bf16.mxu0 0
        %2888 = vmatpush1.bf16.msra.mxu0 %v1384
        %2889 = vmatprep.subr.bf16.mxu0 0
        %2890 = vmatpush1.bf16.msra.mxu0 0
        %2891 = vmatprep.subr.bf16.mxu0 0
        %2892 = vmatpush1.bf16.msra.mxu0 0
        %2893 = vmatprep.subr.bf16.mxu0 0
        %2894 = vmatpush1.bf16.msra.mxu0 0
        %2895 = vmatprep.subr.bf16.mxu0 0
        %2896 = vmatpush1.bf16.msra.mxu0 0
        %2897 = vmatprep.subr.bf16.mxu0 0
        %2898 = vmatpush1.bf16.msra.mxu0 0
        %2899 = vmatprep.subr.bf16.mxu0 0
        %2900 = vmatpush1.bf16.msra.mxu0 0
        %2901 = vmatprep.subr.bf16.mxu0 0
        %2902 = vmatpush1.bf16.msra.mxu0 0
        %2903 = vmatprep.subr.bf16.mxu0 0
        %2904 = vmatpush1.bf16.msra.mxu0 0
        %2905 = vmatprep.mubr.bf16.mxu0 0
        %2906 = vmatmul.mubr.bf16.gmra.mrb[0].mxu0 %v2574
        %v2907 = vpop.f32.mrb[0].mxu0
        %v2908 = vadd.f32 0.0, %v2907
        %v2909 = vpop.f32.mrb[0].mxu0
        %v2910 = vpop.f32.mrb[0].mxu0
        %v2911 = vadd.f32 0.0, %v2910
        %v2912 = vpop.f32.mrb[0].mxu0
        %2913 = vmatprep.mubr.bf16.mxu0 0
        %2914 = vmatmul.mubr.bf16.gmra.mrb[0].mxu0 %v2575
        %v2915 = vpop.f32.mrb[0].mxu0
        %v2916 = vadd.f32 0.0, %v2915
        %v2917 = vpop.f32.mrb[0].mxu0
        %v2918 = vpop.f32.mrb[0].mxu0
        %v2919 = vadd.f32 0.0, %v2918
        %v2920 = vpop.f32.mrb[0].mxu0
        %2921 = vmatprep.mubr.bf16.mxu0 0
        %2922 = vmatmul.mubr.bf16.gmra.mrb[0].mxu0 %v2576
        %v2923 = vpop.f32.mrb[0].mxu0
        %v2924 = vadd.f32 0.0, %v2923
        %v2925 = vpop.f32.mrb[0].mxu0
        %v2926 = vpop.f32.mrb[0].mxu0
        %v2927 = vadd.f32 0.0, %v2926
        %v2928 = vpop.f32.mrb[0].mxu0
        %2929 = vmatprep.mubr.bf16.mxu0 0
        %2930 = vmatmul.mubr.bf16.gmra.mrb[0].mxu0 %v2577
        %v2931 = vpop.f32.mrb[0].mxu0
        %v2932 = vadd.f32 0.0, %v2931
        %v2933 = vpop.f32.mrb[0].mxu0
        %v2934 = vpop.f32.mrb[0].mxu0
        %v2935 = vadd.f32 0.0, %v2934
        %v2936 = vpop.f32.mrb[0].mxu0
        %2937 = vmatprep.mubr.bf16.mxu0 0
        %2938 = vmatmul.mubr.bf16.gmra.mrb[0].mxu0 %v2578
        %v2939 = vpop.f32.mrb[0].mxu0
        %v2940 = vadd.f32 0.0, %v2939
        %v2941 = vpop.f32.mrb[0].mxu0
        %v2942 = vpop.f32.mrb[0].mxu0
        %v2943 = vadd.f32 0.0, %v2942
        %v2944 = vpop.f32.mrb[0].mxu0
        %2945 = vmatprep.mubr.bf16.mxu0 0
        %2946 = vmatmul.mubr.bf16.gmra.mrb[0].mxu0 %v2579
        %v2947 = vpop.f32.mrb[0].mxu0
        %v2948 = vadd.f32 0.0, %v2947
        %v2949 = vpop.f32.mrb[0].mxu0
        %v2950 = vpop.f32.mrb[0].mxu0
        %v2951 = vadd.f32 0.0, %v2950
        %v2952 = vpop.f32.mrb[0].mxu0
        %2953 = vmatprep.mubr.bf16.mxu0 0
        %2954 = vmatmul.mubr.bf16.gmra.mrb[0].mxu0 %v2580
        %v2955 = vpop.f32.mrb[0].mxu0
        %v2956 = vadd.f32 0.0, %v2955
        %v2957 = vpop.f32.mrb[0].mxu0
        %v2958 = vpop.f32.mrb[0].mxu0
        %v2959 = vadd.f32 0.0, %v2958
        %v2960 = vpop.f32.mrb[0].mxu0
        %2961 = vmatprep.mubr.bf16.mxu0 0
        %2962 = vmatmul.mubr.bf16.gmra.mrb[0].mxu0 %v2581
        %v2963 = vpop.f32.mrb[0].mxu0
        %v2964 = vadd.f32 0.0, %v2963
        %v2965 = vpop.f32.mrb[0].mxu0
        %v2966 = vpop.f32.mrb[0].mxu0
        %v2967 = vadd.f32 0.0, %v2966
        %v2968 = vpop.f32.mrb[0].mxu0
        %2969 = vdwg.mxu0
        %2986 = vrot.lane.b32.xlu0 %v2714, 32
        %v2987 = vpop.permute.xlu0 %2986
        %2988 = vrot.lane.b32.xlu0 %v2717, 32
        %v2989 = vpop.permute.xlu0 %2988
        %2990 = vrot.lane.b32.xlu0 %v2722, 32
        %v2991 = vpop.permute.xlu0 %2990
        %2992 = vrot.lane.b32.xlu0 %v2725, 32
        %v2993 = vpop.permute.xlu0 %2992
        %2994 = vrot.lane.b32.xlu0 %v2730, 32
        %v2995 = vpop.permute.xlu0 %2994
        %2996 = vrot.lane.b32.xlu0 %v2733, 32
        %v2997 = vpop.permute.xlu0 %2996
        %2998 = vrot.lane.b32.xlu0 %v2738, 32
        %v2999 = vpop.permute.xlu0 %2998
        %3000 = vrot.lane.b32.xlu0 %v2741, 32
        %v3001 = vpop.permute.xlu0 %3000
        %3002 = vrot.lane.b32.xlu0 %v2746, 32
        %v3003 = vpop.permute.xlu0 %3002
        %3004 = vrot.lane.b32.xlu0 %v2749, 32
        %v3005 = vpop.permute.xlu0 %3004
        %3006 = vrot.lane.b32.xlu0 %v2754, 32
        %v3007 = vpop.permute.xlu0 %3006
        %3008 = vrot.lane.b32.xlu0 %v2757, 32
        %v3009 = vpop.permute.xlu0 %3008
        %3010 = vrot.lane.b32.xlu0 %v2762, 32
        %v3011 = vpop.permute.xlu0 %3010
        %3012 = vrot.lane.b32.xlu0 %v2765, 32
        %v3013 = vpop.permute.xlu0 %3012
        %3014 = vrot.lane.b32.xlu0 %v2770, 32
        %v3015 = vpop.permute.xlu0 %3014
        %3016 = vrot.lane.b32.xlu0 %v2773, 32
        %v3017 = vpop.permute.xlu0 %3016
        %3050 = vrot.lane.b32.xlu0 %v2811, 64
        %v3051 = vpop.permute.xlu0 %3050
        %3052 = vrot.lane.b32.xlu0 %v2814, 64
        %v3053 = vpop.permute.xlu0 %3052
        %3054 = vrot.lane.b32.xlu0 %v2819, 64
        %v3055 = vpop.permute.xlu0 %3054
        %3056 = vrot.lane.b32.xlu0 %v2822, 64
        %v3057 = vpop.permute.xlu0 %3056
        %3058 = vrot.lane.b32.xlu0 %v2827, 64
        %v3059 = vpop.permute.xlu0 %3058
        %3060 = vrot.lane.b32.xlu0 %v2830, 64
        %v3061 = vpop.permute.xlu0 %3060
        %3062 = vrot.lane.b32.xlu0 %v2835, 64
        %v3063 = vpop.permute.xlu0 %3062
        %3064 = vrot.lane.b32.xlu0 %v2838, 64
        %v3065 = vpop.permute.xlu0 %3064
        %3066 = vrot.lane.b32.xlu0 %v2843, 64
        %v3067 = vpop.permute.xlu0 %3066
        %3068 = vrot.lane.b32.xlu0 %v2846, 64
        %v3069 = vpop.permute.xlu0 %3068
        %3070 = vrot.lane.b32.xlu0 %v2851, 64
        %v3071 = vpop.permute.xlu0 %3070
        %3072 = vrot.lane.b32.xlu0 %v2854, 64
        %v3073 = vpop.permute.xlu0 %3072
        %3074 = vrot.lane.b32.xlu0 %v2859, 64
        %v3075 = vpop.permute.xlu0 %3074
        %3076 = vrot.lane.b32.xlu0 %v2862, 64
        %v3077 = vpop.permute.xlu0 %3076
        %3078 = vrot.lane.b32.xlu0 %v2867, 64
        %v3079 = vpop.permute.xlu0 %3078
        %3080 = vrot.lane.b32.xlu0 %v2870, 64
        %v3081 = vpop.permute.xlu0 %3080
        %3114 = vrot.lane.b32.xlu0 %v2908, 96
        %v3115 = vpop.permute.xlu0 %3114
        %3116 = vrot.lane.b32.xlu0 %v2911, 96
        %v3117 = vpop.permute.xlu0 %3116
        %3118 = vrot.lane.b32.xlu0 %v2916, 96
        %v3119 = vpop.permute.xlu0 %3118
        %3120 = vrot.lane.b32.xlu0 %v2919, 96
        %v3121 = vpop.permute.xlu0 %3120
        %3122 = vrot.lane.b32.xlu0 %v2924, 96
        %v3123 = vpop.permute.xlu0 %3122
        %3124 = vrot.lane.b32.xlu0 %v2927, 96
        %v3125 = vpop.permute.xlu0 %3124
        %3126 = vrot.lane.b32.xlu0 %v2932, 96
        %v3127 = vpop.permute.xlu0 %3126
        %3128 = vrot.lane.b32.xlu0 %v2935, 96
        %v3129 = vpop.permute.xlu0 %3128
        %3130 = vrot.lane.b32.xlu0 %v2940, 96
        %v3131 = vpop.permute.xlu0 %3130
        %3132 = vrot.lane.b32.xlu0 %v2943, 96
        %v3133 = vpop.permute.xlu0 %3132
        %3134 = vrot.lane.b32.xlu0 %v2948, 96
        %v3135 = vpop.permute.xlu0 %3134
        %3136 = vrot.lane.b32.xlu0 %v2951, 96
        %v3137 = vpop.permute.xlu0 %3136
        %3138 = vrot.lane.b32.xlu0 %v2956, 96
        %v3139 = vpop.permute.xlu0 %3138
        %3140 = vrot.lane.b32.xlu0 %v2959, 96
        %v3141 = vpop.permute.xlu0 %3140
        %3142 = vrot.lane.b32.xlu0 %v2964, 96
        %v3143 = vpop.permute.xlu0 %3142
        %3144 = vrot.lane.b32.xlu0 %v2967, 96
        %v3145 = vpop.permute.xlu0 %3144
        %v3162 = vsel %vm1393, %v2617, %v2987
        %v3163 = vsel %vm1393, %v2620, %v2989
        %v3164 = vsel %vm1393, %v2625, %v2991
        %v3165 = vsel %vm1393, %v2628, %v2993
        %v3166 = vsel %vm1393, %v2633, %v2995
        %v3167 = vsel %vm1393, %v2636, %v2997
        %v3168 = vsel %vm1393, %v2641, %v2999
        %v3169 = vsel %vm1393, %v2644, %v3001
        %v3170 = vsel %vm1393, %v2649, %v3003
        %v3171 = vsel %vm1393, %v2652, %v3005
        %v3172 = vsel %vm1393, %v2657, %v3007
        %v3173 = vsel %vm1393, %v2660, %v3009
        %v3174 = vsel %vm1393, %v2665, %v3011
        %v3175 = vsel %vm1393, %v2668, %v3013
        %v3176 = vsel %vm1393, %v2673, %v3015
        %v3177 = vsel %vm1393, %v2676, %v3017
        %vm3178 = vcmask 523264
        %v3179 = vsel %vm3178, %v3162, %v3051
        %v3180 = vsel %vm3178, %v3163, %v3053
        %v3181 = vsel %vm3178, %v3164, %v3055
        %v3182 = vsel %vm3178, %v3165, %v3057
        %v3183 = vsel %vm3178, %v3166, %v3059
        %v3184 = vsel %vm3178, %v3167, %v3061
        %v3185 = vsel %vm3178, %v3168, %v3063
        %v3186 = vsel %vm3178, %v3169, %v3065
        %v3187 = vsel %vm3178, %v3170, %v3067
        %v3188 = vsel %vm3178, %v3171, %v3069
        %v3189 = vsel %vm3178, %v3172, %v3071
        %v3190 = vsel %vm3178, %v3173, %v3073
        %v3191 = vsel %vm3178, %v3174, %v3075
        %v3192 = vsel %vm3178, %v3175, %v3077
        %v3193 = vsel %vm3178, %v3176, %v3079
        %v3194 = vsel %vm3178, %v3177, %v3081
        %vm3195 = vcmask 785408
        %v3196 = vsel %vm3195, %v3179, %v3115
        %v3197 = vsel %vm3195, %v3180, %v3117
        %v3198 = vsel %vm3195, %v3181, %v3119
        %v3199 = vsel %vm3195, %v3182, %v3121
        %v3200 = vsel %vm3195, %v3183, %v3123
        %v3201 = vsel %vm3195, %v3184, %v3125
        %v3202 = vsel %vm3195, %v3185, %v3127
        %v3203 = vsel %vm3195, %v3186, %v3129
        %v3204 = vsel %vm3195, %v3187, %v3131
        %v3205 = vsel %vm3195, %v3188, %v3133
        %v3206 = vsel %vm3195, %v3189, %v3135
        %v3207 = vsel %vm3195, %v3190, %v3137
        %v3208 = vsel %vm3195, %v3191, %v3139
        %v3209 = vsel %vm3195, %v3192, %v3141
        %v3210 = vsel %vm3195, %v3193, %v3143
        %v3211 = vsel %vm3195, %v3194, %v3145
        %v3212 = vpack.c.bf16 %v3197, %v3196
        %v3213 = vpack.c.bf16 %v3199, %v3198
        %v3214 = vpack.c.bf16 %v3201, %v3200
        %v3215 = vpack.c.bf16 %v3203, %v3202
        %v3216 = vpack.c.bf16 %v3205, %v3204
        %v3217 = vpack.c.bf16 %v3207, %v3206
        %v3218 = vpack.c.bf16 %v3209, %v3208
        %v3219 = vpack.c.bf16 %v3211, %v3210
        %v3220 = vld [vmem:[#allocation10] sm:$0xf]
        %v3221 = vld [vmem:[#allocation10 + $0x4] sm:$0xf]
        %v3222 = vld [vmem:[#allocation10 + $0x8] sm:$0xf]
        %v3223 = vld [vmem:[#allocation10 + $0xc] sm:$0xf]
        %v3224 = vld [vmem:[#allocation10 + $0x10] sm:$0xf]
        %v3225 = vld [vmem:[#allocation10 + $0x14] sm:$0xf]
        %v3226 = vld [vmem:[#allocation10 + $0x18] sm:$0xf]
        %v3227 = vld [vmem:[#allocation10 + $0x1c] sm:$0xf]
        %v3228 = vld [vmem:[#allocation10 + $0x20] sm:$0xf]
        %v3229 = vld [vmem:[#allocation10 + $0x24] sm:$0xf]
        %v3230 = vld [vmem:[#allocation10 + $0x28] sm:$0xf]
        %v3231 = vld [vmem:[#allocation10 + $0x2c] sm:$0xf]
        %v3232 = vld [vmem:[#allocation10 + $0x30] sm:$0xf]
        %v3233 = vld [vmem:[#allocation10 + $0x34] sm:$0xf]
        %v3234 = vld [vmem:[#allocation10 + $0x38] sm:$0xf]
        %v3235 = vld [vmem:[#allocation10 + $0x3c] sm:$0xf]
        %v3252 = vunpack.c.l.b16 %v3220
        %v3253 = vunpack.c.l.b16 %v3221
        %v3254 = vunpack.c.l.b16 %v3222
        %v3255 = vunpack.c.l.b16 %v3223
        %v3256 = vunpack.c.l.b16 %v3224
        %v3257 = vunpack.c.l.b16 %v3225
        %v3258 = vunpack.c.l.b16 %v3226
        %v3259 = vunpack.c.l.b16 %v3227
        %v3260 = vunpack.c.l.b16 %v3228
        %v3261 = vunpack.c.l.b16 %v3229
        %v3262 = vunpack.c.l.b16 %v3230
        %v3263 = vunpack.c.l.b16 %v3231
        %v3264 = vunpack.c.l.b16 %v3232
        %v3265 = vunpack.c.l.b16 %v3233
        %v3266 = vunpack.c.l.b16 %v3234
        %v3267 = vunpack.c.l.b16 %v3235
        %v3268 = vpack.c.b16 %v3253, %v3252
        %v3269 = vpack.c.b16 %v3255, %v3254
        %v3270 = vpack.c.b16 %v3257, %v3256
        %v3271 = vpack.c.b16 %v3259, %v3258
        %v3272 = vpack.c.b16 %v3261, %v3260
        %v3273 = vpack.c.b16 %v3263, %v3262
        %v3274 = vpack.c.b16 %v3265, %v3264
        %v3275 = vpack.c.b16 %v3267, %v3266
        %3284 = vmatprep.subr.bf16.mxu0 0
        %3285 = vmatpush1.bf16.msra.mxu0 %v3268
        %3286 = vmatprep.subr.bf16.mxu0 0
        %3287 = vmatpush1.bf16.msra.mxu0 %v3269
        %3288 = vmatprep.subr.bf16.mxu0 0
        %3289 = vmatpush1.bf16.msra.mxu0 %v3270
        %3290 = vmatprep.subr.bf16.mxu0 0
        %3291 = vmatpush1.bf16.msra.mxu0 %v3271
        %3292 = vmatprep.subr.bf16.mxu0 0
        %3293 = vmatpush1.bf16.msra.mxu0 %v3272
        %3294 = vmatprep.subr.bf16.mxu0 0
        %3295 = vmatpush1.bf16.msra.mxu0 %v3273
        %3296 = vmatprep.subr.bf16.mxu0 0
        %3297 = vmatpush1.bf16.msra.mxu0 %v3274
        %3298 = vmatprep.subr.bf16.mxu0 0
        %3299 = vmatpush1.bf16.msra.mxu0 %v3275
        %3300 = vmatprep.subr.bf16.mxu0 0
        %3301 = vmatpush1.bf16.msra.mxu0 0
        %3302 = vmatprep.subr.bf16.mxu0 0
        %3303 = vmatpush1.bf16.msra.mxu0 0
        %3304 = vmatprep.subr.bf16.mxu0 0
        %3305 = vmatpush1.bf16.msra.mxu0 0
        %3306 = vmatprep.subr.bf16.mxu0 0
        %3307 = vmatpush1.bf16.msra.mxu0 0
        %3308 = vmatprep.subr.bf16.mxu0 0
        %3309 = vmatpush1.bf16.msra.mxu0 0
        %3310 = vmatprep.subr.bf16.mxu0 0
        %3311 = vmatpush1.bf16.msra.mxu0 0
        %3312 = vmatprep.subr.bf16.mxu0 0
        %3313 = vmatpush1.bf16.msra.mxu0 0
        %3314 = vmatprep.subr.bf16.mxu0 0
        %3315 = vmatpush1.bf16.msra.mxu0 0
        %3316 = vmatprep.mubr.bf16.mxu0 0
        %3317 = vmatmul.mubr.bf16.gmra.mrb[0].mxu0 %v3212
        %v3318 = vpop.f32.mrb[0].mxu0
        %v3319 = vadd.f32 0.0, %v3318
        %v3320 = vpop.f32.mrb[0].mxu0
        %v3321 = vpop.f32.mrb[0].mxu0
        %v3322 = vadd.f32 0.0, %v3321
        %v3323 = vpop.f32.mrb[0].mxu0
        %3324 = vmatprep.mubr.bf16.mxu0 0
        %3325 = vmatmul.mubr.bf16.gmra.mrb[0].mxu0 %v3213
        %v3326 = vpop.f32.mrb[0].mxu0
        %v3327 = vadd.f32 0.0, %v3326
        %v3328 = vpop.f32.mrb[0].mxu0
        %v3329 = vpop.f32.mrb[0].mxu0
        %v3330 = vadd.f32 0.0, %v3329
        %v3331 = vpop.f32.mrb[0].mxu0
        %3332 = vmatprep.mubr.bf16.mxu0 0
        %3333 = vmatmul.mubr.bf16.gmra.mrb[0].mxu0 %v3214
        %v3334 = vpop.f32.mrb[0].mxu0
        %v3335 = vadd.f32 0.0, %v3334
        %v3336 = vpop.f32.mrb[0].mxu0
        %v3337 = vpop.f32.mrb[0].mxu0
        %v3338 = vadd.f32 0.0, %v3337
        %v3339 = vpop.f32.mrb[0].mxu0
        %3340 = vmatprep.mubr.bf16.mxu0 0
        %3341 = vmatmul.mubr.bf16.gmra.mrb[0].mxu0 %v3215
        %v3342 = vpop.f32.mrb[0].mxu0
        %v3343 = vadd.f32 0.0, %v3342
        %v3344 = vpop.f32.mrb[0].mxu0
        %v3345 = vpop.f32.mrb[0].mxu0
        %v3346 = vadd.f32 0.0, %v3345
        %v3347 = vpop.f32.mrb[0].mxu0
        %3348 = vmatprep.mubr.bf16.mxu0 0
        %3349 = vmatmul.mubr.bf16.gmra.mrb[0].mxu0 %v3216
        %v3350 = vpop.f32.mrb[0].mxu0
        %v3351 = vadd.f32 0.0, %v3350
        %v3352 = vpop.f32.mrb[0].mxu0
        %v3353 = vpop.f32.mrb[0].mxu0
        %v3354 = vadd.f32 0.0, %v3353
        %v3355 = vpop.f32.mrb[0].mxu0
        %3356 = vmatprep.mubr.bf16.mxu0 0
        %3357 = vmatmul.mubr.bf16.gmra.mrb[0].mxu0 %v3217
        %v3358 = vpop.f32.mrb[0].mxu0
        %v3359 = vadd.f32 0.0, %v3358
        %v3360 = vpop.f32.mrb[0].mxu0
        %v3361 = vpop.f32.mrb[0].mxu0
        %v3362 = vadd.f32 0.0, %v3361
        %v3363 = vpop.f32.mrb[0].mxu0
        %3364 = vmatprep.mubr.bf16.mxu0 0
        %3365 = vmatmul.mubr.bf16.gmra.mrb[0].mxu0 %v3218
        %v3366 = vpop.f32.mrb[0].mxu0
        %v3367 = vadd.f32 0.0, %v3366
        %v3368 = vpop.f32.mrb[0].mxu0
        %v3369 = vpop.f32.mrb[0].mxu0
        %v3370 = vadd.f32 0.0, %v3369
        %v3371 = vpop.f32.mrb[0].mxu0
        %3372 = vmatprep.mubr.bf16.mxu0 0
        %3373 = vmatmul.mubr.bf16.gmra.mrb[0].mxu0 %v3219
        %v3374 = vpop.f32.mrb[0].mxu0
        %v3375 = vadd.f32 0.0, %v3374
        %v3376 = vpop.f32.mrb[0].mxu0
        %v3377 = vpop.f32.mrb[0].mxu0
        %v3378 = vadd.f32 0.0, %v3377
        %v3379 = vpop.f32.mrb[0].mxu0
        %3380 = vdwg.mxu0
        %v3381 = vadd.f32 %v543, %v3319
        %v3382 = vadd.f32 %v544, %v3322
        %v3383 = vadd.f32 %v545, %v3327
        %v3384 = vadd.f32 %v546, %v3330
        %v3385 = vadd.f32 %v547, %v3335
        %v3386 = vadd.f32 %v548, %v3338
        %v3387 = vadd.f32 %v549, %v3343
        %v3388 = vadd.f32 %v550, %v3346
        %v3389 = vadd.f32 %v551, %v3351
        %v3390 = vadd.f32 %v552, %v3354
        %v3391 = vadd.f32 %v553, %v3359
        %v3392 = vadd.f32 %v554, %v3362
        %v3393 = vadd.f32 %v555, %v3367
        %v3394 = vadd.f32 %v556, %v3370
        %v3395 = vadd.f32 %v557, %v3375
        %v3396 = vadd.f32 %v558, %v3378
        %v3397 = vld [vmem:[%s6] sm:$0x1]
        %v3399 = vlaneseq
        %v3400 = vshrl.u32 %v3399, 7
        %v3401 = vsub.s32 0, %v3400
        %v3402 = vrot.slane %v3397, %v3401
        %v3404 = vadd.f32 %v3381, %v3402
        %v3405 = vadd.f32 %v3382, %v3402
        %v3406 = vadd.f32 %v3383, %v3402
        %v3407 = vadd.f32 %v3384, %v3402
        %v3408 = vadd.f32 %v3385, %v3402
        %v3409 = vadd.f32 %v3386, %v3402
        %v3410 = vadd.f32 %v3387, %v3402
        %v3411 = vadd.f32 %v3388, %v3402
        %v3412 = vadd.f32 %v3389, %v3402
        %v3413 = vadd.f32 %v3390, %v3402
        %v3414 = vadd.f32 %v3391, %v3402
        %v3415 = vadd.f32 %v3392, %v3402
        %v3416 = vadd.f32 %v3393, %v3402
        %v3417 = vadd.f32 %v3394, %v3402
        %v3418 = vadd.f32 %v3395, %v3402
        %v3419 = vadd.f32 %v3396, %v3402
        %v3420 = vld [vmem:[%s7] sm:$0x1]
        %v3421 = vld [vmem:[%s8] sm:$0x1]
        %3422 = vadd.xlane.f32.xlu0 %v3404
        %v3423 = vpop.xlane.xlu0 %3422
        %3424 = vadd.xlane.f32.xlu0 %v3405
        %v3425 = vpop.xlane.xlu0 %3424
        %3426 = vadd.xlane.f32.xlu0 %v3406
        %v3427 = vpop.xlane.xlu0 %3426
        %3428 = vadd.xlane.f32.xlu0 %v3407
        %v3429 = vpop.xlane.xlu0 %3428
        %3430 = vadd.xlane.f32.xlu0 %v3408
        %v3431 = vpop.xlane.xlu0 %3430
        %3432 = vadd.xlane.f32.xlu0 %v3409
        %v3433 = vpop.xlane.xlu0 %3432
        %3434 = vadd.xlane.f32.xlu0 %v3410
        %v3435 = vpop.xlane.xlu0 %3434
        %3436 = vadd.xlane.f32.xlu0 %v3411
        %v3437 = vpop.xlane.xlu0 %3436
        %3438 = vadd.xlane.f32.xlu0 %v3412
        %v3439 = vpop.xlane.xlu0 %3438
        %3440 = vadd.xlane.f32.xlu0 %v3413
        %v3441 = vpop.xlane.xlu0 %3440
        %3442 = vadd.xlane.f32.xlu0 %v3414
        %v3443 = vpop.xlane.xlu0 %3442
        %3444 = vadd.xlane.f32.xlu0 %v3415
        %v3445 = vpop.xlane.xlu0 %3444
        %3446 = vadd.xlane.f32.xlu0 %v3416
        %v3447 = vpop.xlane.xlu0 %3446
        %3448 = vadd.xlane.f32.xlu0 %v3417
        %v3449 = vpop.xlane.xlu0 %3448
        %3450 = vadd.xlane.f32.xlu0 %v3418
        %v3451 = vpop.xlane.xlu0 %3450
        %3452 = vadd.xlane.f32.xlu0 %v3419
        %v3453 = vpop.xlane.xlu0 %3452
        %v3454 = vmul.f32 %v3423, %v593
        %v3455 = vmul.f32 %v3425, %v593
        %v3456 = vmul.f32 %v3427, %v593
        %v3457 = vmul.f32 %v3429, %v593
        %v3458 = vmul.f32 %v3431, %v593
        %v3459 = vmul.f32 %v3433, %v593
        %v3460 = vmul.f32 %v3435, %v593
        %v3461 = vmul.f32 %v3437, %v593
        %v3462 = vmul.f32 %v3439, %v593
        %v3463 = vmul.f32 %v3441, %v593
        %v3464 = vmul.f32 %v3443, %v593
        %v3465 = vmul.f32 %v3445, %v593
        %v3466 = vmul.f32 %v3447, %v593
        %v3467 = vmul.f32 %v3449, %v593
        %v3468 = vmul.f32 %v3451, %v593
        %v3469 = vmul.f32 %v3453, %v593
        %v3470 = vsub.f32 %v3404, %v3454
        %v3471 = vsub.f32 %v3405, %v3455
        %v3472 = vsub.f32 %v3406, %v3456
        %v3473 = vsub.f32 %v3407, %v3457
        %v3474 = vsub.f32 %v3408, %v3458
        %v3475 = vsub.f32 %v3409, %v3459
        %v3476 = vsub.f32 %v3410, %v3460
        %v3477 = vsub.f32 %v3411, %v3461
        %v3478 = vsub.f32 %v3412, %v3462
        %v3479 = vsub.f32 %v3413, %v3463
        %v3480 = vsub.f32 %v3414, %v3464
        %v3481 = vsub.f32 %v3415, %v3465
        %v3482 = vsub.f32 %v3416, %v3466
        %v3483 = vsub.f32 %v3417, %v3467
        %v3484 = vsub.f32 %v3418, %v3468
        %v3485 = vsub.f32 %v3419, %v3469
        %v3486 = vmul.f32 %v3470, %v3470
        %v3487 = vmul.f32 %v3471, %v3471
        %v3488 = vmul.f32 %v3472, %v3472
        %v3489 = vmul.f32 %v3473, %v3473
        %v3490 = vmul.f32 %v3474, %v3474
        %v3491 = vmul.f32 %v3475, %v3475
        %v3492 = vmul.f32 %v3476, %v3476
        %v3493 = vmul.f32 %v3477, %v3477
        %v3494 = vmul.f32 %v3478, %v3478
        %v3495 = vmul.f32 %v3479, %v3479
        %v3496 = vmul.f32 %v3480, %v3480
        %v3497 = vmul.f32 %v3481, %v3481
        %v3498 = vmul.f32 %v3482, %v3482
        %v3499 = vmul.f32 %v3483, %v3483
        %v3500 = vmul.f32 %v3484, %v3484
        %v3501 = vmul.f32 %v3485, %v3485
        %3502 = vadd.xlane.f32.xlu0 %v3486
        %v3503 = vpop.xlane.xlu0 %3502
        %3504 = vadd.xlane.f32.xlu0 %v3487
        %v3505 = vpop.xlane.xlu0 %3504
        %3506 = vadd.xlane.f32.xlu0 %v3488
        %v3507 = vpop.xlane.xlu0 %3506
        %3508 = vadd.xlane.f32.xlu0 %v3489
        %v3509 = vpop.xlane.xlu0 %3508
        %3510 = vadd.xlane.f32.xlu0 %v3490
        %v3511 = vpop.xlane.xlu0 %3510
        %3512 = vadd.xlane.f32.xlu0 %v3491
        %v3513 = vpop.xlane.xlu0 %3512
        %3514 = vadd.xlane.f32.xlu0 %v3492
        %v3515 = vpop.xlane.xlu0 %3514
        %3516 = vadd.xlane.f32.xlu0 %v3493
        %v3517 = vpop.xlane.xlu0 %3516
        %3518 = vadd.xlane.f32.xlu0 %v3494
        %v3519 = vpop.xlane.xlu0 %3518
        %3520 = vadd.xlane.f32.xlu0 %v3495
        %v3521 = vpop.xlane.xlu0 %3520
        %3522 = vadd.xlane.f32.xlu0 %v3496
        %v3523 = vpop.xlane.xlu0 %3522
        %3524 = vadd.xlane.f32.xlu0 %v3497
        %v3525 = vpop.xlane.xlu0 %3524
        %3526 = vadd.xlane.f32.xlu0 %v3498
        %v3527 = vpop.xlane.xlu0 %3526
        %3528 = vadd.xlane.f32.xlu0 %v3499
        %v3529 = vpop.xlane.xlu0 %3528
        %3530 = vadd.xlane.f32.xlu0 %v3500
        %v3531 = vpop.xlane.xlu0 %3530
        %3532 = vadd.xlane.f32.xlu0 %v3501
        %v3533 = vpop.xlane.xlu0 %3532
        %v3534 = vmul.f32 %v3503, %v593
        %v3535 = vmul.f32 %v3505, %v593
        %v3536 = vmul.f32 %v3507, %v593
        %v3537 = vmul.f32 %v3509, %v593
        %v3538 = vmul.f32 %v3511, %v593
        %v3539 = vmul.f32 %v3513, %v593
        %v3540 = vmul.f32 %v3515, %v593
        %v3541 = vmul.f32 %v3517, %v593
        %v3542 = vmul.f32 %v3519, %v593
        %v3543 = vmul.f32 %v3521, %v593
        %v3544 = vmul.f32 %v3523, %v593
        %v3545 = vmul.f32 %v3525, %v593
        %v3546 = vmul.f32 %v3527, %v593
        %v3547 = vmul.f32 %v3529, %v593
        %v3548 = vmul.f32 %v3531, %v593
        %v3549 = vmul.f32 %v3533, %v593
        %v3550 = vadd.f32 %v3534, 1e-05
        %v3551 = vadd.f32 %v3535, 1e-05
        %v3552 = vadd.f32 %v3536, 1e-05
        %v3553 = vadd.f32 %v3537, 1e-05
        %v3554 = vadd.f32 %v3538, 1e-05
        %v3555 = vadd.f32 %v3539, 1e-05
        %v3556 = vadd.f32 %v3540, 1e-05
        %v3557 = vadd.f32 %v3541, 1e-05
        %v3558 = vadd.f32 %v3542, 1e-05
        %v3559 = vadd.f32 %v3543, 1e-05
        %v3560 = vadd.f32 %v3544, 1e-05
        %v3561 = vadd.f32 %v3545, 1e-05
        %v3562 = vadd.f32 %v3546, 1e-05
        %v3563 = vadd.f32 %v3547, 1e-05
        %v3564 = vadd.f32 %v3548, 1e-05
        %v3565 = vadd.f32 %v3549, 1e-05
        %v3566 = vrsqrt.pop %v3550
        %v3567 = vrsqrt.pop %v3551
        %v3568 = vrsqrt.pop %v3552
        %v3569 = vrsqrt.pop %v3553
        %v3570 = vrsqrt.pop %v3554
        %v3571 = vrsqrt.pop %v3555
        %v3572 = vrsqrt.pop %v3556
        %v3573 = vrsqrt.pop %v3557
        %v3574 = vrsqrt.pop %v3558
        %v3575 = vrsqrt.pop %v3559
        %v3576 = vrsqrt.pop %v3560
        %v3577 = vrsqrt.pop %v3561
        %v3578 = vrsqrt.pop %v3562
        %v3579 = vrsqrt.pop %v3563
        %v3580 = vrsqrt.pop %v3564
        %v3581 = vrsqrt.pop %v3565
        %v3582 = vmul.f32 %v3470, %v3566
        %v3583 = vmul.f32 %v3471, %v3567
        %v3584 = vmul.f32 %v3472, %v3568
        %v3585 = vmul.f32 %v3473, %v3569
        %v3586 = vmul.f32 %v3474, %v3570
        %v3587 = vmul.f32 %v3475, %v3571
        %v3588 = vmul.f32 %v3476, %v3572
        %v3589 = vmul.f32 %v3477, %v3573
        %v3590 = vmul.f32 %v3478, %v3574
        %v3591 = vmul.f32 %v3479, %v3575
        %v3592 = vmul.f32 %v3480, %v3576
        %v3593 = vmul.f32 %v3481, %v3577
        %v3594 = vmul.f32 %v3482, %v3578
        %v3595 = vmul.f32 %v3483, %v3579
        %v3596 = vmul.f32 %v3484, %v3580
        %v3597 = vmul.f32 %v3485, %v3581
        %v3599 = vlaneseq
        %v3600 = vshrl.u32 %v3599, 7
        %v3601 = vsub.s32 0, %v3600
        %v3602 = vrot.slane %v3420, %v3601
        %v3604 = vmul.f32 %v3582, %v3602
        %v3605 = vmul.f32 %v3583, %v3602
        %v3606 = vmul.f32 %v3584, %v3602
        %v3607 = vmul.f32 %v3585, %v3602
        %v3608 = vmul.f32 %v3586, %v3602
        %v3609 = vmul.f32 %v3587, %v3602
        %v3610 = vmul.f32 %v3588, %v3602
        %v3611 = vmul.f32 %v3589, %v3602
        %v3612 = vmul.f32 %v3590, %v3602
        %v3613 = vmul.f32 %v3591, %v3602
        %v3614 = vmul.f32 %v3592, %v3602
        %v3615 = vmul.f32 %v3593, %v3602
        %v3616 = vmul.f32 %v3594, %v3602
        %v3617 = vmul.f32 %v3595, %v3602
        %v3618 = vmul.f32 %v3596, %v3602
        %v3619 = vmul.f32 %v3597, %v3602
        %v3621 = vlaneseq
        %v3622 = vshrl.u32 %v3621, 7
        %v3623 = vsub.s32 0, %v3622
        %v3624 = vrot.slane %v3421, %v3623
        %v3626 = vadd.f32 %v3604, %v3624
        %v3627 = vadd.f32 %v3605, %v3624
        %v3628 = vadd.f32 %v3606, %v3624
        %v3629 = vadd.f32 %v3607, %v3624
        %v3630 = vadd.f32 %v3608, %v3624
        %v3631 = vadd.f32 %v3609, %v3624
        %v3632 = vadd.f32 %v3610, %v3624
        %v3633 = vadd.f32 %v3611, %v3624
        %v3634 = vadd.f32 %v3612, %v3624
        %v3635 = vadd.f32 %v3613, %v3624
        %v3636 = vadd.f32 %v3614, %v3624
        %v3637 = vadd.f32 %v3615, %v3624
        %v3638 = vadd.f32 %v3616, %v3624
        %v3639 = vadd.f32 %v3617, %v3624
        %v3640 = vadd.f32 %v3618, %v3624
        %v3641 = vadd.f32 %v3619, %v3624
        %v3642 = vpack.c.bf16 %v3627, %v3626
        %v3643 = vpack.c.bf16 %v3629, %v3628
        %v3644 = vpack.c.bf16 %v3631, %v3630
        %v3645 = vpack.c.bf16 %v3633, %v3632
        %v3646 = vpack.c.bf16 %v3635, %v3634
        %v3647 = vpack.c.bf16 %v3637, %v3636
        %v3648 = vpack.c.bf16 %v3639, %v3638
        %v3649 = vpack.c.bf16 %v3641, %v3640
        %v3650 = vld [vmem:[#allocation11] sm:$0xff]
        %v3651 = vld [vmem:[#allocation11 + $0x8] sm:$0xff]
        %v3652 = vld [vmem:[#allocation11 + $0x10] sm:$0xff]
        %v3653 = vld [vmem:[#allocation11 + $0x18] sm:$0xff]
        %v3654 = vld [vmem:[#allocation11 + $0x20] sm:$0xff]
        %v3655 = vld [vmem:[#allocation11 + $0x28] sm:$0xff]
        %v3656 = vld [vmem:[#allocation11 + $0x30] sm:$0xff]
        %v3657 = vld [vmem:[#allocation11 + $0x38] sm:$0xff]
        %v3658 = vld [vmem:[#allocation11 + $0x40] sm:$0xff]
        %v3659 = vld [vmem:[#allocation11 + $0x48] sm:$0xff]
        %v3660 = vld [vmem:[#allocation11 + $0x50] sm:$0xff]
        %v3661 = vld [vmem:[#allocation11 + $0x58] sm:$0xff]
        %v3662 = vld [vmem:[#allocation11 + $0x60] sm:$0xff]
        %v3663 = vld [vmem:[#allocation11 + $0x68] sm:$0xff]
        %v3664 = vld [vmem:[#allocation11 + $0x70] sm:$0xff]
        %v3665 = vld [vmem:[#allocation11 + $0x78] sm:$0xff]
        %v3666 = vld [vmem:[#allocation11 + $0x80] sm:$0xff]
        %v3667 = vld [vmem:[#allocation11 + $0x88] sm:$0xff]
        %v3668 = vld [vmem:[#allocation11 + $0x90] sm:$0xff]
        %v3669 = vld [vmem:[#allocation11 + $0x98] sm:$0xff]
        %v3670 = vld [vmem:[#allocation11 + $0xa0] sm:$0xff]
        %v3671 = vld [vmem:[#allocation11 + $0xa8] sm:$0xff]
        %v3672 = vld [vmem:[#allocation11 + $0xb0] sm:$0xff]
        %v3673 = vld [vmem:[#allocation11 + $0xb8] sm:$0xff]
        %v3674 = vld [vmem:[#allocation11 + $0xc0] sm:$0xff]
        %v3675 = vld [vmem:[#allocation11 + $0xc8] sm:$0xff]
        %v3676 = vld [vmem:[#allocation11 + $0xd0] sm:$0xff]
        %v3677 = vld [vmem:[#allocation11 + $0xd8] sm:$0xff]
        %v3678 = vld [vmem:[#allocation11 + $0xe0] sm:$0xff]
        %v3679 = vld [vmem:[#allocation11 + $0xe8] sm:$0xff]
        %v3680 = vld [vmem:[#allocation11 + $0xf0] sm:$0xff]
        %v3681 = vld [vmem:[#allocation11 + $0xf8] sm:$0xff]
        %v3682 = vld [vmem:[%s10] sm:$0xf]
        %v3684 = vlaneseq
        %v3685 = vshrl.u32 %v3684, 7
        %v3686 = vsub.s32 0, %v3685
        %v3687 = vrot.slane %v3682, %v3686
        %v3688 = vlaneseq
        %v3689 = vshrl.u32 %v3688, 7
        %v3690 = vsub.s32 1, %v3689
        %v3691 = vrot.slane %v3682, %v3690
        %v3692 = vlaneseq
        %v3693 = vshrl.u32 %v3692, 7
        %v3694 = vsub.s32 2, %v3693
        %v3695 = vrot.slane %v3682, %v3694
        %v3696 = vlaneseq
        %v3697 = vshrl.u32 %v3696, 7
        %v3698 = vsub.s32 3, %v3697
        %v3699 = vrot.slane %v3682, %v3698
        %v3736 = vunpack.c.l.b16 %v3650
        %v3737 = vunpack.c.h.b16 %v3650
        %v3738 = vunpack.c.l.b16 %v3651
        %v3739 = vunpack.c.h.b16 %v3651
        %v3740 = vunpack.c.l.b16 %v3652
        %v3741 = vunpack.c.h.b16 %v3652
        %v3742 = vunpack.c.l.b16 %v3653
        %v3743 = vunpack.c.h.b16 %v3653
        %v3744 = vunpack.c.l.b16 %v3654
        %v3745 = vunpack.c.h.b16 %v3654
        %v3746 = vunpack.c.l.b16 %v3655
        %v3747 = vunpack.c.h.b16 %v3655
        %v3748 = vunpack.c.l.b16 %v3656
        %v3749 = vunpack.c.h.b16 %v3656
        %v3750 = vunpack.c.l.b16 %v3657
        %v3751 = vunpack.c.h.b16 %v3657
        %v3752 = vunpack.c.l.b16 %v3658
        %v3753 = vunpack.c.h.b16 %v3658
        %v3754 = vunpack.c.l.b16 %v3659
        %v3755 = vunpack.c.h.b16 %v3659
        %v3756 = vunpack.c.l.b16 %v3660
        %v3757 = vunpack.c.h.b16 %v3660
        %v3758 = vunpack.c.l.b16 %v3661
        %v3759 = vunpack.c.h.b16 %v3661
        %v3760 = vunpack.c.l.b16 %v3662
        %v3761 = vunpack.c.h.b16 %v3662
        %v3762 = vunpack.c.l.b16 %v3663
        %v3763 = vunpack.c.h.b16 %v3663
        %v3764 = vunpack.c.l.b16 %v3664
        %v3765 = vunpack.c.h.b16 %v3664
        %v3766 = vunpack.c.l.b16 %v3665
        %v3767 = vunpack.c.h.b16 %v3665
        %v3768 = vunpack.c.l.b16 %v3666
        %v3769 = vunpack.c.h.b16 %v3666
        %v3770 = vunpack.c.l.b16 %v3667
        %v3771 = vunpack.c.h.b16 %v3667
        %v3772 = vunpack.c.l.b16 %v3668
        %v3773 = vunpack.c.h.b16 %v3668
        %v3774 = vunpack.c.l.b16 %v3669
        %v3775 = vunpack.c.h.b16 %v3669
        %v3776 = vunpack.c.l.b16 %v3670
        %v3777 = vunpack.c.h.b16 %v3670
        %v3778 = vunpack.c.l.b16 %v3671
        %v3779 = vunpack.c.h.b16 %v3671
        %v3780 = vunpack.c.l.b16 %v3672
        %v3781 = vunpack.c.h.b16 %v3672
        %v3782 = vunpack.c.l.b16 %v3673
        %v3783 = vunpack.c.h.b16 %v3673
        %v3784 = vunpack.c.l.b16 %v3674
        %v3785 = vunpack.c.h.b16 %v3674
        %v3786 = vunpack.c.l.b16 %v3675
        %v3787 = vunpack.c.h.b16 %v3675
        %v3788 = vunpack.c.l.b16 %v3676
        %v3789 = vunpack.c.h.b16 %v3676
        %v3790 = vunpack.c.l.b16 %v3677
        %v3791 = vunpack.c.h.b16 %v3677
        %v3792 = vunpack.c.l.b16 %v3678
        %v3793 = vunpack.c.h.b16 %v3678
        %v3794 = vunpack.c.l.b16 %v3679
        %v3795 = vunpack.c.h.b16 %v3679
        %v3796 = vunpack.c.l.b16 %v3680
        %v3797 = vunpack.c.h.b16 %v3680
        %v3798 = vunpack.c.l.b16 %v3681
        %v3799 = vunpack.c.h.b16 %v3681
        %v3800 = vpack.c.b16 %v3740, %v3736
        %v3801 = vpack.c.b16 %v3741, %v3737
        %v3802 = vpack.c.b16 %v3742, %v3738
        %v3803 = vpack.c.b16 %v3743, %v3739
        %v3804 = vpack.c.b16 %v3748, %v3744
        %v3805 = vpack.c.b16 %v3749, %v3745
        %v3806 = vpack.c.b16 %v3750, %v3746
        %v3807 = vpack.c.b16 %v3751, %v3747
        %v3808 = vpack.c.b16 %v3756, %v3752
        %v3809 = vpack.c.b16 %v3757, %v3753
        %v3810 = vpack.c.b16 %v3758, %v3754
        %v3811 = vpack.c.b16 %v3759, %v3755
        %v3812 = vpack.c.b16 %v3764, %v3760
        %v3813 = vpack.c.b16 %v3765, %v3761
        %v3814 = vpack.c.b16 %v3766, %v3762
        %v3815 = vpack.c.b16 %v3767, %v3763
        %v3816 = vpack.c.b16 %v3772, %v3768
        %v3817 = vpack.c.b16 %v3773, %v3769
        %v3818 = vpack.c.b16 %v3774, %v3770
        %v3819 = vpack.c.b16 %v3775, %v3771
        %v3820 = vpack.c.b16 %v3780, %v3776
        %v3821 = vpack.c.b16 %v3781, %v3777
        %v3822 = vpack.c.b16 %v3782, %v3778
        %v3823 = vpack.c.b16 %v3783, %v3779
        %v3824 = vpack.c.b16 %v3788, %v3784
        %v3825 = vpack.c.b16 %v3789, %v3785
        %v3826 = vpack.c.b16 %v3790, %v3786
        %v3827 = vpack.c.b16 %v3791, %v3787
        %v3828 = vpack.c.b16 %v3796, %v3792
        %v3829 = vpack.c.b16 %v3797, %v3793
        %v3830 = vpack.c.b16 %v3798, %v3794
        %v3831 = vpack.c.b16 %v3799, %v3795
        %3864 = vmatprep.subr.bf16.mxu0 %v3801
        %3865 = vmatpush1.bf16.msra.mxu0 %v3800
        %3866 = vmatprep.subr.bf16.mxu0 %v3805
        %3867 = vmatpush1.bf16.msra.mxu0 %v3804
        %3868 = vmatprep.subr.bf16.mxu0 %v3809
        %3869 = vmatpush1.bf16.msra.mxu0 %v3808
        %3870 = vmatprep.subr.bf16.mxu0 %v3813
        %3871 = vmatpush1.bf16.msra.mxu0 %v3812
        %3872 = vmatprep.subr.bf16.mxu0 %v3817
        %3873 = vmatpush1.bf16.msra.mxu0 %v3816
        %3874 = vmatprep.subr.bf16.mxu0 %v3821
        %3875 = vmatpush1.bf16.msra.mxu0 %v3820
        %3876 = vmatprep.subr.bf16.mxu0 %v3825
        %3877 = vmatpush1.bf16.msra.mxu0 %v3824
        %3878 = vmatprep.subr.bf16.mxu0 %v3829
        %3879 = vmatpush1.bf16.msra.mxu0 %v3828
        %3880 = vmatprep.subr.bf16.mxu0 0
        %3881 = vmatpush1.bf16.msra.mxu0 0
        %3882 = vmatprep.subr.bf16.mxu0 0
        %3883 = vmatpush1.bf16.msra.mxu0 0
        %3884 = vmatprep.subr.bf16.mxu0 0
        %3885 = vmatpush1.bf16.msra.mxu0 0
        %3886 = vmatprep.subr.bf16.mxu0 0
        %3887 = vmatpush1.bf16.msra.mxu0 0
        %3888 = vmatprep.subr.bf16.mxu0 0
        %3889 = vmatpush1.bf16.msra.mxu0 0
        %3890 = vmatprep.subr.bf16.mxu0 0
        %3891 = vmatpush1.bf16.msra.mxu0 0
        %3892 = vmatprep.subr.bf16.mxu0 0
        %3893 = vmatpush1.bf16.msra.mxu0 0
        %3894 = vmatprep.subr.bf16.mxu0 0
        %3895 = vmatpush1.bf16.msra.mxu0 0
        %3896 = vmatprep.mubr.bf16.mxu0 0
        %3897 = vmatmul.mubr.bf16.gmra.mrb[0].mxu0 %v3642
        %v3898 = vpop.f32.mrb[0].mxu0
        %v3899 = vadd.f32 %v3687, %v3898
        %v3900 = vpop.f32.mrb[0].mxu0
        %v3901 = vadd.f32 %v3691, %v3900
        %v3902 = vpop.f32.mrb[0].mxu0
        %v3903 = vadd.f32 %v3687, %v3902
        %v3904 = vpop.f32.mrb[0].mxu0
        %v3905 = vadd.f32 %v3691, %v3904
        %3906 = vmatprep.mubr.bf16.mxu0 0
        %3907 = vmatmul.mubr.bf16.gmra.mrb[0].mxu0 %v3643
        %v3908 = vpop.f32.mrb[0].mxu0
        %v3909 = vadd.f32 %v3687, %v3908
        %v3910 = vpop.f32.mrb[0].mxu0
        %v3911 = vadd.f32 %v3691, %v3910
        %v3912 = vpop.f32.mrb[0].mxu0
        %v3913 = vadd.f32 %v3687, %v3912
        %v3914 = vpop.f32.mrb[0].mxu0
        %v3915 = vadd.f32 %v3691, %v3914
        %3916 = vmatprep.mubr.bf16.mxu0 0
        %3917 = vmatmul.mubr.bf16.gmra.mrb[0].mxu0 %v3644
        %v3918 = vpop.f32.mrb[0].mxu0
        %v3919 = vadd.f32 %v3687, %v3918
        %v3920 = vpop.f32.mrb[0].mxu0
        %v3921 = vadd.f32 %v3691, %v3920
        %v3922 = vpop.f32.mrb[0].mxu0
        %v3923 = vadd.f32 %v3687, %v3922
        %v3924 = vpop.f32.mrb[0].mxu0
        %v3925 = vadd.f32 %v3691, %v3924
        %3926 = vmatprep.mubr.bf16.mxu0 0
        %3927 = vmatmul.mubr.bf16.gmra.mrb[0].mxu0 %v3645
        %v3928 = vpop.f32.mrb[0].mxu0
        %v3929 = vadd.f32 %v3687, %v3928
        %v3930 = vpop.f32.mrb[0].mxu0
        %v3931 = vadd.f32 %v3691, %v3930
        %v3932 = vpop.f32.mrb[0].mxu0
        %v3933 = vadd.f32 %v3687, %v3932
        %v3934 = vpop.f32.mrb[0].mxu0
        %v3935 = vadd.f32 %v3691, %v3934
        %3936 = vmatprep.mubr.bf16.mxu0 0
        %3937 = vmatmul.mubr.bf16.gmra.mrb[0].mxu0 %v3646
        %v3938 = vpop.f32.mrb[0].mxu0
        %v3939 = vadd.f32 %v3687, %v3938
        %v3940 = vpop.f32.mrb[0].mxu0
        %v3941 = vadd.f32 %v3691, %v3940
        %v3942 = vpop.f32.mrb[0].mxu0
        %v3943 = vadd.f32 %v3687, %v3942
        %v3944 = vpop.f32.mrb[0].mxu0
        %v3945 = vadd.f32 %v3691, %v3944
        %3946 = vmatprep.mubr.bf16.mxu0 0
        %3947 = vmatmul.mubr.bf16.gmra.mrb[0].mxu0 %v3647
        %v3948 = vpop.f32.mrb[0].mxu0
        %v3949 = vadd.f32 %v3687, %v3948
        %v3950 = vpop.f32.mrb[0].mxu0
        %v3951 = vadd.f32 %v3691, %v3950
        %v3952 = vpop.f32.mrb[0].mxu0
        %v3953 = vadd.f32 %v3687, %v3952
        %v3954 = vpop.f32.mrb[0].mxu0
        %v3955 = vadd.f32 %v3691, %v3954
        %3956 = vmatprep.mubr.bf16.mxu0 0
        %3957 = vmatmul.mubr.bf16.gmra.mrb[0].mxu0 %v3648
        %v3958 = vpop.f32.mrb[0].mxu0
        %v3959 = vadd.f32 %v3687, %v3958
        %v3960 = vpop.f32.mrb[0].mxu0
        %v3961 = vadd.f32 %v3691, %v3960
        %v3962 = vpop.f32.mrb[0].mxu0
        %v3963 = vadd.f32 %v3687, %v3962
        %v3964 = vpop.f32.mrb[0].mxu0
        %v3965 = vadd.f32 %v3691, %v3964
        %3966 = vmatprep.mubr.bf16.mxu0 0
        %3967 = vmatmul.mubr.bf16.gmra.mrb[0].mxu0 %v3649
        %v3968 = vpop.f32.mrb[0].mxu0
        %v3969 = vadd.f32 %v3687, %v3968
        %v3970 = vpop.f32.mrb[0].mxu0
        %v3971 = vadd.f32 %v3691, %v3970
        %v3972 = vpop.f32.mrb[0].mxu0
        %v3973 = vadd.f32 %v3687, %v3972
        %v3974 = vpop.f32.mrb[0].mxu0
        %v3975 = vadd.f32 %v3691, %v3974
        %3976 = vdwg.mxu0
        %3977 = vmatprep.subr.bf16.mxu0 %v3803
        %3978 = vmatpush1.bf16.msra.mxu0 %v3802
        %3979 = vmatprep.subr.bf16.mxu0 %v3807
        %3980 = vmatpush1.bf16.msra.mxu0 %v3806
        %3981 = vmatprep.subr.bf16.mxu0 %v3811
        %3982 = vmatpush1.bf16.msra.mxu0 %v3810
        %3983 = vmatprep.subr.bf16.mxu0 %v3815
        %3984 = vmatpush1.bf16.msra.mxu0 %v3814
        %3985 = vmatprep.subr.bf16.mxu0 %v3819
        %3986 = vmatpush1.bf16.msra.mxu0 %v3818
        %3987 = vmatprep.subr.bf16.mxu0 %v3823
        %3988 = vmatpush1.bf16.msra.mxu0 %v3822
        %3989 = vmatprep.subr.bf16.mxu0 %v3827
        %3990 = vmatpush1.bf16.msra.mxu0 %v3826
        %3991 = vmatprep.subr.bf16.mxu0 %v3831
        %3992 = vmatpush1.bf16.msra.mxu0 %v3830
        %3993 = vmatprep.subr.bf16.mxu0 0
        %3994 = vmatpush1.bf16.msra.mxu0 0
        %3995 = vmatprep.subr.bf16.mxu0 0
        %3996 = vmatpush1.bf16.msra.mxu0 0
        %3997 = vmatprep.subr.bf16.mxu0 0
        %3998 = vmatpush1.bf16.msra.mxu0 0
        %3999 = vmatprep.subr.bf16.mxu0 0
        %4000 = vmatpush1.bf16.msra.mxu0 0
        %4001 = vmatprep.subr.bf16.mxu0 0
        %4002 = vmatpush1.bf16.msra.mxu0 0
        %4003 = vmatprep.subr.bf16.mxu0 0
        %4004 = vmatpush1.bf16.msra.mxu0 0
        %4005 = vmatprep.subr.bf16.mxu0 0
        %4006 = vmatpush1.bf16.msra.mxu0 0
        %4007 = vmatprep.subr.bf16.mxu0 0
        %4008 = vmatpush1.bf16.msra.mxu0 0
        %4009 = vmatprep.mubr.bf16.mxu0 0
        %4010 = vmatmul.mubr.bf16.gmra.mrb[0].mxu0 %v3642
        %v4011 = vpop.f32.mrb[0].mxu0
        %v4012 = vadd.f32 %v3695, %v4011
        %v4013 = vpop.f32.mrb[0].mxu0
        %v4014 = vadd.f32 %v3699, %v4013
        %v4015 = vpop.f32.mrb[0].mxu0
        %v4016 = vadd.f32 %v3695, %v4015
        %v4017 = vpop.f32.mrb[0].mxu0
        %v4018 = vadd.f32 %v3699, %v4017
        %4019 = vmatprep.mubr.bf16.mxu0 0
        %4020 = vmatmul.mubr.bf16.gmra.mrb[0].mxu0 %v3643
        %v4021 = vpop.f32.mrb[0].mxu0
        %v4022 = vadd.f32 %v3695, %v4021
        %v4023 = vpop.f32.mrb[0].mxu0
        %v4024 = vadd.f32 %v3699, %v4023
        %v4025 = vpop.f32.mrb[0].mxu0
        %v4026 = vadd.f32 %v3695, %v4025
        %v4027 = vpop.f32.mrb[0].mxu0
        %v4028 = vadd.f32 %v3699, %v4027
        %4029 = vmatprep.mubr.bf16.mxu0 0
        %4030 = vmatmul.mubr.bf16.gmra.mrb[0].mxu0 %v3644
        %v4031 = vpop.f32.mrb[0].mxu0
        %v4032 = vadd.f32 %v3695, %v4031
        %v4033 = vpop.f32.mrb[0].mxu0
        %v4034 = vadd.f32 %v3699, %v4033
        %v4035 = vpop.f32.mrb[0].mxu0
        %v4036 = vadd.f32 %v3695, %v4035
        %v4037 = vpop.f32.mrb[0].mxu0
        %v4038 = vadd.f32 %v3699, %v4037
        %4039 = vmatprep.mubr.bf16.mxu0 0
        %4040 = vmatmul.mubr.bf16.gmra.mrb[0].mxu0 %v3645
        %v4041 = vpop.f32.mrb[0].mxu0
        %v4042 = vadd.f32 %v3695, %v4041
        %v4043 = vpop.f32.mrb[0].mxu0
        %v4044 = vadd.f32 %v3699, %v4043
        %v4045 = vpop.f32.mrb[0].mxu0
        %v4046 = vadd.f32 %v3695, %v4045
        %v4047 = vpop.f32.mrb[0].mxu0
        %v4048 = vadd.f32 %v3699, %v4047
        %4049 = vmatprep.mubr.bf16.mxu0 0
        %4050 = vmatmul.mubr.bf16.gmra.mrb[0].mxu0 %v3646
        %v4051 = vpop.f32.mrb[0].mxu0
        %v4052 = vadd.f32 %v3695, %v4051
        %v4053 = vpop.f32.mrb[0].mxu0
        %v4054 = vadd.f32 %v3699, %v4053
        %v4055 = vpop.f32.mrb[0].mxu0
        %v4056 = vadd.f32 %v3695, %v4055
        %v4057 = vpop.f32.mrb[0].mxu0
        %v4058 = vadd.f32 %v3699, %v4057
        %4059 = vmatprep.mubr.bf16.mxu0 0
        %4060 = vmatmul.mubr.bf16.gmra.mrb[0].mxu0 %v3647
        %v4061 = vpop.f32.mrb[0].mxu0
        %v4062 = vadd.f32 %v3695, %v4061
        %v4063 = vpop.f32.mrb[0].mxu0
        %v4064 = vadd.f32 %v3699, %v4063
        %v4065 = vpop.f32.mrb[0].mxu0
        %v4066 = vadd.f32 %v3695, %v4065
        %v4067 = vpop.f32.mrb[0].mxu0
        %v4068 = vadd.f32 %v3699, %v4067
        %4069 = vmatprep.mubr.bf16.mxu0 0
        %4070 = vmatmul.mubr.bf16.gmra.mrb[0].mxu0 %v3648
        %v4071 = vpop.f32.mrb[0].mxu0
        %v4072 = vadd.f32 %v3695, %v4071
        %v4073 = vpop.f32.mrb[0].mxu0
        %v4074 = vadd.f32 %v3699, %v4073
        %v4075 = vpop.f32.mrb[0].mxu0
        %v4076 = vadd.f32 %v3695, %v4075
        %v4077 = vpop.f32.mrb[0].mxu0
        %v4078 = vadd.f32 %v3699, %v4077
        %4079 = vmatprep.mubr.bf16.mxu0 0
        %4080 = vmatmul.mubr.bf16.gmra.mrb[0].mxu0 %v3649
        %v4081 = vpop.f32.mrb[0].mxu0
        %v4082 = vadd.f32 %v3695, %v4081
        %v4083 = vpop.f32.mrb[0].mxu0
        %v4084 = vadd.f32 %v3699, %v4083
        %v4085 = vpop.f32.mrb[0].mxu0
        %v4086 = vadd.f32 %v3695, %v4085
        %v4087 = vpop.f32.mrb[0].mxu0
        %v4088 = vadd.f32 %v3699, %v4087
        %4089 = vdwg.mxu0
        %v4090 = vmul.f32 %v3899, 1.702
        %v4091 = vmul.f32 %v3901, 1.702
        %v4092 = vmul.f32 %v4012, 1.702
        %v4093 = vmul.f32 %v4014, 1.702
        %v4094 = vmul.f32 %v3903, 1.702
        %v4095 = vmul.f32 %v3905, 1.702
        %v4096 = vmul.f32 %v4016, 1.702
        %v4097 = vmul.f32 %v4018, 1.702
        %v4098 = vmul.f32 %v3909, 1.702
        %v4099 = vmul.f32 %v3911, 1.702
        %v4100 = vmul.f32 %v4022, 1.702
        %v4101 = vmul.f32 %v4024, 1.702
        %v4102 = vmul.f32 %v3913, 1.702
        %v4103 = vmul.f32 %v3915, 1.702
        %v4104 = vmul.f32 %v4026, 1.702
        %v4105 = vmul.f32 %v4028, 1.702
        %v4106 = vmul.f32 %v3919, 1.702
        %v4107 = vmul.f32 %v3921, 1.702
        %v4108 = vmul.f32 %v4032, 1.702
        %v4109 = vmul.f32 %v4034, 1.702
        %v4110 = vmul.f32 %v3923, 1.702
        %v4111 = vmul.f32 %v3925, 1.702
        %v4112 = vmul.f32 %v4036, 1.702
        %v4113 = vmul.f32 %v4038, 1.702
        %v4114 = vmul.f32 %v3929, 1.702
        %v4115 = vmul.f32 %v3931, 1.702
        %v4116 = vmul.f32 %v4042, 1.702
        %v4117 = vmul.f32 %v4044, 1.702
        %v4118 = vmul.f32 %v3933, 1.702
        %v4119 = vmul.f32 %v3935, 1.702
        %v4120 = vmul.f32 %v4046, 1.702
        %v4121 = vmul.f32 %v4048, 1.702
        %v4122 = vmul.f32 %v3939, 1.702
        %v4123 = vmul.f32 %v3941, 1.702
        %v4124 = vmul.f32 %v4052, 1.702
        %v4125 = vmul.f32 %v4054, 1.702
        %v4126 = vmul.f32 %v3943, 1.702
        %v4127 = vmul.f32 %v3945, 1.702
        %v4128 = vmul.f32 %v4056, 1.702
        %v4129 = vmul.f32 %v4058, 1.702
        %v4130 = vmul.f32 %v3949, 1.702
        %v4131 = vmul.f32 %v3951, 1.702
        %v4132 = vmul.f32 %v4062, 1.702
        %v4133 = vmul.f32 %v4064, 1.702
        %v4134 = vmul.f32 %v3953, 1.702
        %v4135 = vmul.f32 %v3955, 1.702
        %v4136 = vmul.f32 %v4066, 1.702
        %v4137 = vmul.f32 %v4068, 1.702
        %v4138 = vmul.f32 %v3959, 1.702
        %v4139 = vmul.f32 %v3961, 1.702
        %v4140 = vmul.f32 %v4072, 1.702
        %v4141 = vmul.f32 %v4074, 1.702
        %v4142 = vmul.f32 %v3963, 1.702
        %v4143 = vmul.f32 %v3965, 1.702
        %v4144 = vmul.f32 %v4076, 1.702
        %v4145 = vmul.f32 %v4078, 1.702
        %v4146 = vmul.f32 %v3969, 1.702
        %v4147 = vmul.f32 %v3971, 1.702
        %v4148 = vmul.f32 %v4082, 1.702
        %v4149 = vmul.f32 %v4084, 1.702
        %v4150 = vmul.f32 %v3973, 1.702
        %v4151 = vmul.f32 %v3975, 1.702
        %v4152 = vmul.f32 %v4086, 1.702
        %v4153 = vmul.f32 %v4088, 1.702
        %v4154 = vxor.u32 %v4090, 2147483648
        %v4155 = vxor.u32 %v4091, 2147483648
        %v4156 = vxor.u32 %v4092, 2147483648
        %v4157 = vxor.u32 %v4093, 2147483648
        %v4158 = vxor.u32 %v4094, 2147483648
        %v4159 = vxor.u32 %v4095, 2147483648
        %v4160 = vxor.u32 %v4096, 2147483648
        %v4161 = vxor.u32 %v4097, 2147483648
        %v4162 = vxor.u32 %v4098, 2147483648
        %v4163 = vxor.u32 %v4099, 2147483648
        %v4164 = vxor.u32 %v4100, 2147483648
        %v4165 = vxor.u32 %v4101, 2147483648
        %v4166 = vxor.u32 %v4102, 2147483648
        %v4167 = vxor.u32 %v4103, 2147483648
        %v4168 = vxor.u32 %v4104, 2147483648
        %v4169 = vxor.u32 %v4105, 2147483648
        %v4170 = vxor.u32 %v4106, 2147483648
        %v4171 = vxor.u32 %v4107, 2147483648
        %v4172 = vxor.u32 %v4108, 2147483648
        %v4173 = vxor.u32 %v4109, 2147483648
        %v4174 = vxor.u32 %v4110, 2147483648
        %v4175 = vxor.u32 %v4111, 2147483648
        %v4176 = vxor.u32 %v4112, 2147483648
        %v4177 = vxor.u32 %v4113, 2147483648
        %v4178 = vxor.u32 %v4114, 2147483648
        %v4179 = vxor.u32 %v4115, 2147483648
        %v4180 = vxor.u32 %v4116, 2147483648
        %v4181 = vxor.u32 %v4117, 2147483648
        %v4182 = vxor.u32 %v4118, 2147483648
        %v4183 = vxor.u32 %v4119, 2147483648
        %v4184 = vxor.u32 %v4120, 2147483648
        %v4185 = vxor.u32 %v4121, 2147483648
        %v4186 = vxor.u32 %v4122, 2147483648
        %v4187 = vxor.u32 %v4123, 2147483648
        %v4188 = vxor.u32 %v4124, 2147483648
        %v4189 = vxor.u32 %v4125, 2147483648
        %v4190 = vxor.u32 %v4126, 2147483648
        %v4191 = vxor.u32 %v4127, 2147483648
        %v4192 = vxor.u32 %v4128, 2147483648
        %v4193 = vxor.u32 %v4129, 2147483648
        %v4194 = vxor.u32 %v4130, 2147483648
        %v4195 = vxor.u32 %v4131, 2147483648
        %v4196 = vxor.u32 %v4132, 2147483648
        %v4197 = vxor.u32 %v4133, 2147483648
        %v4198 = vxor.u32 %v4134, 2147483648
        %v4199 = vxor.u32 %v4135, 2147483648
        %v4200 = vxor.u32 %v4136, 2147483648
        %v4201 = vxor.u32 %v4137, 2147483648
        %v4202 = vxor.u32 %v4138, 2147483648
        %v4203 = vxor.u32 %v4139, 2147483648
        %v4204 = vxor.u32 %v4140, 2147483648
        %v4205 = vxor.u32 %v4141, 2147483648
        %v4206 = vxor.u32 %v4142, 2147483648
        %v4207 = vxor.u32 %v4143, 2147483648
        %v4208 = vxor.u32 %v4144, 2147483648
        %v4209 = vxor.u32 %v4145, 2147483648
        %v4210 = vxor.u32 %v4146, 2147483648
        %v4211 = vxor.u32 %v4147, 2147483648
        %v4212 = vxor.u32 %v4148, 2147483648
        %v4213 = vxor.u32 %v4149, 2147483648
        %v4214 = vxor.u32 %v4150, 2147483648
        %v4215 = vxor.u32 %v4151, 2147483648
        %v4216 = vxor.u32 %v4152, 2147483648
        %v4217 = vxor.u32 %v4153, 2147483648
        %v4218 = vmul.f32 %v4154, 1.442695
        %v4219 = vpow.pop %v4218
        %v4220 = vmul.f32 %v4155, 1.442695
        %v4221 = vpow.pop %v4220
        %v4222 = vmul.f32 %v4156, 1.442695
        %v4223 = vpow.pop %v4222
        %v4224 = vmul.f32 %v4157, 1.442695
        %v4225 = vpow.pop %v4224
        %v4226 = vmul.f32 %v4158, 1.442695
        %v4227 = vpow.pop %v4226
        %v4228 = vmul.f32 %v4159, 1.442695
        %v4229 = vpow.pop %v4228
        %v4230 = vmul.f32 %v4160, 1.442695
        %v4231 = vpow.pop %v4230
        %v4232 = vmul.f32 %v4161, 1.442695
        %v4233 = vpow.pop %v4232
        %v4234 = vmul.f32 %v4162, 1.442695
        %v4235 = vpow.pop %v4234
        %v4236 = vmul.f32 %v4163, 1.442695
        %v4237 = vpow.pop %v4236
        %v4238 = vmul.f32 %v4164, 1.442695
        %v4239 = vpow.pop %v4238
        %v4240 = vmul.f32 %v4165, 1.442695
        %v4241 = vpow.pop %v4240
        %v4242 = vmul.f32 %v4166, 1.442695
        %v4243 = vpow.pop %v4242
        %v4244 = vmul.f32 %v4167, 1.442695
        %v4245 = vpow.pop %v4244
        %v4246 = vmul.f32 %v4168, 1.442695
        %v4247 = vpow.pop %v4246
        %v4248 = vmul.f32 %v4169, 1.442695
        %v4249 = vpow.pop %v4248
        %v4250 = vmul.f32 %v4170, 1.442695
        %v4251 = vpow.pop %v4250
        %v4252 = vmul.f32 %v4171, 1.442695
        %v4253 = vpow.pop %v4252
        %v4254 = vmul.f32 %v4172, 1.442695
        %v4255 = vpow.pop %v4254
        %v4256 = vmul.f32 %v4173, 1.442695
        %v4257 = vpow.pop %v4256
        %v4258 = vmul.f32 %v4174, 1.442695
        %v4259 = vpow.pop %v4258
        %v4260 = vmul.f32 %v4175, 1.442695
        %v4261 = vpow.pop %v4260
        %v4262 = vmul.f32 %v4176, 1.442695
        %v4263 = vpow.pop %v4262
        %v4264 = vmul.f32 %v4177, 1.442695
        %v4265 = vpow.pop %v4264
        %v4266 = vmul.f32 %v4178, 1.442695
        %v4267 = vpow.pop %v4266
        %v4268 = vmul.f32 %v4179, 1.442695
        %v4269 = vpow.pop %v4268
        %v4270 = vmul.f32 %v4180, 1.442695
        %v4271 = vpow.pop %v4270
        %v4272 = vmul.f32 %v4181, 1.442695
        %v4273 = vpow.pop %v4272
        %v4274 = vmul.f32 %v4182, 1.442695
        %v4275 = vpow.pop %v4274
        %v4276 = vmul.f32 %v4183, 1.442695
        %v4277 = vpow.pop %v4276
        %v4278 = vmul.f32 %v4184, 1.442695
        %v4279 = vpow.pop %v4278
        %v4280 = vmul.f32 %v4185, 1.442695
        %v4281 = vpow.pop %v4280
        %v4282 = vmul.f32 %v4186, 1.442695
        %v4283 = vpow.pop %v4282
        %v4284 = vmul.f32 %v4187, 1.442695
        %v4285 = vpow.pop %v4284
        %v4286 = vmul.f32 %v4188, 1.442695
        %v4287 = vpow.pop %v4286
        %v4288 = vmul.f32 %v4189, 1.442695
        %v4289 = vpow.pop %v4288
        %v4290 = vmul.f32 %v4190, 1.442695
        %v4291 = vpow.pop %v4290
        %v4292 = vmul.f32 %v4191, 1.442695
        %v4293 = vpow.pop %v4292
        %v4294 = vmul.f32 %v4192, 1.442695
        %v4295 = vpow.pop %v4294
        %v4296 = vmul.f32 %v4193, 1.442695
        %v4297 = vpow.pop %v4296
        %v4298 = vmul.f32 %v4194, 1.442695
        %v4299 = vpow.pop %v4298
        %v4300 = vmul.f32 %v4195, 1.442695
        %v4301 = vpow.pop %v4300
        %v4302 = vmul.f32 %v4196, 1.442695
        %v4303 = vpow.pop %v4302
        %v4304 = vmul.f32 %v4197, 1.442695
        %v4305 = vpow.pop %v4304
        %v4306 = vmul.f32 %v4198, 1.442695
        %v4307 = vpow.pop %v4306
        %v4308 = vmul.f32 %v4199, 1.442695
        %v4309 = vpow.pop %v4308
        %v4310 = vmul.f32 %v4200, 1.442695
        %v4311 = vpow.pop %v4310
        %v4312 = vmul.f32 %v4201, 1.442695
        %v4313 = vpow.pop %v4312
        %v4314 = vmul.f32 %v4202, 1.442695
        %v4315 = vpow.pop %v4314
        %v4316 = vmul.f32 %v4203, 1.442695
        %v4317 = vpow.pop %v4316
        %v4318 = vmul.f32 %v4204, 1.442695
        %v4319 = vpow.pop %v4318
        %v4320 = vmul.f32 %v4205, 1.442695
        %v4321 = vpow.pop %v4320
        %v4322 = vmul.f32 %v4206, 1.442695
        %v4323 = vpow.pop %v4322
        %v4324 = vmul.f32 %v4207, 1.442695
        %v4325 = vpow.pop %v4324
        %v4326 = vmul.f32 %v4208, 1.442695
        %v4327 = vpow.pop %v4326
        %v4328 = vmul.f32 %v4209, 1.442695
        %v4329 = vpow.pop %v4328
        %v4330 = vmul.f32 %v4210, 1.442695
        %v4331 = vpow.pop %v4330
        %v4332 = vmul.f32 %v4211, 1.442695
        %v4333 = vpow.pop %v4332
        %v4334 = vmul.f32 %v4212, 1.442695
        %v4335 = vpow.pop %v4334
        %v4336 = vmul.f32 %v4213, 1.442695
        %v4337 = vpow.pop %v4336
        %v4338 = vmul.f32 %v4214, 1.442695
        %v4339 = vpow.pop %v4338
        %v4340 = vmul.f32 %v4215, 1.442695
        %v4341 = vpow.pop %v4340
        %v4342 = vmul.f32 %v4216, 1.442695
        %v4343 = vpow.pop %v4342
        %v4344 = vmul.f32 %v4217, 1.442695
        %v4345 = vpow.pop %v4344
        %v4346 = vadd.f32 %v4219, 1.0
        %v4347 = vadd.f32 %v4221, 1.0
        %v4348 = vadd.f32 %v4223, 1.0
        %v4349 = vadd.f32 %v4225, 1.0
        %v4350 = vadd.f32 %v4227, 1.0
        %v4351 = vadd.f32 %v4229, 1.0
        %v4352 = vadd.f32 %v4231, 1.0
        %v4353 = vadd.f32 %v4233, 1.0
        %v4354 = vadd.f32 %v4235, 1.0
        %v4355 = vadd.f32 %v4237, 1.0
        %v4356 = vadd.f32 %v4239, 1.0
        %v4357 = vadd.f32 %v4241, 1.0
        %v4358 = vadd.f32 %v4243, 1.0
        %v4359 = vadd.f32 %v4245, 1.0
        %v4360 = vadd.f32 %v4247, 1.0
        %v4361 = vadd.f32 %v4249, 1.0
        %v4362 = vadd.f32 %v4251, 1.0
        %v4363 = vadd.f32 %v4253, 1.0
        %v4364 = vadd.f32 %v4255, 1.0
        %v4365 = vadd.f32 %v4257, 1.0
        %v4366 = vadd.f32 %v4259, 1.0
        %v4367 = vadd.f32 %v4261, 1.0
        %v4368 = vadd.f32 %v4263, 1.0
        %v4369 = vadd.f32 %v4265, 1.0
        %v4370 = vadd.f32 %v4267, 1.0
        %v4371 = vadd.f32 %v4269, 1.0
        %v4372 = vadd.f32 %v4271, 1.0
        %v4373 = vadd.f32 %v4273, 1.0
        %v4374 = vadd.f32 %v4275, 1.0
        %v4375 = vadd.f32 %v4277, 1.0
        %v4376 = vadd.f32 %v4279, 1.0
        %v4377 = vadd.f32 %v4281, 1.0
        %v4378 = vadd.f32 %v4283, 1.0
        %v4379 = vadd.f32 %v4285, 1.0
        %v4380 = vadd.f32 %v4287, 1.0
        %v4381 = vadd.f32 %v4289, 1.0
        %v4382 = vadd.f32 %v4291, 1.0
        %v4383 = vadd.f32 %v4293, 1.0
        %v4384 = vadd.f32 %v4295, 1.0
        %v4385 = vadd.f32 %v4297, 1.0
        %v4386 = vadd.f32 %v4299, 1.0
        %v4387 = vadd.f32 %v4301, 1.0
        %v4388 = vadd.f32 %v4303, 1.0
        %v4389 = vadd.f32 %v4305, 1.0
        %v4390 = vadd.f32 %v4307, 1.0
        %v4391 = vadd.f32 %v4309, 1.0
        %v4392 = vadd.f32 %v4311, 1.0
        %v4393 = vadd.f32 %v4313, 1.0
        %v4394 = vadd.f32 %v4315, 1.0
        %v4395 = vadd.f32 %v4317, 1.0
        %v4396 = vadd.f32 %v4319, 1.0
        %v4397 = vadd.f32 %v4321, 1.0
        %v4398 = vadd.f32 %v4323, 1.0
        %v4399 = vadd.f32 %v4325, 1.0
        %v4400 = vadd.f32 %v4327, 1.0
        %v4401 = vadd.f32 %v4329, 1.0
        %v4402 = vadd.f32 %v4331, 1.0
        %v4403 = vadd.f32 %v4333, 1.0
        %v4404 = vadd.f32 %v4335, 1.0
        %v4405 = vadd.f32 %v4337, 1.0
        %v4406 = vadd.f32 %v4339, 1.0
        %v4407 = vadd.f32 %v4341, 1.0
        %v4408 = vadd.f32 %v4343, 1.0
        %v4409 = vadd.f32 %v4345, 1.0
        %v4410 = vrcp.pop %v4346
        %v4411 = vmul.f32 1.0, %v4410
        %v4412 = vrcp.pop %v4347
        %v4413 = vmul.f32 1.0, %v4412
        %v4414 = vrcp.pop %v4348
        %v4415 = vmul.f32 1.0, %v4414
        %v4416 = vrcp.pop %v4349
        %v4417 = vmul.f32 1.0, %v4416
        %v4418 = vrcp.pop %v4350
        %v4419 = vmul.f32 1.0, %v4418
        %v4420 = vrcp.pop %v4351
        %v4421 = vmul.f32 1.0, %v4420
        %v4422 = vrcp.pop %v4352
        %v4423 = vmul.f32 1.0, %v4422
        %v4424 = vrcp.pop %v4353
        %v4425 = vmul.f32 1.0, %v4424
        %v4426 = vrcp.pop %v4354
        %v4427 = vmul.f32 1.0, %v4426
        %v4428 = vrcp.pop %v4355
        %v4429 = vmul.f32 1.0, %v4428
        %v4430 = vrcp.pop %v4356
        %v4431 = vmul.f32 1.0, %v4430
        %v4432 = vrcp.pop %v4357
        %v4433 = vmul.f32 1.0, %v4432
        %v4434 = vrcp.pop %v4358
        %v4435 = vmul.f32 1.0, %v4434
        %v4436 = vrcp.pop %v4359
        %v4437 = vmul.f32 1.0, %v4436
        %v4438 = vrcp.pop %v4360
        %v4439 = vmul.f32 1.0, %v4438
        %v4440 = vrcp.pop %v4361
        %v4441 = vmul.f32 1.0, %v4440
        %v4442 = vrcp.pop %v4362
        %v4443 = vmul.f32 1.0, %v4442
        %v4444 = vrcp.pop %v4363
        %v4445 = vmul.f32 1.0, %v4444
        %v4446 = vrcp.pop %v4364
        %v4447 = vmul.f32 1.0, %v4446
        %v4448 = vrcp.pop %v4365
        %v4449 = vmul.f32 1.0, %v4448
        %v4450 = vrcp.pop %v4366
        %v4451 = vmul.f32 1.0, %v4450
        %v4452 = vrcp.pop %v4367
        %v4453 = vmul.f32 1.0, %v4452
        %v4454 = vrcp.pop %v4368
        %v4455 = vmul.f32 1.0, %v4454
        %v4456 = vrcp.pop %v4369
        %v4457 = vmul.f32 1.0, %v4456
        %v4458 = vrcp.pop %v4370
        %v4459 = vmul.f32 1.0, %v4458
        %v4460 = vrcp.pop %v4371
        %v4461 = vmul.f32 1.0, %v4460
        %v4462 = vrcp.pop %v4372
        %v4463 = vmul.f32 1.0, %v4462
        %v4464 = vrcp.pop %v4373
        %v4465 = vmul.f32 1.0, %v4464
        %v4466 = vrcp.pop %v4374
        %v4467 = vmul.f32 1.0, %v4466
        %v4468 = vrcp.pop %v4375
        %v4469 = vmul.f32 1.0, %v4468
        %v4470 = vrcp.pop %v4376
        %v4471 = vmul.f32 1.0, %v4470
        %v4472 = vrcp.pop %v4377
        %v4473 = vmul.f32 1.0, %v4472
        %v4474 = vrcp.pop %v4378
        %v4475 = vmul.f32 1.0, %v4474
        %v4476 = vrcp.pop %v4379
        %v4477 = vmul.f32 1.0, %v4476
        %v4478 = vrcp.pop %v4380
        %v4479 = vmul.f32 1.0, %v4478
        %v4480 = vrcp.pop %v4381
        %v4481 = vmul.f32 1.0, %v4480
        %v4482 = vrcp.pop %v4382
        %v4483 = vmul.f32 1.0, %v4482
        %v4484 = vrcp.pop %v4383
        %v4485 = vmul.f32 1.0, %v4484
        %v4486 = vrcp.pop %v4384
        %v4487 = vmul.f32 1.0, %v4486
        %v4488 = vrcp.pop %v4385
        %v4489 = vmul.f32 1.0, %v4488
        %v4490 = vrcp.pop %v4386
        %v4491 = vmul.f32 1.0, %v4490
        %v4492 = vrcp.pop %v4387
        %v4493 = vmul.f32 1.0, %v4492
        %v4494 = vrcp.pop %v4388
        %v4495 = vmul.f32 1.0, %v4494
        %v4496 = vrcp.pop %v4389
        %v4497 = vmul.f32 1.0, %v4496
        %v4498 = vrcp.pop %v4390
        %v4499 = vmul.f32 1.0, %v4498
        %v4500 = vrcp.pop %v4391
        %v4501 = vmul.f32 1.0, %v4500
        %v4502 = vrcp.pop %v4392
        %v4503 = vmul.f32 1.0, %v4502
        %v4504 = vrcp.pop %v4393
        %v4505 = vmul.f32 1.0, %v4504
        %v4506 = vrcp.pop %v4394
        %v4507 = vmul.f32 1.0, %v4506
        %v4508 = vrcp.pop %v4395
        %v4509 = vmul.f32 1.0, %v4508
        %v4510 = vrcp.pop %v4396
        %v4511 = vmul.f32 1.0, %v4510
        %v4512 = vrcp.pop %v4397
        %v4513 = vmul.f32 1.0, %v4512
        %v4514 = vrcp.pop %v4398
        %v4515 = vmul.f32 1.0, %v4514
        %v4516 = vrcp.pop %v4399
        %v4517 = vmul.f32 1.0, %v4516
        %v4518 = vrcp.pop %v4400
        %v4519 = vmul.f32 1.0, %v4518
        %v4520 = vrcp.pop %v4401
        %v4521 = vmul.f32 1.0, %v4520
        %v4522 = vrcp.pop %v4402
        %v4523 = vmul.f32 1.0, %v4522
        %v4524 = vrcp.pop %v4403
        %v4525 = vmul.f32 1.0, %v4524
        %v4526 = vrcp.pop %v4404
        %v4527 = vmul.f32 1.0, %v4526
        %v4528 = vrcp.pop %v4405
        %v4529 = vmul.f32 1.0, %v4528
        %v4530 = vrcp.pop %v4406
        %v4531 = vmul.f32 1.0, %v4530
        %v4532 = vrcp.pop %v4407
        %v4533 = vmul.f32 1.0, %v4532
        %v4534 = vrcp.pop %v4408
        %v4535 = vmul.f32 1.0, %v4534
        %v4536 = vrcp.pop %v4409
        %v4537 = vmul.f32 1.0, %v4536
        %v4538 = vmul.f32 %v3899, %v4411
        %v4539 = vmul.f32 %v3901, %v4413
        %v4540 = vmul.f32 %v4012, %v4415
        %v4541 = vmul.f32 %v4014, %v4417
        %v4542 = vmul.f32 %v3903, %v4419
        %v4543 = vmul.f32 %v3905, %v4421
        %v4544 = vmul.f32 %v4016, %v4423
        %v4545 = vmul.f32 %v4018, %v4425
        %v4546 = vmul.f32 %v3909, %v4427
        %v4547 = vmul.f32 %v3911, %v4429
        %v4548 = vmul.f32 %v4022, %v4431
        %v4549 = vmul.f32 %v4024, %v4433
        %v4550 = vmul.f32 %v3913, %v4435
        %v4551 = vmul.f32 %v3915, %v4437
        %v4552 = vmul.f32 %v4026, %v4439
        %v4553 = vmul.f32 %v4028, %v4441
        %v4554 = vmul.f32 %v3919, %v4443
        %v4555 = vmul.f32 %v3921, %v4445
        %v4556 = vmul.f32 %v4032, %v4447
        %v4557 = vmul.f32 %v4034, %v4449
        %v4558 = vmul.f32 %v3923, %v4451
        %v4559 = vmul.f32 %v3925, %v4453
        %v4560 = vmul.f32 %v4036, %v4455
        %v4561 = vmul.f32 %v4038, %v4457
        %v4562 = vmul.f32 %v3929, %v4459
        %v4563 = vmul.f32 %v3931, %v4461
        %v4564 = vmul.f32 %v4042, %v4463
        %v4565 = vmul.f32 %v4044, %v4465
        %v4566 = vmul.f32 %v3933, %v4467
        %v4567 = vmul.f32 %v3935, %v4469
        %v4568 = vmul.f32 %v4046, %v4471
        %v4569 = vmul.f32 %v4048, %v4473
        %v4570 = vmul.f32 %v3939, %v4475
        %v4571 = vmul.f32 %v3941, %v4477
        %v4572 = vmul.f32 %v4052, %v4479
        %v4573 = vmul.f32 %v4054, %v4481
        %v4574 = vmul.f32 %v3943, %v4483
        %v4575 = vmul.f32 %v3945, %v4485
        %v4576 = vmul.f32 %v4056, %v4487
        %v4577 = vmul.f32 %v4058, %v4489
        %v4578 = vmul.f32 %v3949, %v4491
        %v4579 = vmul.f32 %v3951, %v4493
        %v4580 = vmul.f32 %v4062, %v4495
        %v4581 = vmul.f32 %v4064, %v4497
        %v4582 = vmul.f32 %v3953, %v4499
        %v4583 = vmul.f32 %v3955, %v4501
        %v4584 = vmul.f32 %v4066, %v4503
        %v4585 = vmul.f32 %v4068, %v4505
        %v4586 = vmul.f32 %v3959, %v4507
        %v4587 = vmul.f32 %v3961, %v4509
        %v4588 = vmul.f32 %v4072, %v4511
        %v4589 = vmul.f32 %v4074, %v4513
        %v4590 = vmul.f32 %v3963, %v4515
        %v4591 = vmul.f32 %v3965, %v4517
        %v4592 = vmul.f32 %v4076, %v4519
        %v4593 = vmul.f32 %v4078, %v4521
        %v4594 = vmul.f32 %v3969, %v4523
        %v4595 = vmul.f32 %v3971, %v4525
        %v4596 = vmul.f32 %v4082, %v4527
        %v4597 = vmul.f32 %v4084, %v4529
        %v4598 = vmul.f32 %v3973, %v4531
        %v4599 = vmul.f32 %v3975, %v4533
        %v4600 = vmul.f32 %v4086, %v4535
        %v4601 = vmul.f32 %v4088, %v4537
        %v4602 = vpack.c.bf16 %v4542, %v4538
        %v4603 = vpack.c.bf16 %v4543, %v4539
        %v4604 = vpack.c.bf16 %v4544, %v4540
        %v4605 = vpack.c.bf16 %v4545, %v4541
        %v4606 = vpack.c.bf16 %v4550, %v4546
        %v4607 = vpack.c.bf16 %v4551, %v4547
        %v4608 = vpack.c.bf16 %v4552, %v4548
        %v4609 = vpack.c.bf16 %v4553, %v4549
        %v4610 = vpack.c.bf16 %v4558, %v4554
        %v4611 = vpack.c.bf16 %v4559, %v4555
        %v4612 = vpack.c.bf16 %v4560, %v4556
        %v4613 = vpack.c.bf16 %v4561, %v4557
        %v4614 = vpack.c.bf16 %v4566, %v4562
        %v4615 = vpack.c.bf16 %v4567, %v4563
        %v4616 = vpack.c.bf16 %v4568, %v4564
        %v4617 = vpack.c.bf16 %v4569, %v4565
        %v4618 = vpack.c.bf16 %v4574, %v4570
        %v4619 = vpack.c.bf16 %v4575, %v4571
        %v4620 = vpack.c.bf16 %v4576, %v4572
        %v4621 = vpack.c.bf16 %v4577, %v4573
        %v4622 = vpack.c.bf16 %v4582, %v4578
        %v4623 = vpack.c.bf16 %v4583, %v4579
        %v4624 = vpack.c.bf16 %v4584, %v4580
        %v4625 = vpack.c.bf16 %v4585, %v4581
        %v4626 = vpack.c.bf16 %v4590, %v4586
        %v4627 = vpack.c.bf16 %v4591, %v4587
        %v4628 = vpack.c.bf16 %v4592, %v4588
        %v4629 = vpack.c.bf16 %v4593, %v4589
        %v4630 = vpack.c.bf16 %v4598, %v4594
        %v4631 = vpack.c.bf16 %v4599, %v4595
        %v4632 = vpack.c.bf16 %v4600, %v4596
        %v4633 = vpack.c.bf16 %v4601, %v4597
        %v4634 = vld [vmem:[#allocation13] sm:$0xf]
        %v4635 = vld [vmem:[#allocation13 + $0x4] sm:$0xf]
        %v4636 = vld [vmem:[#allocation13 + $0x8] sm:$0xf]
        %v4637 = vld [vmem:[#allocation13 + $0xc] sm:$0xf]
        %v4638 = vld [vmem:[#allocation13 + $0x10] sm:$0xf]
        %v4639 = vld [vmem:[#allocation13 + $0x14] sm:$0xf]
        %v4640 = vld [vmem:[#allocation13 + $0x18] sm:$0xf]
        %v4641 = vld [vmem:[#allocation13 + $0x1c] sm:$0xf]
        %v4642 = vld [vmem:[#allocation13 + $0x20] sm:$0xf]
        %v4643 = vld [vmem:[#allocation13 + $0x24] sm:$0xf]
        %v4644 = vld [vmem:[#allocation13 + $0x28] sm:$0xf]
        %v4645 = vld [vmem:[#allocation13 + $0x2c] sm:$0xf]
        %v4646 = vld [vmem:[#allocation13 + $0x30] sm:$0xf]
        %v4647 = vld [vmem:[#allocation13 + $0x34] sm:$0xf]
        %v4648 = vld [vmem:[#allocation13 + $0x38] sm:$0xf]
        %v4649 = vld [vmem:[#allocation13 + $0x3c] sm:$0xf]
        %v4650 = vld [vmem:[#allocation13 + $0x40] sm:$0xf]
        %v4651 = vld [vmem:[#allocation13 + $0x44] sm:$0xf]
        %v4652 = vld [vmem:[#allocation13 + $0x48] sm:$0xf]
        %v4653 = vld [vmem:[#allocation13 + $0x4c] sm:$0xf]
        %v4654 = vld [vmem:[#allocation13 + $0x50] sm:$0xf]
        %v4655 = vld [vmem:[#allocation13 + $0x54] sm:$0xf]
        %v4656 = vld [vmem:[#allocation13 + $0x58] sm:$0xf]
        %v4657 = vld [vmem:[#allocation13 + $0x5c] sm:$0xf]
        %v4658 = vld [vmem:[#allocation13 + $0x60] sm:$0xf]
        %v4659 = vld [vmem:[#allocation13 + $0x64] sm:$0xf]
        %v4660 = vld [vmem:[#allocation13 + $0x68] sm:$0xf]
        %v4661 = vld [vmem:[#allocation13 + $0x6c] sm:$0xf]
        %v4662 = vld [vmem:[#allocation13 + $0x70] sm:$0xf]
        %v4663 = vld [vmem:[#allocation13 + $0x74] sm:$0xf]
        %v4664 = vld [vmem:[#allocation13 + $0x78] sm:$0xf]
        %v4665 = vld [vmem:[#allocation13 + $0x7c] sm:$0xf]
        %v4666 = vld [vmem:[#allocation13 + $0x80] sm:$0xf]
        %v4667 = vld [vmem:[#allocation13 + $0x84] sm:$0xf]
        %v4668 = vld [vmem:[#allocation13 + $0x88] sm:$0xf]
        %v4669 = vld [vmem:[#allocation13 + $0x8c] sm:$0xf]
        %v4670 = vld [vmem:[#allocation13 + $0x90] sm:$0xf]
        %v4671 = vld [vmem:[#allocation13 + $0x94] sm:$0xf]
        %v4672 = vld [vmem:[#allocation13 + $0x98] sm:$0xf]
        %v4673 = vld [vmem:[#allocation13 + $0x9c] sm:$0xf]
        %v4674 = vld [vmem:[#allocation13 + $0xa0] sm:$0xf]
        %v4675 = vld [vmem:[#allocation13 + $0xa4] sm:$0xf]
        %v4676 = vld [vmem:[#allocation13 + $0xa8] sm:$0xf]
        %v4677 = vld [vmem:[#allocation13 + $0xac] sm:$0xf]
        %v4678 = vld [vmem:[#allocation13 + $0xb0] sm:$0xf]
        %v4679 = vld [vmem:[#allocation13 + $0xb4] sm:$0xf]
        %v4680 = vld [vmem:[#allocation13 + $0xb8] sm:$0xf]
        %v4681 = vld [vmem:[#allocation13 + $0xbc] sm:$0xf]
        %v4682 = vld [vmem:[#allocation13 + $0xc0] sm:$0xf]
        %v4683 = vld [vmem:[#allocation13 + $0xc4] sm:$0xf]
        %v4684 = vld [vmem:[#allocation13 + $0xc8] sm:$0xf]
        %v4685 = vld [vmem:[#allocation13 + $0xcc] sm:$0xf]
        %v4686 = vld [vmem:[#allocation13 + $0xd0] sm:$0xf]
        %v4687 = vld [vmem:[#allocation13 + $0xd4] sm:$0xf]
        %v4688 = vld [vmem:[#allocation13 + $0xd8] sm:$0xf]
        %v4689 = vld [vmem:[#allocation13 + $0xdc] sm:$0xf]
        %v4690 = vld [vmem:[#allocation13 + $0xe0] sm:$0xf]
        %v4691 = vld [vmem:[#allocation13 + $0xe4] sm:$0xf]
        %v4692 = vld [vmem:[#allocation13 + $0xe8] sm:$0xf]
        %v4693 = vld [vmem:[#allocation13 + $0xec] sm:$0xf]
        %v4694 = vld [vmem:[#allocation13 + $0xf0] sm:$0xf]
        %v4695 = vld [vmem:[#allocation13 + $0xf4] sm:$0xf]
        %v4696 = vld [vmem:[#allocation13 + $0xf8] sm:$0xf]
        %v4697 = vld [vmem:[#allocation13 + $0xfc] sm:$0xf]
        %v4698 = vld [vmem:[%s12] sm:$0x1]
        %v4700 = vlaneseq
        %v4701 = vshrl.u32 %v4700, 7
        %v4702 = vsub.s32 0, %v4701
        %v4703 = vrot.slane %v4698, %v4702
        %v4769 = vunpack.c.l.b16 %v4634
        %v4770 = vunpack.c.l.b16 %v4635
        %v4771 = vunpack.c.l.b16 %v4636
        %v4772 = vunpack.c.l.b16 %v4637
        %v4773 = vunpack.c.l.b16 %v4638
        %v4774 = vunpack.c.l.b16 %v4639
        %v4775 = vunpack.c.l.b16 %v4640
        %v4776 = vunpack.c.l.b16 %v4641
        %v4777 = vunpack.c.l.b16 %v4642
        %v4778 = vunpack.c.l.b16 %v4643
        %v4779 = vunpack.c.l.b16 %v4644
        %v4780 = vunpack.c.l.b16 %v4645
        %v4781 = vunpack.c.l.b16 %v4646
        %v4782 = vunpack.c.l.b16 %v4647
        %v4783 = vunpack.c.l.b16 %v4648
        %v4784 = vunpack.c.l.b16 %v4649
        %v4785 = vunpack.c.l.b16 %v4650
        %v4786 = vunpack.c.l.b16 %v4651
        %v4787 = vunpack.c.l.b16 %v4652
        %v4788 = vunpack.c.l.b16 %v4653
        %v4789 = vunpack.c.l.b16 %v4654
        %v4790 = vunpack.c.l.b16 %v4655
        %v4791 = vunpack.c.l.b16 %v4656
        %v4792 = vunpack.c.l.b16 %v4657
        %v4793 = vunpack.c.l.b16 %v4658
        %v4794 = vunpack.c.l.b16 %v4659
        %v4795 = vunpack.c.l.b16 %v4660
        %v4796 = vunpack.c.l.b16 %v4661
        %v4797 = vunpack.c.l.b16 %v4662
        %v4798 = vunpack.c.l.b16 %v4663
        %v4799 = vunpack.c.l.b16 %v4664
        %v4800 = vunpack.c.l.b16 %v4665
        %v4801 = vunpack.c.l.b16 %v4666
        %v4802 = vunpack.c.l.b16 %v4667
        %v4803 = vunpack.c.l.b16 %v4668
        %v4804 = vunpack.c.l.b16 %v4669
        %v4805 = vunpack.c.l.b16 %v4670
        %v4806 = vunpack.c.l.b16 %v4671
        %v4807 = vunpack.c.l.b16 %v4672
        %v4808 = vunpack.c.l.b16 %v4673
        %v4809 = vunpack.c.l.b16 %v4674
        %v4810 = vunpack.c.l.b16 %v4675
        %v4811 = vunpack.c.l.b16 %v4676
        %v4812 = vunpack.c.l.b16 %v4677
        %v4813 = vunpack.c.l.b16 %v4678
        %v4814 = vunpack.c.l.b16 %v4679
        %v4815 = vunpack.c.l.b16 %v4680
        %v4816 = vunpack.c.l.b16 %v4681
        %v4817 = vunpack.c.l.b16 %v4682
        %v4818 = vunpack.c.l.b16 %v4683
        %v4819 = vunpack.c.l.b16 %v4684
        %v4820 = vunpack.c.l.b16 %v4685
        %v4821 = vunpack.c.l.b16 %v4686
        %v4822 = vunpack.c.l.b16 %v4687
        %v4823 = vunpack.c.l.b16 %v4688
        %v4824 = vunpack.c.l.b16 %v4689
        %v4825 = vunpack.c.l.b16 %v4690
        %v4826 = vunpack.c.l.b16 %v4691
        %v4827 = vunpack.c.l.b16 %v4692
        %v4828 = vunpack.c.l.b16 %v4693
        %v4829 = vunpack.c.l.b16 %v4694
        %v4830 = vunpack.c.l.b16 %v4695
        %v4831 = vunpack.c.l.b16 %v4696
        %v4832 = vunpack.c.l.b16 %v4697
        %v4833 = vpack.c.b16 %v4770, %v4769
        %v4834 = vpack.c.b16 %v4772, %v4771
        %v4835 = vpack.c.b16 %v4774, %v4773
        %v4836 = vpack.c.b16 %v4776, %v4775
        %v4837 = vpack.c.b16 %v4778, %v4777
        %v4838 = vpack.c.b16 %v4780, %v4779
        %v4839 = vpack.c.b16 %v4782, %v4781
        %v4840 = vpack.c.b16 %v4784, %v4783
        %v4841 = vpack.c.b16 %v4786, %v4785
        %v4842 = vpack.c.b16 %v4788, %v4787
        %v4843 = vpack.c.b16 %v4790, %v4789
        %v4844 = vpack.c.b16 %v4792, %v4791
        %v4845 = vpack.c.b16 %v4794, %v4793
        %v4846 = vpack.c.b16 %v4796, %v4795
        %v4847 = vpack.c.b16 %v4798, %v4797
        %v4848 = vpack.c.b16 %v4800, %v4799
        %v4849 = vpack.c.b16 %v4802, %v4801
        %v4850 = vpack.c.b16 %v4804, %v4803
        %v4851 = vpack.c.b16 %v4806, %v4805
        %v4852 = vpack.c.b16 %v4808, %v4807
        %v4853 = vpack.c.b16 %v4810, %v4809
        %v4854 = vpack.c.b16 %v4812, %v4811
        %v4855 = vpack.c.b16 %v4814, %v4813
        %v4856 = vpack.c.b16 %v4816, %v4815
        %v4857 = vpack.c.b16 %v4818, %v4817
        %v4858 = vpack.c.b16 %v4820, %v4819
        %v4859 = vpack.c.b16 %v4822, %v4821
        %v4860 = vpack.c.b16 %v4824, %v4823
        %v4861 = vpack.c.b16 %v4826, %v4825
        %v4862 = vpack.c.b16 %v4828, %v4827
        %v4863 = vpack.c.b16 %v4830, %v4829
        %v4864 = vpack.c.b16 %v4832, %v4831
        %4897 = vmatprep.subr.bf16.mxu0 0
        %4898 = vmatpush1.bf16.msra.mxu0 %v4833
        %4899 = vmatprep.subr.bf16.mxu0 0
        %4900 = vmatpush1.bf16.msra.mxu0 %v4834
        %4901 = vmatprep.subr.bf16.mxu0 0
        %4902 = vmatpush1.bf16.msra.mxu0 %v4835
        %4903 = vmatprep.subr.bf16.mxu0 0
        %4904 = vmatpush1.bf16.msra.mxu0 %v4836
        %4905 = vmatprep.subr.bf16.mxu0 0
        %4906 = vmatpush1.bf16.msra.mxu0 %v4837
        %4907 = vmatprep.subr.bf16.mxu0 0
        %4908 = vmatpush1.bf16.msra.mxu0 %v4838
        %4909 = vmatprep.subr.bf16.mxu0 0
        %4910 = vmatpush1.bf16.msra.mxu0 %v4839
        %4911 = vmatprep.subr.bf16.mxu0 0
        %4912 = vmatpush1.bf16.msra.mxu0 %v4840
        %4913 = vmatprep.subr.bf16.mxu0 0
        %4914 = vmatpush1.bf16.msra.mxu0 %v4841
        %4915 = vmatprep.subr.bf16.mxu0 0
        %4916 = vmatpush1.bf16.msra.mxu0 %v4842
        %4917 = vmatprep.subr.bf16.mxu0 0
        %4918 = vmatpush1.bf16.msra.mxu0 %v4843
        %4919 = vmatprep.subr.bf16.mxu0 0
        %4920 = vmatpush1.bf16.msra.mxu0 %v4844
        %4921 = vmatprep.subr.bf16.mxu0 0
        %4922 = vmatpush1.bf16.msra.mxu0 %v4845
        %4923 = vmatprep.subr.bf16.mxu0 0
        %4924 = vmatpush1.bf16.msra.mxu0 %v4846
        %4925 = vmatprep.subr.bf16.mxu0 0
        %4926 = vmatpush1.bf16.msra.mxu0 %v4847
        %4927 = vmatprep.subr.bf16.mxu0 0
        %4928 = vmatpush1.bf16.msra.mxu0 %v4848
        %4929 = vmatprep.mubr.bf16.mxu0 %v4603
        %4930 = vmatmul.mubr.bf16.gmra.mrb[0].mxu0 %v4602
        %v4931 = vpop.f32.mrb[0].mxu0
        %v4932 = vadd.f32 %v4703, %v4931
        %v4933 = vpop.f32.mrb[0].mxu0
        %v4934 = vpop.f32.mrb[0].mxu0
        %v4935 = vadd.f32 %v4703, %v4934
        %v4936 = vpop.f32.mrb[0].mxu0
        %4937 = vmatprep.mubr.bf16.mxu0 %v4607
        %4938 = vmatmul.mubr.bf16.gmra.mrb[0].mxu0 %v4606
        %v4939 = vpop.f32.mrb[0].mxu0
        %v4940 = vadd.f32 %v4703, %v4939
        %v4941 = vpop.f32.mrb[0].mxu0
        %v4942 = vpop.f32.mrb[0].mxu0
        %v4943 = vadd.f32 %v4703, %v4942
        %v4944 = vpop.f32.mrb[0].mxu0
        %4945 = vmatprep.mubr.bf16.mxu0 %v4611
        %4946 = vmatmul.mubr.bf16.gmra.mrb[0].mxu0 %v4610
        %v4947 = vpop.f32.mrb[0].mxu0
        %v4948 = vadd.f32 %v4703, %v4947
        %v4949 = vpop.f32.mrb[0].mxu0
        %v4950 = vpop.f32.mrb[0].mxu0
        %v4951 = vadd.f32 %v4703, %v4950
        %v4952 = vpop.f32.mrb[0].mxu0
        %4953 = vmatprep.mubr.bf16.mxu0 %v4615
        %4954 = vmatmul.mubr.bf16.gmra.mrb[0].mxu0 %v4614
        %v4955 = vpop.f32.mrb[0].mxu0
        %v4956 = vadd.f32 %v4703, %v4955
        %v4957 = vpop.f32.mrb[0].mxu0
        %v4958 = vpop.f32.mrb[0].mxu0
        %v4959 = vadd.f32 %v4703, %v4958
        %v4960 = vpop.f32.mrb[0].mxu0
        %4961 = vmatprep.mubr.bf16.mxu0 %v4619
        %4962 = vmatmul.mubr.bf16.gmra.mrb[0].mxu0 %v4618
        %v4963 = vpop.f32.mrb[0].mxu0
        %v4964 = vadd.f32 %v4703, %v4963
        %v4965 = vpop.f32.mrb[0].mxu0
        %v4966 = vpop.f32.mrb[0].mxu0
        %v4967 = vadd.f32 %v4703, %v4966
        %v4968 = vpop.f32.mrb[0].mxu0
        %4969 = vmatprep.mubr.bf16.mxu0 %v4623
        %4970 = vmatmul.mubr.bf16.gmra.mrb[0].mxu0 %v4622
        %v4971 = vpop.f32.mrb[0].mxu0
        %v4972 = vadd.f32 %v4703, %v4971
        %v4973 = vpop.f32.mrb[0].mxu0
        %v4974 = vpop.f32.mrb[0].mxu0
        %v4975 = vadd.f32 %v4703, %v4974
        %v4976 = vpop.f32.mrb[0].mxu0
        %4977 = vmatprep.mubr.bf16.mxu0 %v4627
        %4978 = vmatmul.mubr.bf16.gmra.mrb[0].mxu0 %v4626
        %v4979 = vpop.f32.mrb[0].mxu0
        %v4980 = vadd.f32 %v4703, %v4979
        %v4981 = vpop.f32.mrb[0].mxu0
        %v4982 = vpop.f32.mrb[0].mxu0
        %v4983 = vadd.f32 %v4703, %v4982
        %v4984 = vpop.f32.mrb[0].mxu0
        %4985 = vmatprep.mubr.bf16.mxu0 %v4631
        %4986 = vmatmul.mubr.bf16.gmra.mrb[0].mxu0 %v4630
        %v4987 = vpop.f32.mrb[0].mxu0
        %v4988 = vadd.f32 %v4703, %v4987
        %v4989 = vpop.f32.mrb[0].mxu0
        %v4990 = vpop.f32.mrb[0].mxu0
        %v4991 = vadd.f32 %v4703, %v4990
        %v4992 = vpop.f32.mrb[0].mxu0
        %4993 = vdwg.mxu0
        %4994 = vmatprep.subr.bf16.mxu0 0
        %4995 = vmatpush1.bf16.msra.mxu0 %v4849
        %4996 = vmatprep.subr.bf16.mxu0 0
        %4997 = vmatpush1.bf16.msra.mxu0 %v4850
        %4998 = vmatprep.subr.bf16.mxu0 0
        %4999 = vmatpush1.bf16.msra.mxu0 %v4851
        %5000 = vmatprep.subr.bf16.mxu0 0
        %5001 = vmatpush1.bf16.msra.mxu0 %v4852
        %5002 = vmatprep.subr.bf16.mxu0 0
        %5003 = vmatpush1.bf16.msra.mxu0 %v4853
        %5004 = vmatprep.subr.bf16.mxu0 0
        %5005 = vmatpush1.bf16.msra.mxu0 %v4854
        %5006 = vmatprep.subr.bf16.mxu0 0
        %5007 = vmatpush1.bf16.msra.mxu0 %v4855
        %5008 = vmatprep.subr.bf16.mxu0 0
        %5009 = vmatpush1.bf16.msra.mxu0 %v4856
        %5010 = vmatprep.subr.bf16.mxu0 0
        %5011 = vmatpush1.bf16.msra.mxu0 %v4857
        %5012 = vmatprep.subr.bf16.mxu0 0
        %5013 = vmatpush1.bf16.msra.mxu0 %v4858
        %5014 = vmatprep.subr.bf16.mxu0 0
        %5015 = vmatpush1.bf16.msra.mxu0 %v4859
        %5016 = vmatprep.subr.bf16.mxu0 0
        %5017 = vmatpush1.bf16.msra.mxu0 %v4860
        %5018 = vmatprep.subr.bf16.mxu0 0
        %5019 = vmatpush1.bf16.msra.mxu0 %v4861
        %5020 = vmatprep.subr.bf16.mxu0 0
        %5021 = vmatpush1.bf16.msra.mxu0 %v4862
        %5022 = vmatprep.subr.bf16.mxu0 0
        %5023 = vmatpush1.bf16.msra.mxu0 %v4863
        %5024 = vmatprep.subr.bf16.mxu0 0
        %5025 = vmatpush1.bf16.msra.mxu0 %v4864
        %5026 = vmatprep.mubr.bf16.mxu0 %v4605
        %5027 = vmatmul.mubr.bf16.gmra.mrb[0].mxu0 %v4604
        %v5028 = vpop.f32.mrb[0].mxu0
        %v5029 = vadd.f32 %v4932, %v5028
        %v5030 = vpop.f32.mrb[0].mxu0
        %v5031 = vpop.f32.mrb[0].mxu0
        %v5032 = vadd.f32 %v4935, %v5031
        %v5033 = vpop.f32.mrb[0].mxu0
        %5034 = vmatprep.mubr.bf16.mxu0 %v4609
        %5035 = vmatmul.mubr.bf16.gmra.mrb[0].mxu0 %v4608
        %v5036 = vpop.f32.mrb[0].mxu0
        %v5037 = vadd.f32 %v4940, %v5036
        %v5038 = vpop.f32.mrb[0].mxu0
        %v5039 = vpop.f32.mrb[0].mxu0
        %v5040 = vadd.f32 %v4943, %v5039
        %v5041 = vpop.f32.mrb[0].mxu0
        %5042 = vmatprep.mubr.bf16.mxu0 %v4613
        %5043 = vmatmul.mubr.bf16.gmra.mrb[0].mxu0 %v4612
        %v5044 = vpop.f32.mrb[0].mxu0
        %v5045 = vadd.f32 %v4948, %v5044
        %v5046 = vpop.f32.mrb[0].mxu0
        %v5047 = vpop.f32.mrb[0].mxu0
        %v5048 = vadd.f32 %v4951, %v5047
        %v5049 = vpop.f32.mrb[0].mxu0
        %5050 = vmatprep.mubr.bf16.mxu0 %v4617
        %5051 = vmatmul.mubr.bf16.gmra.mrb[0].mxu0 %v4616
        %v5052 = vpop.f32.mrb[0].mxu0
        %v5053 = vadd.f32 %v4956, %v5052
        %v5054 = vpop.f32.mrb[0].mxu0
        %v5055 = vpop.f32.mrb[0].mxu0
        %v5056 = vadd.f32 %v4959, %v5055
        %v5057 = vpop.f32.mrb[0].mxu0
        %5058 = vmatprep.mubr.bf16.mxu0 %v4621
        %5059 = vmatmul.mubr.bf16.gmra.mrb[0].mxu0 %v4620
        %v5060 = vpop.f32.mrb[0].mxu0
        %v5061 = vadd.f32 %v4964, %v5060
        %v5062 = vpop.f32.mrb[0].mxu0
        %v5063 = vpop.f32.mrb[0].mxu0
        %v5064 = vadd.f32 %v4967, %v5063
        %v5065 = vpop.f32.mrb[0].mxu0
        %5066 = vmatprep.mubr.bf16.mxu0 %v4625
        %5067 = vmatmul.mubr.bf16.gmra.mrb[0].mxu0 %v4624
        %v5068 = vpop.f32.mrb[0].mxu0
        %v5069 = vadd.f32 %v4972, %v5068
        %v5070 = vpop.f32.mrb[0].mxu0
        %v5071 = vpop.f32.mrb[0].mxu0
        %v5072 = vadd.f32 %v4975, %v5071
        %v5073 = vpop.f32.mrb[0].mxu0
        %5074 = vmatprep.mubr.bf16.mxu0 %v4629
        %5075 = vmatmul.mubr.bf16.gmra.mrb[0].mxu0 %v4628
        %v5076 = vpop.f32.mrb[0].mxu0
        %v5077 = vadd.f32 %v4980, %v5076
        %v5078 = vpop.f32.mrb[0].mxu0
        %v5079 = vpop.f32.mrb[0].mxu0
        %v5080 = vadd.f32 %v4983, %v5079
        %v5081 = vpop.f32.mrb[0].mxu0
        %5082 = vmatprep.mubr.bf16.mxu0 %v4633
        %5083 = vmatmul.mubr.bf16.gmra.mrb[0].mxu0 %v4632
        %v5084 = vpop.f32.mrb[0].mxu0
        %v5085 = vadd.f32 %v4988, %v5084
        %v5086 = vpop.f32.mrb[0].mxu0
        %v5087 = vpop.f32.mrb[0].mxu0
        %v5088 = vadd.f32 %v4991, %v5087
        %v5089 = vpop.f32.mrb[0].mxu0
        %5090 = vdwg.mxu0
        %v5091 = vadd.f32 %v3404, %v5029
        %v5092 = vadd.f32 %v3405, %v5032
        %v5093 = vadd.f32 %v3406, %v5037
        %v5094 = vadd.f32 %v3407, %v5040
        %v5095 = vadd.f32 %v3408, %v5045
        %v5096 = vadd.f32 %v3409, %v5048
        %v5097 = vadd.f32 %v3410, %v5053
        %v5098 = vadd.f32 %v3411, %v5056
        %v5099 = vadd.f32 %v3412, %v5061
        %v5100 = vadd.f32 %v3413, %v5064
        %v5101 = vadd.f32 %v3414, %v5069
        %v5102 = vadd.f32 %v3415, %v5072
        %v5103 = vadd.f32 %v3416, %v5077
        %v5104 = vadd.f32 %v3417, %v5080
        %v5105 = vadd.f32 %v3418, %v5085
        %v5106 = vadd.f32 %v3419, %v5088
        %5107 = vst [vmem:[%s541] sm:$0xff] %v5091
        %5108 = vst [vmem:[%s541 + $0x8] sm:$0xff] %v5092
        %5109 = vst [vmem:[%s541 + $0x10] sm:$0xff] %v5093
        %5110 = vst [vmem:[%s541 + $0x18] sm:$0xff] %v5094
        %5111 = vst [vmem:[%s541 + $0x20] sm:$0xff] %v5095
        %5112 = vst [vmem:[%s541 + $0x28] sm:$0xff] %v5096
        %5113 = vst [vmem:[%s541 + $0x30] sm:$0xff] %v5097
        %5114 = vst [vmem:[%s541 + $0x38] sm:$0xff] %v5098
        %5115 = vst [vmem:[%s541 + $0x40] sm:$0xff] %v5099
        %5116 = vst [vmem:[%s541 + $0x48] sm:$0xff] %v5100
        %5117 = vst [vmem:[%s541 + $0x50] sm:$0xff] %v5101
        %5118 = vst [vmem:[%s541 + $0x58] sm:$0xff] %v5102
        %5119 = vst [vmem:[%s541 + $0x60] sm:$0xff] %v5103
        %5120 = vst [vmem:[%s541 + $0x68] sm:$0xff] %v5104
        %5121 = vst [vmem:[%s541 + $0x70] sm:$0xff] %v5105
        %5122 = vst [vmem:[%s541 + $0x78] sm:$0xff] %v5106
        %s5123 = sand.u32 %s319, 1
        %s5124 = scalar_lea.sflag [#allocation4], %s5123
        %s5125 = sand.u32 %s319, 1
        %s5126 = smul.addr %s5125, 128
        %s5127 = scalar_lea.vmem [#allocation14], %s5126
        // Predicated region
        $region101: #{tpu_custom_call.1} parent=71 // pred_check
          %p5128 = pneg %p329
        $region102: #{tpu_custom_call.1} parent=71 // pred_check_branch
          %5130 = sbr.rel (%p5128) target = $region104
        $region103: #{tpu_custom_call.1} parent=71 // pred_region
          %s5132 = ssub.s32 2048, 2048
          %5133 = vsyncadd %s5124, %s5132
          %s5134 = smul.addr %s33, 16
          %s5135 = smul.addr %s5134, 128
          %s5136 = scalar_lea.hbm %s13, %s5135
          %s5137 = sshll.u32 %s5127, 4
          %s5138 = int_to_ptr.vmem [resolvable:$true] %s5137
          %5143 = dma.vmem_to_hbm [thread:$0]  %s5138, 2048, %s5136, %s5124, 128, 128, 8
        $region104: #{tpu_custom_call.1} parent=71 // pred_fallthru
          _
      $region72: #{tpu_custom_call.1} parent=5 // pred_fallthru
        _
      %p5144 = scmp.le.s32.totalorder 2, %s28
      // Predicated region
      $region105: #{tpu_custom_call.1} parent=5 // pred_check
        %p5145 = pneg %p5144
      $region106: #{tpu_custom_call.1} parent=5 // pred_check_branch
        %5147 = sbr.rel (%p5145) target = $region108
      $region107: #{tpu_custom_call.1} parent=5 // pred_region
        %s5148 = ssub.s32 %s28, 2
        // Predicated region
        $region109: #{tpu_custom_call.1} parent=107 // pred_check
          %p5149 = pneg %p335
        $region110: #{tpu_custom_call.1} parent=107 // pred_check_branch
          %5151 = sbr.rel (%p5149) target = $region112
        $region111: #{tpu_custom_call.1} parent=107 // pred_region
          %s5152 = sand.u32 %s320, 1
          %s5153 = scalar_lea.sflag [#allocation4], %s5152
          %s5154 = sand.u32 %s320, 1
          %s5155 = smul.addr %s5154, 128
          %s5156 = scalar_lea.vmem [#allocation14], %s5155
          %5157 = dma.done %s5153, 2048
        $region112: #{tpu_custom_call.1} parent=107 // pred_fallthru
          _
      $region108: #{tpu_custom_call.1} parent=5 // pred_fallthru
        _
    $region6: #{tpu_custom_call.1} parent=1 // loop_footer
      %s32 = sadd.s32 1, %s28
    $region7: #{tpu_custom_call.1} parent=1 // loop_footer_branch
      %27 = sbr.rel target = $region3
    $region8: #{tpu_custom_call.1} parent=1 // loop_exit
      _
    %5158 = vsyncpa [#allocation3], 1
    %s5159 = scalar_lea.sflag [#allocation3], 1
    %5160 = vsyncpa %s5159, 1
    %5161 = vsyncpa [#allocation6], 1
    %5162 = vsyncpa [#allocation9], 1
    %5163 = vsyncpa [#allocation12], 1
    %5164 = vsyncpa [#allocation4], 1
    %s5165 = scalar_lea.sflag [#allocation4], 1
    %5166 = vsyncpa %s5165, 1

</llo_original>
